<compile_context>
chip_gen: v7x
topology: tpu7x:2x2x1
jax: 0.10.0
libtpu: 0.0.40
codegen_flags: <defaults>
</compile_context>

<pallas_src>
import functools

import jax
import jax.numpy as jnp
from jax import lax
from jax.experimental import pallas as pl
from jax.experimental.pallas import tpu as pltpu

_LANE = 128


def _round_up(v, m):
    return (v + m - 1) // m * m


def _pick_cout_tile(Cp):
    # 256-wide N tile fills v6e/v7x's 256x256 MXU; 128 matches v5e's 128x128.
    return 256 if Cp % 256 == 0 else _LANE


def _pick_row_tile(Ho, Wo, cout_tile):
    # Largest divisor of Ho whose f32 accumulator chunk (rows*Wo, cout_tile)
    # stays <= ~128 KiB (one MXU-friendly M x N tile, bounded vreg pressure).
    budget = 128 * 1024
    for r in range(Ho, 0, -1):
        if Ho % r == 0 and r * Wo * cout_tile * 4 <= budget:
            return r
    return 1


def _grid_and_maps(N, n_ct, weight_bytes, act_bytes_total):
    # HBM-traffic model (Pallas skips the DMA when a block index repeats):
    #   batch-outer   : weights fetched N times, activations once.
    #   channel-outer : weights fetched once, activations n_ct times.
    channels_outer = (weight_bytes + n_ct * act_bytes_total
                      < N * weight_bytes + act_bytes_total)
    if channels_outer:
        grid = (n_ct, N)
        n_of = lambda g0, g1: g1
        c_of = lambda g0, g1: g0
    else:
        grid = (N, n_ct)
        n_of = lambda g0, g1: g0
        c_of = lambda g0, g1: g1
    return grid, n_of, c_of


def _vmem_limit(block_bytes):
    # double-buffered blocks + headroom; keep well under v7x's 64 MiB VMEM.
    need = 2 * block_bytes + (4 << 20)
    return int(min(max(need, 32 << 20), 40 << 20))


# ----------------------------------------------------------------------------
# Kernel 1: conv3x3(stride) + folded-BN + ReLU, writing a zero-haloed
#           (Ho+2, Wo+2, Cp) output tile so kernel 2 needs no HBM pad.
# ----------------------------------------------------------------------------
def _conv3x3_bn_act_kernel(x_ref, w_ref, b_ref, o_ref, *,
                           Ho, Wo, stride, row_tile, Cin):
    TCO = o_ref.shape[-1]
    Hp2, Wp2 = Ho + 2, Wo + 2
    Mc = row_tile * Wo
    small_cin = Cin < _LANE

    # Top/bottom halo rows; left/right halo columns are written together with
    # every interior row chunk below, so the whole block ends up initialized.
    zrow = jnp.zeros((1, Wp2, TCO), o_ref.dtype)
    o_ref[0, 0:1, :, :] = zrow
    o_ref[0, Hp2 - 1:Hp2, :, :] = zrow

    bb = jnp.broadcast_to(b_ref[...], (Mc, TCO))   # hoisted bias broadcast
    if small_cin:
        w_all = w_ref[...]                         # (9*Cin, TCO), tiny

    rows_in = stride * (row_tile - 1) + 3
    n_chunks = Ho // row_tile

    def chunk(i, carry):
        r0 = pl.multiple_of(i * row_tile, row_tile)

        if stride == 1:
            def tap(kh, kw):
                return x_ref[0, pl.ds(r0 + kh, row_tile), kw:kw + Wo, :]
        else:
            # TODO(synk): stride>1 uses strided VMEM slices; only exercised
            # when a downsampling block is instantiated.
            xc = x_ref[0, pl.ds(stride * r0, rows_in), :, :]

            def tap(kh, kw):
                return lax.slice(
                    xc, (kh, kw, 0),
                    (kh + stride * (row_tile - 1) + 1,
                     kw + stride * (Wo - 1) + 1, Cin),
                    (stride, stride, 1))

        if small_cin:
            # Stem-style layer: K = 9*Cin is small -> one concatenated matmul.
            # TODO(synk): a spatial-as-lanes repack would serve this
            # layout-bound case better.
            patches = jnp.concatenate(
                [tap(kh, kw).reshape(Mc, Cin)
                 for kh in range(3) for kw in range(3)], axis=-1)
            acc = jnp.dot(patches, w_all, preferred_element_type=jnp.float32)
        else:
            # Big-K layer: 9 accumulating MXU dots (K = Cin >= 128 each).
            acc = jnp.zeros((Mc, TCO), jnp.float32)
            for kh in range(3):
                for kw in range(3):
                    t = kh * 3 + kw
                    acc = acc + jnp.dot(
                        tap(kh, kw).reshape(Mc, Cin),
                        w_ref[t * Cin:(t + 1) * Cin, :],
                        preferred_element_type=jnp.float32)

        y = jnp.maximum(acc + bb, 0.0).astype(o_ref.dtype)
        y = y.reshape(row_tile, Wo, TCO)
        zc = jnp.zeros((row_tile, 1, TCO), o_ref.dtype)
        # Full-width store: interior rows + zeroed left/right halo columns.
        o_ref[0, pl.ds(1 + r0, row_tile), :, :] = jnp.concatenate(
            [zc, y, zc], axis=1)
        return carry

    lax.fori_loop(0, n_chunks, chunk, 0, unroll=n_chunks <= 2)


def conv3x3_bn_act(xp, w, bias, *, Ho, Wo, stride, out_dtype):
    N, Hp, Wp, Cin = xp.shape
    KC, Cp = w.shape
    tile = _pick_cout_tile(Cp)
    n_ct = Cp // tile
    row_tile = _pick_row_tile(Ho, Wo, tile)
    Hp2, Wp2 = Ho + 2, Wo + 2

    isz = xp.dtype.itemsize
    osz = jnp.dtype(out_dtype).itemsize
    grid, n_of, c_of = _grid_and_maps(
        N, n_ct, weight_bytes=KC * Cp * isz,
        act_bytes_total=N * Hp * Wp * Cin * isz)
    block_bytes = (Hp * Wp * Cin * isz + KC * tile * isz + tile * 4
                   + Hp2 * Wp2 * tile * osz)

    kernel = functools.partial(_conv3x3_bn_act_kernel, Ho=Ho, Wo=Wo,
                               stride=stride, row_tile=row_tile, Cin=Cin)
    return pl.pallas_call(
        kernel,
        out_shape=jax.ShapeDtypeStruct((N, Hp2, Wp2, Cp), out_dtype),
        grid=grid,
        in_specs=[
            pl.BlockSpec((1, Hp, Wp, Cin), lambda a, b_: (n_of(a, b_), 0, 0, 0)),
            pl.BlockSpec((KC, tile), lambda a, b_: (0, c_of(a, b_))),
            pl.BlockSpec((1, tile), lambda a, b_: (0, c_of(a, b_))),
        ],
        out_specs=pl.BlockSpec((1, Hp2, Wp2, tile),
                               lambda a, b_: (n_of(a, b_), 0, 0, c_of(a, b_))),
        compiler_params=pltpu.CompilerParams(
            dimension_semantics=("parallel", "parallel"),
            vmem_limit_bytes=_vmem_limit(block_bytes)),
    )(xp, w, bias)


# ----------------------------------------------------------------------------
# Kernel 2: conv3x3(s=1) + folded-BN + shortcut (fused 1x1-conv+BN, or
#           identity residual) + add + ReLU.  Input is kernel 1's haloed tile.
# ----------------------------------------------------------------------------
def _conv3x3_bn_res_act_kernel(*refs, Ho, Wo, row_tile, C1, proj):
    if proj:
        x_ref, w_ref, b_ref, s_ref, ws_ref, o_ref = refs
    else:
        x_ref, w_ref, b_ref, r_ref, o_ref = refs
    TCO = o_ref.shape[-1]
    Mc = row_tile * Wo
    n_chunks = Ho // row_tile

    bb = jnp.broadcast_to(b_ref[...], (Mc, TCO))   # hoisted bias broadcast
    if proj:
        ws = ws_ref[...]                           # (Cs, TCO), small

    def chunk(i, carry):
        r0 = pl.multiple_of(i * row_tile, row_tile)
        m0 = pl.multiple_of(r0 * Wo, Mc)
        acc = jnp.zeros((Mc, TCO), jnp.float32)
        # 9 accumulating MXU dots (K = C1 >= 128) over the zero-haloed input.
        for kh in range(3):
            for kw in range(3):
                t = kh * 3 + kw
                p = x_ref[0, pl.ds(r0 + kh, row_tile), kw:kw + Wo, :]
                acc = acc + jnp.dot(p.reshape(Mc, C1),
                                    w_ref[t * C1:(t + 1) * C1, :],
                                    preferred_element_type=jnp.float32)
        if proj:        # fused 1x1-conv + BN shortcut (rides on MXU slack)
            acc = acc + jnp.dot(s_ref[0, pl.ds(m0, Mc), :], ws,
                                preferred_element_type=jnp.float32)
        else:           # identity shortcut, f32 add in-kernel
            acc = acc + r_ref[0, pl.ds(m0, Mc), :].astype(jnp.float32)
        y = jnp.maximum(acc + bb, 0.0)
        o_ref[0, pl.ds(m0, Mc), :] = y.astype(o_ref.dtype)
        return carry

    lax.fori_loop(0, n_chunks, chunk, 0, unroll=n_chunks <= 2)


def conv3x3_bn_add_act(x1p, w2, bias, shortcut, ws=None, *, Ho, Wo, out_dtype):
    N, Hp2, Wp2, C1 = x1p.shape
    KC, Cp = w2.shape
    M = Ho * Wo
    proj = ws is not None
    tile = _pick_cout_tile(Cp)
    n_ct = Cp // tile
    row_tile = _pick_row_tile(Ho, Wo, tile)

    isz = x1p.dtype.itemsize
    osz = jnp.dtype(out_dtype).itemsize
    grid, n_of, c_of = _grid_and_maps(
        N, n_ct, weight_bytes=KC * Cp * isz,
        act_bytes_total=N * Hp2 * Wp2 * C1 * isz)

    in_specs = [
        pl.BlockSpec((1, Hp2, Wp2, C1), lambda a, b_: (n_of(a, b_), 0, 0, 0)),
        pl.BlockSpec((KC, tile), lambda a, b_: (0, c_of(a, b_))),
        pl.BlockSpec((1, tile), lambda a, b_: (0, c_of(a, b_))),
    ]
    args = [x1p, w2, bias]
    block_bytes = (Hp2 * Wp2 * C1 * isz + KC * tile * isz + tile * 4
                   + M * tile * osz)
    if proj:
        Cs = shortcut.shape[-1]
        in_specs += [
            pl.BlockSpec((1, M, Cs), lambda a, b_: (n_of(a, b_), 0, 0)),
            pl.BlockSpec((Cs, tile), lambda a, b_: (0, c_of(a, b_))),
        ]
        args += [shortcut, ws]
        block_bytes += (M * Cs * shortcut.dtype.itemsize
                        + Cs * tile * ws.dtype.itemsize)
    else:
        in_specs += [pl.BlockSpec((1, M, tile),
                                  lambda a, b_: (n_of(a, b_), 0, c_of(a, b_)))]
        args += [shortcut]
        block_bytes += M * tile * shortcut.dtype.itemsize

    kernel = functools.partial(_conv3x3_bn_res_act_kernel, Ho=Ho, Wo=Wo,
                               row_tile=row_tile, C1=C1, proj=proj)
    return pl.pallas_call(
        kernel,
        out_shape=jax.ShapeDtypeStruct((N, M, Cp), out_dtype),
        grid=grid,
        in_specs=in_specs,
        out_specs=pl.BlockSpec((1, M, tile),
                               lambda a, b_: (n_of(a, b_), 0, c_of(a, b_))),
        compiler_params=pltpu.CompilerParams(
            dimension_semantics=("parallel", "parallel"),
            vmem_limit_bytes=_vmem_limit(block_bytes)),
    )(*args)


# ----------------------------------------------------------------------------
# BN folding (eval-mode running stats)
# ----------------------------------------------------------------------------
def fold_bn(bn, eps=1e-5):
    scale = bn["gamma"] / jnp.sqrt(bn["var"] + eps)
    bias = bn["beta"] - bn["mean"] * scale
    return scale, bias


# ----------------------------------------------------------------------------
# ResBlock forward (spiking=False; Quant/DeQuant stubs are identity)
# ----------------------------------------------------------------------------
def resblock_forward(x_nchw, p, stride=1, compute_dtype=jnp.bfloat16, eps=1e-5):
    x = jnp.transpose(x_nchw, (0, 2, 3, 1)).astype(jnp.float32)   # NCHW -> NHWC
    N, H, W, Cin = x.shape
    Cout = p["w1"].shape[-1]
    Cp = _round_up(Cout, _LANE)                 # lane-dense channel padding
    Ho = (H - 1) // stride + 1
    Wo = (W - 1) // stride + 1
    M = Ho * Wo

    # ---- conv1 (3x3, stride) + bn1 + ReLU; BN scale folded into weights ----
    s1, b1 = fold_bn(p["bn1"], eps)
    w1 = (p["w1"] * s1).reshape(9 * Cin, Cout)
    w1 = jnp.pad(w1, ((0, 0), (0, Cp - Cout))).astype(compute_dtype)
    b1 = jnp.pad(b1, (0, Cp - Cout)).reshape(1, Cp).astype(jnp.float32)
    xp = jnp.pad(x, ((0, 0), (1, 1), (1, 1), (0, 0))).astype(compute_dtype)

    # (N, Ho+2, Wo+2, Cp) with zeroed halo -- feeds kernel 2 directly (no pad).
    out1p = conv3x3_bn_act(xp, w1, b1, Ho=Ho, Wo=Wo, stride=stride,
                           out_dtype=compute_dtype)

    # ---- conv2 (3x3, s=1) + bn2 [+ fused 1x1 shortcut] + add + ReLU ----
    s2, b2 = fold_bn(p["bn2"], eps)
    w2 = jnp.pad(p["w2"] * s2, ((0, 0), (0, 0), (0, Cp - Cout), (0, Cp - Cout)))
    w2 = w2.reshape(9 * Cp, Cp).astype(compute_dtype)

    if stride != 1 or Cin != Cout:              # projection shortcut
        ss, bs = fold_bn(p["bns"], eps)
        ws = jnp.pad(p["ws"][0, 0] * ss,
                     ((0, 0), (0, Cp - Cout))).astype(compute_dtype)
        bias = jnp.pad(b2 + bs, (0, Cp - Cout)).reshape(1, Cp).astype(jnp.float32)
        xs = x[:, ::stride, ::stride, :].reshape(N, M, Cin).astype(compute_dtype)
        out = conv3x3_bn_add_act(out1p, w2, bias, xs, ws,
                                 Ho=Ho, Wo=Wo, out_dtype=compute_dtype)
    else:                                       # identity shortcut
        bias = jnp.pad(b2, (0, Cp - Cout)).reshape(1, Cp).astype(jnp.float32)
        res = jnp.pad(x.reshape(N, M, Cin),
                      ((0, 0), (0, 0), (0, Cp - Cin))).astype(compute_dtype)
        out = conv3x3_bn_add_act(out1p, w2, bias, res, None,
                                 Ho=Ho, Wo=Wo, out_dtype=compute_dtype)

    out = out.reshape(N, Ho, Wo, Cp)[..., :Cout].astype(jnp.float32)
    return jnp.transpose(out, (0, 3, 1, 2))     # NHWC -> NCHW


# ----------------------------------------------------------------------------
# Pure-JAX reference (f32) for correctness check
# ----------------------------------------------------------------------------
def resblock_reference(x, p, stride=1, eps=1e-5):
    def conv(x, w, s, pad):
        return lax.conv_general_dilated(
            x, w, (s, s), [(pad, pad), (pad, pad)],
            dimension_numbers=("NCHW", "HWIO", "NCHW"),
            precision=lax.Precision.HIGHEST)

    def bn(x, b):
        sc = b["gamma"] / jnp.sqrt(b["var"] + eps)
        bi = b["beta"] - b["mean"] * sc
        return x * sc[None, :, None, None] + bi[None, :, None, None]

    cin = x.shape[1]
    cout = p["w1"].shape[-1]
    out = jnp.maximum(bn(conv(x, p["w1"], stride, 1), p["bn1"]), 0.0)
    out = bn(conv(out, p["w2"], 1, 1), p["bn2"])
    if stride != 1 or cin != cout:
        sct = bn(conv(x, p["ws"], stride, 0), p["bns"])
    else:
        sct = x
    return jnp.maximum(out + sct, 0.0)


# ----------------------------------------------------------------------------
# Deterministic synthetic parameters (shapes from ResBlock.__init__)
# ----------------------------------------------------------------------------
def init_params(key, cin, cout):
    ks = jax.random.split(key, 16)

    def bn_params(k0, k1, k2, k3, c):
        return dict(
            gamma=1.0 + 0.1 * jax.random.normal(k0, (c,), jnp.float32),
            beta=0.1 * jax.random.normal(k1, (c,), jnp.float32),
            mean=0.1 * jax.random.normal(k2, (c,), jnp.float32),
            var=jax.random.uniform(k3, (c,), jnp.float32, 0.5, 1.5),
        )

    return {
        "w1": 0.2 * jax.random.normal(ks[0], (3, 3, cin, cout), jnp.float32),
        "w2": 0.2 * jax.random.normal(ks[1], (3, 3, cout, cout), jnp.float32),
        "ws": 0.2 * jax.random.normal(ks[2], (1, 1, cin, cout), jnp.float32),
        "bn1": bn_params(ks[3], ks[4], ks[5], ks[6], cout),
        "bn2": bn_params(ks[7], ks[8], ks[9], ks[10], cout),
        "bns": bn_params(ks[11], ks[12], ks[13], ks[14], cout),
    }


if __name__ == "__main__":
    key = jax.random.PRNGKey(0)
    kx, kp, kx2, kp2 = jax.random.split(key, 4)

    # ---- case 1: spec shapes, projection (1x1-conv + BN) shortcut ----
    N, Cin, H, W = 2, 4, 16, 16
    Cout, stride = 8, 1
    x = jax.random.normal(kx, (N, Cin, H, W), jnp.float32)
    params = init_params(kp, Cin, Cout)
    ref = resblock_reference(x, params, stride)

    fwd32 = jax.jit(functools.partial(resblock_forward, p=params, stride=stride,
                                      compute_dtype=jnp.float32))
    out32 = jax.block_until_ready(fwd32(x))
    assert out32.shape == ref.shape == (N, Cout, H, W)
    if not bool(jnp.allclose(out32, ref, atol=2e-3, rtol=2e-3)):
        raise AssertionError(
            f"f32 mismatch, max abs err={float(jnp.max(jnp.abs(out32 - ref)))}")

    fwd16 = jax.jit(functools.partial(resblock_forward, p=params, stride=stride,
                                      compute_dtype=jnp.bfloat16))
    out16 = jax.block_until_ready(fwd16(x))
    if not bool(jnp.allclose(out16, ref, atol=1.5e-1, rtol=1.5e-1)):
        raise AssertionError(
            f"bf16 mismatch, max abs err={float(jnp.max(jnp.abs(out16 - ref)))}")

    # ---- case 2: identity shortcut, 128 channels: exercises the large-K
    #      9-accumulating-dot path and the multi-chunk fori_loop path ----
    N2, C2, H2 = 1, 128, 24
    x2 = jax.random.normal(kx2, (N2, C2, H2, H2), jnp.float32)
    params2 = init_params(kp2, C2, C2)
    ref2 = resblock_reference(x2, params2, 1)
    fwd2 = jax.jit(functools.partial(resblock_forward, p=params2, stride=1,
                                     compute_dtype=jnp.float32))
    out2 = jax.block_until_ready(fwd2(x2))
    if not bool(jnp.allclose(out2, ref2, atol=3e-3, rtol=3e-3)):
        raise AssertionError(
            f"f32 identity-path mismatch, "
            f"max abs err={float(jnp.max(jnp.abs(out2 - ref2)))}")

    print("KERNEL_OK")
</pallas_src>

<mosaic_0001>
module attributes {stable_mosaic.version = 11 : i64} {
  func.func @_conv3x3_bn_res_act_kernel(%arg0: i32, %arg1: i32, %arg2: memref<1x18x18x128xf32, #tpu.memory_space<vmem>>, %arg3: memref<1152x128xf32, #tpu.memory_space<vmem>>, %arg4: memref<1x128xf32, #tpu.memory_space<vmem>>, %arg5: memref<1x256x4xf32, #tpu.memory_space<vmem>>, %arg6: memref<4x128xf32, #tpu.memory_space<vmem>>, %arg7: memref<1x256x128xf32, #tpu.memory_space<vmem>>) attributes {dimension_semantics = [#tpu.dimension_semantics<parallel>, #tpu.dimension_semantics<parallel>], iteration_bounds = array<i64: 1, 2>, scalar_prefetch = 0 : i64, scratch_operands = 0 : i64, tpu.core_type = #tpu.core_type<tc>, window_params = [{transform_indices = @transform_0, window_bounds = array<i64: 1, 18, 18, 128>}, {transform_indices = @transform_1, window_bounds = array<i64: 1152, 128>}, {transform_indices = @transform_2, window_bounds = array<i64: 1, 128>}, {transform_indices = @transform_3, window_bounds = array<i64: 1, 256, 4>}, {transform_indices = @transform_4, window_bounds = array<i64: 4, 128>}, {transform_indices = @transform_5, window_bounds = array<i64: 1, 256, 128>}]} {
    %c0 = arith.constant 0 : index
    %c0_0 = arith.constant 0 : index
    %0 = vector.load %arg4[%c0, %c0_0] : memref<1x128xf32, #tpu.memory_space<vmem>>, vector<1x128xf32>
    %1 = vector.shape_cast %0 : vector<1x128xf32> to vector<1x128xf32>
    %2 = vector.broadcast %1 : vector<1x128xf32> to vector<256x128xf32>
    %c0_1 = arith.constant 0 : index
    %c0_2 = arith.constant 0 : index
    %3 = vector.load %arg6[%c0_1, %c0_2] : memref<4x128xf32, #tpu.memory_space<vmem>>, vector<4x128xf32>
    %c0_i32 = arith.constant 0 : i32
    %c16_i32 = arith.constant 16 : i32
    %4 = arith.muli %c0_i32, %c16_i32 : i32
    %5 = tpu.assume_multiple %4, 16 : i32
    %c16_i32_3 = arith.constant 16 : i32
    %6 = arith.muli %5, %c16_i32_3 : i32
    %7 = tpu.assume_multiple %6, 256 : i32
    %cst = arith.constant 0.000000e+00 : f32
    %8 = vector.broadcast %cst : f32 to vector<256x128xf32>
    %c0_i32_4 = arith.constant 0 : i32
    %9 = arith.addi %5, %c0_i32_4 : i32
    %c0_5 = arith.constant 0 : index
    %10 = arith.index_cast %9 : i32 to index
    %c0_6 = arith.constant 0 : index
    %c0_7 = arith.constant 0 : index
    %11 = vector.load %arg2[%c0_5, %10, %c0_6, %c0_7] : memref<1x18x18x128xf32, #tpu.memory_space<vmem>>, vector<1x16x16x128xf32>
    %12 = vector.shape_cast %11 : vector<1x16x16x128xf32> to vector<16x16x128xf32>
    %13 = vector.shape_cast %12 : vector<16x16x128xf32> to vector<256x128xf32>
    %c0_8 = arith.constant 0 : index
    %c0_9 = arith.constant 0 : index
    %14 = vector.load %arg3[%c0_8, %c0_9] : memref<1152x128xf32, #tpu.memory_space<vmem>>, vector<128x128xf32>
    %cst_10 = arith.constant dense<0.000000e+00> : vector<256x128xf32>
    %15 = tpu.matmul %13, %14, %cst_10 {dimension_numbers = #tpu.dot_dimension_numbers<[1], [0], [0], [1], [0, 0, 1, 1], [], []>} : vector<256x128xf32>, vector<128x128xf32>, vector<256x128xf32> -> vector<256x128xf32>
    %16 = arith.addf %8, %15 : vector<256x128xf32>
    %c0_i32_11 = arith.constant 0 : i32
    %17 = arith.addi %5, %c0_i32_11 : i32
    %c0_12 = arith.constant 0 : index
    %18 = arith.index_cast %17 : i32 to index
    %c1 = arith.constant 1 : index
    %c0_13 = arith.constant 0 : index
    %19 = vector.load %arg2[%c0_12, %18, %c1, %c0_13] : memref<1x18x18x128xf32, #tpu.memory_space<vmem>>, vector<1x16x16x128xf32>
    %20 = vector.shape_cast %19 : vector<1x16x16x128xf32> to vector<16x16x128xf32>
    %21 = vector.shape_cast %20 : vector<16x16x128xf32> to vector<256x128xf32>
    %c128 = arith.constant 128 : index
    %c0_14 = arith.constant 0 : index
    %22 = vector.load %arg3[%c128, %c0_14] : memref<1152x128xf32, #tpu.memory_space<vmem>>, vector<128x128xf32>
    %cst_15 = arith.constant dense<0.000000e+00> : vector<256x128xf32>
    %23 = tpu.matmul %21, %22, %cst_15 {dimension_numbers = #tpu.dot_dimension_numbers<[1], [0], [0], [1], [0, 0, 1, 1], [], []>} : vector<256x128xf32>, vector<128x128xf32>, vector<256x128xf32> -> vector<256x128xf32>
    %24 = arith.addf %16, %23 : vector<256x128xf32>
    %c0_i32_16 = arith.constant 0 : i32
    %25 = arith.addi %5, %c0_i32_16 : i32
    %c0_17 = arith.constant 0 : index
    %26 = arith.index_cast %25 : i32 to index
    %c2 = arith.constant 2 : index
    %c0_18 = arith.constant 0 : index
    %27 = vector.load %arg2[%c0_17, %26, %c2, %c0_18] : memref<1x18x18x128xf32, #tpu.memory_space<vmem>>, vector<1x16x16x128xf32>
    %28 = vector.shape_cast %27 : vector<1x16x16x128xf32> to vector<16x16x128xf32>
    %29 = vector.shape_cast %28 : vector<16x16x128xf32> to vector<256x128xf32>
    %c256 = arith.constant 256 : index
    %c0_19 = arith.constant 0 : index
    %30 = vector.load %arg3[%c256, %c0_19] : memref<1152x128xf32, #tpu.memory_space<vmem>>, vector<128x128xf32>
    %cst_20 = arith.constant dense<0.000000e+00> : vector<256x128xf32>
    %31 = tpu.matmul %29, %30, %cst_20 {dimension_numbers = #tpu.dot_dimension_numbers<[1], [0], [0], [1], [0, 0, 1, 1], [], []>} : vector<256x128xf32>, vector<128x128xf32>, vector<256x128xf32> -> vector<256x128xf32>
    %32 = arith.addf %24, %31 : vector<256x128xf32>
    %c1_i32 = arith.constant 1 : i32
    %33 = arith.addi %5, %c1_i32 : i32
    %c0_21 = arith.constant 0 : index
    %34 = arith.index_cast %33 : i32 to index
    %c0_22 = arith.constant 0 : index
    %c0_23 = arith.constant 0 : index
    %35 = vector.load %arg2[%c0_21, %34, %c0_22, %c0_23] : memref<1x18x18x128xf32, #tpu.memory_space<vmem>>, vector<1x16x16x128xf32>
    %36 = vector.shape_cast %35 : vector<1x16x16x128xf32> to vector<16x16x128xf32>
    %37 = vector.shape_cast %36 : vector<16x16x128xf32> to vector<256x128xf32>
    %c384 = arith.constant 384 : index
    %c0_24 = arith.constant 0 : index
    %38 = vector.load %arg3[%c384, %c0_24] : memref<1152x128xf32, #tpu.memory_space<vmem>>, vector<128x128xf32>
    %cst_25 = arith.constant dense<0.000000e+00> : vector<256x128xf32>
    %39 = tpu.matmul %37, %38, %cst_25 {dimension_numbers = #tpu.dot_dimension_numbers<[1], [0], [0], [1], [0, 0, 1, 1], [], []>} : vector<256x128xf32>, vector<128x128xf32>, vector<256x128xf32> -> vector<256x128xf32>
    %40 = arith.addf %32, %39 : vector<256x128xf32>
    %c1_i32_26 = arith.constant 1 : i32
    %41 = arith.addi %5, %c1_i32_26 : i32
    %c0_27 = arith.constant 0 : index
    %42 = arith.index_cast %41 : i32 to index
    %c1_28 = arith.constant 1 : index
    %c0_29 = arith.constant 0 : index
    %43 = vector.load %arg2[%c0_27, %42, %c1_28, %c0_29] : memref<1x18x18x128xf32, #tpu.memory_space<vmem>>, vector<1x16x16x128xf32>
    %44 = vector.shape_cast %43 : vector<1x16x16x128xf32> to vector<16x16x128xf32>
    %45 = vector.shape_cast %44 : vector<16x16x128xf32> to vector<256x128xf32>
    %c512 = arith.constant 512 : index
    %c0_30 = arith.constant 0 : index
    %46 = vector.load %arg3[%c512, %c0_30] : memref<1152x128xf32, #tpu.memory_space<vmem>>, vector<128x128xf32>
    %cst_31 = arith.constant dense<0.000000e+00> : vector<256x128xf32>
    %47 = tpu.matmul %45, %46, %cst_31 {dimension_numbers = #tpu.dot_dimension_numbers<[1], [0], [0], [1], [0, 0, 1, 1], [], []>} : vector<256x128xf32>, vector<128x128xf32>, vector<256x128xf32> -> vector<256x128xf32>
    %48 = arith.addf %40, %47 : vector<256x128xf32>
    %c1_i32_32 = arith.constant 1 : i32
    %49 = arith.addi %5, %c1_i32_32 : i32
    %c0_33 = arith.constant 0 : index
    %50 = arith.index_cast %49 : i32 to index
    %c2_34 = arith.constant 2 : index
    %c0_35 = arith.constant 0 : index
    %51 = vector.load %arg2[%c0_33, %50, %c2_34, %c0_35] : memref<1x18x18x128xf32, #tpu.memory_space<vmem>>, vector<1x16x16x128xf32>
    %52 = vector.shape_cast %51 : vector<1x16x16x128xf32> to vector<16x16x128xf32>
    %53 = vector.shape_cast %52 : vector<16x16x128xf32> to vector<256x128xf32>
    %c640 = arith.constant 640 : index
    %c0_36 = arith.constant 0 : index
    %54 = vector.load %arg3[%c640, %c0_36] : memref<1152x128xf32, #tpu.memory_space<vmem>>, vector<128x128xf32>
    %cst_37 = arith.constant dense<0.000000e+00> : vector<256x128xf32>
    %55 = tpu.matmul %53, %54, %cst_37 {dimension_numbers = #tpu.dot_dimension_numbers<[1], [0], [0], [1], [0, 0, 1, 1], [], []>} : vector<256x128xf32>, vector<128x128xf32>, vector<256x128xf32> -> vector<256x128xf32>
    %56 = arith.addf %48, %55 : vector<256x128xf32>
    %c2_i32 = arith.constant 2 : i32
    %57 = arith.addi %5, %c2_i32 : i32
    %c0_38 = arith.constant 0 : index
    %58 = arith.index_cast %57 : i32 to index
    %c0_39 = arith.constant 0 : index
    %c0_40 = arith.constant 0 : index
    %59 = vector.load %arg2[%c0_38, %58, %c0_39, %c0_40] : memref<1x18x18x128xf32, #tpu.memory_space<vmem>>, vector<1x16x16x128xf32>
    %60 = vector.shape_cast %59 : vector<1x16x16x128xf32> to vector<16x16x128xf32>
    %61 = vector.shape_cast %60 : vector<16x16x128xf32> to vector<256x128xf32>
    %c768 = arith.constant 768 : index
    %c0_41 = arith.constant 0 : index
    %62 = vector.load %arg3[%c768, %c0_41] : memref<1152x128xf32, #tpu.memory_space<vmem>>, vector<128x128xf32>
    %cst_42 = arith.constant dense<0.000000e+00> : vector<256x128xf32>
    %63 = tpu.matmul %61, %62, %cst_42 {dimension_numbers = #tpu.dot_dimension_numbers<[1], [0], [0], [1], [0, 0, 1, 1], [], []>} : vector<256x128xf32>, vector<128x128xf32>, vector<256x128xf32> -> vector<256x128xf32>
    %64 = arith.addf %56, %63 : vector<256x128xf32>
    %c2_i32_43 = arith.constant 2 : i32
    %65 = arith.addi %5, %c2_i32_43 : i32
    %c0_44 = arith.constant 0 : index
    %66 = arith.index_cast %65 : i32 to index
    %c1_45 = arith.constant 1 : index
    %c0_46 = arith.constant 0 : index
    %67 = vector.load %arg2[%c0_44, %66, %c1_45, %c0_46] : memref<1x18x18x128xf32, #tpu.memory_space<vmem>>, vector<1x16x16x128xf32>
    %68 = vector.shape_cast %67 : vector<1x16x16x128xf32> to vector<16x16x128xf32>
    %69 = vector.shape_cast %68 : vector<16x16x128xf32> to vector<256x128xf32>
    %c896 = arith.constant 896 : index
    %c0_47 = arith.constant 0 : index
    %70 = vector.load %arg3[%c896, %c0_47] : memref<1152x128xf32, #tpu.memory_space<vmem>>, vector<128x128xf32>
    %cst_48 = arith.constant dense<0.000000e+00> : vector<256x128xf32>
    %71 = tpu.matmul %69, %70, %cst_48 {dimension_numbers = #tpu.dot_dimension_numbers<[1], [0], [0], [1], [0, 0, 1, 1], [], []>} : vector<256x128xf32>, vector<128x128xf32>, vector<256x128xf32> -> vector<256x128xf32>
    %72 = arith.addf %64, %71 : vector<256x128xf32>
    %c2_i32_49 = arith.constant 2 : i32
    %73 = arith.addi %5, %c2_i32_49 : i32
    %c0_50 = arith.constant 0 : index
    %74 = arith.index_cast %73 : i32 to index
    %c2_51 = arith.constant 2 : index
    %c0_52 = arith.constant 0 : index
    %75 = vector.load %arg2[%c0_50, %74, %c2_51, %c0_52] : memref<1x18x18x128xf32, #tpu.memory_space<vmem>>, vector<1x16x16x128xf32>
    %76 = vector.shape_cast %75 : vector<1x16x16x128xf32> to vector<16x16x128xf32>
    %77 = vector.shape_cast %76 : vector<16x16x128xf32> to vector<256x128xf32>
    %c1024 = arith.constant 1024 : index
    %c0_53 = arith.constant 0 : index
    %78 = vector.load %arg3[%c1024, %c0_53] : memref<1152x128xf32, #tpu.memory_space<vmem>>, vector<128x128xf32>
    %cst_54 = arith.constant dense<0.000000e+00> : vector<256x128xf32>
    %79 = tpu.matmul %77, %78, %cst_54 {dimension_numbers = #tpu.dot_dimension_numbers<[1], [0], [0], [1], [0, 0, 1, 1], [], []>} : vector<256x128xf32>, vector<128x128xf32>, vector<256x128xf32> -> vector<256x128xf32>
    %80 = arith.addf %72, %79 : vector<256x128xf32>
    %c0_55 = arith.constant 0 : index
    %81 = arith.index_cast %7 : i32 to index
    %c0_56 = arith.constant 0 : index
    %82 = vector.load %arg5[%c0_55, %81, %c0_56] : memref<1x256x4xf32, #tpu.memory_space<vmem>>, vector<1x256x4xf32>
    %83 = vector.shape_cast %82 : vector<1x256x4xf32> to vector<256x4xf32>
    %cst_57 = arith.constant dense<0.000000e+00> : vector<256x128xf32>
    %84 = tpu.matmul %83, %3, %cst_57 {dimension_numbers = #tpu.dot_dimension_numbers<[1], [0], [0], [1], [0, 0, 1, 1], [], []>} : vector<256x4xf32>, vector<4x128xf32>, vector<256x128xf32> -> vector<256x128xf32>
    %85 = arith.addf %80, %84 : vector<256x128xf32>
    %86 = arith.addf %85, %2 : vector<256x128xf32>
    %cst_58 = arith.constant 0.000000e+00 : f32
    %87 = vector.broadcast %cst_58 : f32 to vector<256x128xf32>
    %88 = arith.maximumf %86, %87 : vector<256x128xf32>
    %c0_59 = arith.constant 0 : index
    %89 = arith.index_cast %7 : i32 to index
    %c0_60 = arith.constant 0 : index
    %90 = vector.load %arg7[%c0_59, %89, %c0_60] : memref<1x256x128xf32, #tpu.memory_space<vmem>>, vector<1x256x128xf32>
    %91 = vector.shape_cast %90 : vector<1x256x128xf32> to vector<256x128xf32>
    %92 = vector.shape_cast %88 : vector<256x128xf32> to vector<1x256x128xf32>
    tpu.vector_store %arg7[%c0_59, %89, %c0_60], %92 {strides = array<i32>} : memref<1x256x128xf32, #tpu.memory_space<vmem>>, vector<1x256x128xf32>,
    %c1_i32_61 = arith.constant 1 : i32
    return
  }
  func.func @transform_0(%arg0: i32, %arg1: i32) -> (i32, i32, i32, i32) {
    %c0_i32 = arith.constant 0 : i32
    %c0_i32_0 = arith.constant 0 : i32
    %c0_i32_1 = arith.constant 0 : i32
    %c0_i32_2 = arith.constant 0 : i32
    return %arg1, %c0_i32, %c0_i32_0, %c0_i32_1 : i32, i32, i32, i32
  }
  func.func @transform_1(%arg0: i32, %arg1: i32) -> (i32, i32) {
    %c0_i32 = arith.constant 0 : i32
    %c0_i32_0 = arith.constant 0 : i32
    return %c0_i32, %arg0 : i32, i32
  }
  func.func @transform_2(%arg0: i32, %arg1: i32) -> (i32, i32) {
    %c0_i32 = arith.constant 0 : i32
    %c0_i32_0 = arith.constant 0 : i32
    return %c0_i32, %arg0 : i32, i32
  }
  func.func @transform_3(%arg0: i32, %arg1: i32) -> (i32, i32, i32) {
    %c0_i32 = arith.constant 0 : i32
    %c0_i32_0 = arith.constant 0 : i32
    %c0_i32_1 = arith.constant 0 : i32
    return %arg1, %c0_i32, %c0_i32_0 : i32, i32, i32
  }
  func.func @transform_4(%arg0: i32, %arg1: i32) -> (i32, i32) {
    %c0_i32 = arith.constant 0 : i32
    %c0_i32_0 = arith.constant 0 : i32
    return %c0_i32, %arg0 : i32, i32
  }
  func.func @transform_5(%arg0: i32, %arg1: i32) -> (i32, i32, i32) {
    %c0_i32 = arith.constant 0 : i32
    %c0_i32_0 = arith.constant 0 : i32
    return %arg1, %c0_i32, %arg0 : i32, i32, i32
  }
}

module attributes {stable_mosaic.version = 11 : i64} {
  func.func @_conv3x3_bn_act_kernel(%arg0: i32, %arg1: i32, %arg2: memref<1x18x18x4xf32, #tpu.memory_space<vmem>>, %arg3: memref<36x128xf32, #tpu.memory_space<vmem>>, %arg4: memref<1x128xf32, #tpu.memory_space<vmem>>, %arg5: memref<1x18x18x128xf32, #tpu.memory_space<vmem>>) attributes {dimension_semantics = [#tpu.dimension_semantics<parallel>, #tpu.dimension_semantics<parallel>], iteration_bounds = array<i64: 1, 2>, scalar_prefetch = 0 : i64, scratch_operands = 0 : i64, tpu.core_type = #tpu.core_type<tc>, window_params = [{transform_indices = @transform_0, window_bounds = array<i64: 1, 18, 18, 4>}, {transform_indices = @transform_1, window_bounds = array<i64: 36, 128>}, {transform_indices = @transform_2, window_bounds = array<i64: 1, 128>}, {transform_indices = @transform_3, window_bounds = array<i64: 1, 18, 18, 128>}]} {
    %cst = arith.constant 0.000000e+00 : f32
    %0 = vector.broadcast %cst : f32 to vector<1x18x128xf32>
    %c0 = arith.constant 0 : index
    %c0_0 = arith.constant 0 : index
    %c0_1 = arith.constant 0 : index
    %c0_2 = arith.constant 0 : index
    %1 = vector.load %arg5[%c0, %c0_0, %c0_1, %c0_2] : memref<1x18x18x128xf32, #tpu.memory_space<vmem>>, vector<1x1x18x128xf32>
    %2 = vector.shape_cast %1 : vector<1x1x18x128xf32> to vector<1x18x128xf32>
    %3 = vector.shape_cast %0 : vector<1x18x128xf32> to vector<1x1x18x128xf32>
    tpu.vector_store %arg5[%c0, %c0_0, %c0_1, %c0_2], %3 {strides = array<i32>} : memref<1x18x18x128xf32, #tpu.memory_space<vmem>>, vector<1x1x18x128xf32>,
    %c0_3 = arith.constant 0 : index
    %c17 = arith.constant 17 : index
    %c0_4 = arith.constant 0 : index
    %c0_5 = arith.constant 0 : index
    %4 = vector.load %arg5[%c0_3, %c17, %c0_4, %c0_5] : memref<1x18x18x128xf32, #tpu.memory_space<vmem>>, vector<1x1x18x128xf32>
    %5 = vector.shape_cast %4 : vector<1x1x18x128xf32> to vector<1x18x128xf32>
    %6 = vector.shape_cast %0 : vector<1x18x128xf32> to vector<1x1x18x128xf32>
    tpu.vector_store %arg5[%c0_3, %c17, %c0_4, %c0_5], %6 {strides = array<i32>} : memref<1x18x18x128xf32, #tpu.memory_space<vmem>>, vector<1x1x18x128xf32>,
    %c0_6 = arith.constant 0 : index
    %c0_7 = arith.constant 0 : index
    %7 = vector.load %arg4[%c0_6, %c0_7] : memref<1x128xf32, #tpu.memory_space<vmem>>, vector<1x128xf32>
    %8 = vector.shape_cast %7 : vector<1x128xf32> to vector<1x128xf32>
    %9 = vector.broadcast %8 : vector<1x128xf32> to vector<256x128xf32>
    %c0_8 = arith.constant 0 : index
    %c0_9 = arith.constant 0 : index
    %10 = vector.load %arg3[%c0_8, %c0_9] : memref<36x128xf32, #tpu.memory_space<vmem>>, vector<36x128xf32>
    %c0_i32 = arith.constant 0 : i32
    %c16_i32 = arith.constant 16 : i32
    %11 = arith.muli %c0_i32, %c16_i32 : i32
    %12 = tpu.assume_multiple %11, 16 : i32
    %c0_i32_10 = arith.constant 0 : i32
    %13 = arith.addi %12, %c0_i32_10 : i32
    %c0_11 = arith.constant 0 : index
    %14 = arith.index_cast %13 : i32 to index
    %c0_12 = arith.constant 0 : index
    %c0_13 = arith.constant 0 : index
    %15 = vector.load %arg2[%c0_11, %14, %c0_12, %c0_13] : memref<1x18x18x4xf32, #tpu.memory_space<vmem>>, vector<1x16x16x4xf32>
    %16 = vector.shape_cast %15 : vector<1x16x16x4xf32> to vector<16x16x4xf32>
    %17 = vector.shape_cast %16 : vector<16x16x4xf32> to vector<256x4xf32>
    %c0_i32_14 = arith.constant 0 : i32
    %18 = arith.addi %12, %c0_i32_14 : i32
    %c0_15 = arith.constant 0 : index
    %19 = arith.index_cast %18 : i32 to index
    %c1 = arith.constant 1 : index
    %c0_16 = arith.constant 0 : index
    %20 = vector.load %arg2[%c0_15, %19, %c1, %c0_16] : memref<1x18x18x4xf32, #tpu.memory_space<vmem>>, vector<1x16x16x4xf32>
    %21 = vector.shape_cast %20 : vector<1x16x16x4xf32> to vector<16x16x4xf32>
    %22 = vector.shape_cast %21 : vector<16x16x4xf32> to vector<256x4xf32>
    %c0_i32_17 = arith.constant 0 : i32
    %23 = arith.addi %12, %c0_i32_17 : i32
    %c0_18 = arith.constant 0 : index
    %24 = arith.index_cast %23 : i32 to index
    %c2 = arith.constant 2 : index
    %c0_19 = arith.constant 0 : index
    %25 = vector.load %arg2[%c0_18, %24, %c2, %c0_19] : memref<1x18x18x4xf32, #tpu.memory_space<vmem>>, vector<1x16x16x4xf32>
    %26 = vector.shape_cast %25 : vector<1x16x16x4xf32> to vector<16x16x4xf32>
    %27 = vector.shape_cast %26 : vector<16x16x4xf32> to vector<256x4xf32>
    %c1_i32 = arith.constant 1 : i32
    %28 = arith.addi %12, %c1_i32 : i32
    %c0_20 = arith.constant 0 : index
    %29 = arith.index_cast %28 : i32 to index
    %c0_21 = arith.constant 0 : index
    %c0_22 = arith.constant 0 : index
    %30 = vector.load %arg2[%c0_20, %29, %c0_21, %c0_22] : memref<1x18x18x4xf32, #tpu.memory_space<vmem>>, vector<1x16x16x4xf32>
    %31 = vector.shape_cast %30 : vector<1x16x16x4xf32> to vector<16x16x4xf32>
    %32 = vector.shape_cast %31 : vector<16x16x4xf32> to vector<256x4xf32>
    %c1_i32_23 = arith.constant 1 : i32
    %33 = arith.addi %12, %c1_i32_23 : i32
    %c0_24 = arith.constant 0 : index
    %34 = arith.index_cast %33 : i32 to index
    %c1_25 = arith.constant 1 : index
    %c0_26 = arith.constant 0 : index
    %35 = vector.load %arg2[%c0_24, %34, %c1_25, %c0_26] : memref<1x18x18x4xf32, #tpu.memory_space<vmem>>, vector<1x16x16x4xf32>
    %36 = vector.shape_cast %35 : vector<1x16x16x4xf32> to vector<16x16x4xf32>
    %37 = vector.shape_cast %36 : vector<16x16x4xf32> to vector<256x4xf32>
    %c1_i32_27 = arith.constant 1 : i32
    %38 = arith.addi %12, %c1_i32_27 : i32
    %c0_28 = arith.constant 0 : index
    %39 = arith.index_cast %38 : i32 to index
    %c2_29 = arith.constant 2 : index
    %c0_30 = arith.constant 0 : index
    %40 = vector.load %arg2[%c0_28, %39, %c2_29, %c0_30] : memref<1x18x18x4xf32, #tpu.memory_space<vmem>>, vector<1x16x16x4xf32>
    %41 = vector.shape_cast %40 : vector<1x16x16x4xf32> to vector<16x16x4xf32>
    %42 = vector.shape_cast %41 : vector<16x16x4xf32> to vector<256x4xf32>
    %c2_i32 = arith.constant 2 : i32
    %43 = arith.addi %12, %c2_i32 : i32
    %c0_31 = arith.constant 0 : index
    %44 = arith.index_cast %43 : i32 to index
    %c0_32 = arith.constant 0 : index
    %c0_33 = arith.constant 0 : index
    %45 = vector.load %arg2[%c0_31, %44, %c0_32, %c0_33] : memref<1x18x18x4xf32, #tpu.memory_space<vmem>>, vector<1x16x16x4xf32>
    %46 = vector.shape_cast %45 : vector<1x16x16x4xf32> to vector<16x16x4xf32>
    %47 = vector.shape_cast %46 : vector<16x16x4xf32> to vector<256x4xf32>
    %c2_i32_34 = arith.constant 2 : i32
    %48 = arith.addi %12, %c2_i32_34 : i32
    %c0_35 = arith.constant 0 : index
    %49 = arith.index_cast %48 : i32 to index
    %c1_36 = arith.constant 1 : index
    %c0_37 = arith.constant 0 : index
    %50 = vector.load %arg2[%c0_35, %49, %c1_36, %c0_37] : memref<1x18x18x4xf32, #tpu.memory_space<vmem>>, vector<1x16x16x4xf32>
    %51 = vector.shape_cast %50 : vector<1x16x16x4xf32> to vector<16x16x4xf32>
    %52 = vector.shape_cast %51 : vector<16x16x4xf32> to vector<256x4xf32>
    %c2_i32_38 = arith.constant 2 : i32
    %53 = arith.addi %12, %c2_i32_38 : i32
    %c0_39 = arith.constant 0 : index
    %54 = arith.index_cast %53 : i32 to index
    %c2_40 = arith.constant 2 : index
    %c0_41 = arith.constant 0 : index
    %55 = vector.load %arg2[%c0_39, %54, %c2_40, %c0_41] : memref<1x18x18x4xf32, #tpu.memory_space<vmem>>, vector<1x16x16x4xf32>
    %56 = vector.shape_cast %55 : vector<1x16x16x4xf32> to vector<16x16x4xf32>
    %57 = vector.shape_cast %56 : vector<16x16x4xf32> to vector<256x4xf32>
    %58 = tpu.concatenate %17, %22, %27, %32, %37, %42, %47, %52, %57 in 1 : vector<256x4xf32>, vector<256x4xf32>, vector<256x4xf32>, vector<256x4xf32>, vector<256x4xf32>, vector<256x4xf32>, vector<256x4xf32>, vector<256x4xf32>, vector<256x4xf32> -> vector<256x36xf32>
    %cst_42 = arith.constant dense<0.000000e+00> : vector<256x128xf32>
    %59 = tpu.matmul %58, %10, %cst_42 {dimension_numbers = #tpu.dot_dimension_numbers<[1], [0], [0], [1], [0, 0, 1, 1], [], []>} : vector<256x36xf32>, vector<36x128xf32>, vector<256x128xf32> -> vector<256x128xf32>
    %60 = arith.addf %59, %9 : vector<256x128xf32>
    %cst_43 = arith.constant 0.000000e+00 : f32
    %61 = vector.broadcast %cst_43 : f32 to vector<256x128xf32>
    %62 = arith.maximumf %60, %61 : vector<256x128xf32>
    %63 = vector.shape_cast %62 : vector<256x128xf32> to vector<16x16x128xf32>
    %cst_44 = arith.constant 0.000000e+00 : f32
    %64 = vector.broadcast %cst_44 : f32 to vector<16x1x128xf32>
    %65 = tpu.concatenate %64, %63, %64 in 1 : vector<16x1x128xf32>, vector<16x16x128xf32>, vector<16x1x128xf32> -> vector<16x18x128xf32>
    %c1_i32_45 = arith.constant 1 : i32
    %66 = arith.addi %c1_i32_45, %12 : i32
    %c0_46 = arith.constant 0 : index
    %67 = arith.index_cast %66 : i32 to index
    %c0_47 = arith.constant 0 : index
    %c0_48 = arith.constant 0 : index
    %68 = vector.load %arg5[%c0_46, %67, %c0_47, %c0_48] : memref<1x18x18x128xf32, #tpu.memory_space<vmem>>, vector<1x16x18x128xf32>
    %69 = vector.shape_cast %68 : vector<1x16x18x128xf32> to vector<16x18x128xf32>
    %70 = vector.shape_cast %65 : vector<16x18x128xf32> to vector<1x16x18x128xf32>
    tpu.vector_store %arg5[%c0_46, %67, %c0_47, %c0_48], %70 {strides = array<i32>} : memref<1x18x18x128xf32, #tpu.memory_space<vmem>>, vector<1x16x18x128xf32>,
    %c1_i32_49 = arith.constant 1 : i32
    return
  }
  func.func @transform_0(%arg0: i32, %arg1: i32) -> (i32, i32, i32, i32) {
    %c0_i32 = arith.constant 0 : i32
    %c0_i32_0 = arith.constant 0 : i32
    %c0_i32_1 = arith.constant 0 : i32
    %c0_i32_2 = arith.constant 0 : i32
    return %arg1, %c0_i32, %c0_i32_0, %c0_i32_1 : i32, i32, i32, i32
  }
  func.func @transform_1(%arg0: i32, %arg1: i32) -> (i32, i32) {
    %c0_i32 = arith.constant 0 : i32
    %c0_i32_0 = arith.constant 0 : i32
    return %c0_i32, %arg0 : i32, i32
  }
  func.func @transform_2(%arg0: i32, %arg1: i32) -> (i32, i32) {
    %c0_i32 = arith.constant 0 : i32
    %c0_i32_0 = arith.constant 0 : i32
    return %c0_i32, %arg0 : i32, i32
  }
  func.func @transform_3(%arg0: i32, %arg1: i32) -> (i32, i32, i32, i32) {
    %c0_i32 = arith.constant 0 : i32
    %c0_i32_0 = arith.constant 0 : i32
    %c0_i32_1 = arith.constant 0 : i32
    return %arg1, %c0_i32, %c0_i32_0, %arg0 : i32, i32, i32, i32
  }
}

</mosaic_0001>

<llo_original>
// kernel: resblock_forward.2
$region0: #{resblock_forward.2}
  #allocation0 [shape = 'u32[]', space=smem, size = 0x4, offset = 0x4, fixed_abs, tag = 'smem constant byte address 0x4 - core index']
  #allocation1 [shape = 'u32[144,128]{1,0:T(1,128)}', space=vmem, size = 0x12000, scoped, tag = 'internal scratch']
  %s0 = inlined_call_operand.vmem [shape: f32[2,18,18,4], index: 0, kind: input, shape index: {}]
  %s1 = inlined_call_operand.vmem [shape: f32[36,128], index: 1, kind: input, shape index: {}]
  %s2 = inlined_call_operand.vmem [shape: f32[1,128], index: 2, kind: input, shape index: {}]
  %s3 = inlined_call_operand.vmem [shape: f32[2,18,18,128], index: 3, kind: output, shape index: {}]
  %s4 = sld [smem:[#allocation0]]
  $region45: #{resblock_forward.2} parent=0
    _
  %s6 = ssub.s32 1, %s4
  %s7 = scalar_select 0, %s6, %s4
  loop: start=0, step=1, limit=4
  $region2: #{resblock_forward.2} parent=0 // loop_pre_header
    _
  $region3: #{resblock_forward.2} parent=0 // loop_header
    %s9 = sphi 0, %s13
    %p10 = scmp.ge.s32.totalorder %s9, 4
    %s16 = sphi 0, %s28
    %s17 = sphi 0, %s24
    %s18 = sphi 0, %s16
    %s19 = sphi 0, %s17
    %s20 = sphi 0, %s18
    %s21 = sphi 0, %s19
    %s31 = sphi 0, %s33
    %s34 = sphi 0, %s31
    %s35 = sphi 0, %s34
    %s51 = sphi 0, %s35
    %s57 = sphi 0, %s59
    %s60 = sphi 0, %s57
    %s61 = sphi 0, %s60
    %s77 = sphi 0, %s61
    %s83 = sphi 0, %s85
    %s86 = sphi 0, %s83
    %s87 = sphi 0, %s86
    %s103 = sphi 0, %s87
    %s111 = sphi 0, %s113
    %s114 = sphi 0, %s111
    %s115 = sphi 0, %s114
    %s131 = sphi 0, %s115
  $region4: #{resblock_forward.2} parent=0 // loop_header_branch
    %12 = sbr.rel (%p10) target = $region8
  $region5: #{resblock_forward.2} parent=0 // loop_body
    %s14 = ssub.s32 %s9, 1
    %s15 = ssub.s32 %s9, 2
    %s22 = sadd.s32 1, %s17
    %p23 = scmp.ge.s32.totalorder %s22, 2
    %s24 = scalar_select %p23, 0, %s22
    %s25 = sadd.s32 1, %s16
    %s26 = scalar_select %p23, %s25, %s16
    %p27 = scmp.ge.s32.totalorder %s26, 1
    %s28 = scalar_select %p27, 0, %s26
    %s29 = ssub.s32 %s17, %s24
    %p30 = scmp.eq.s32.totalorder %s29, 0
    %s32 = sadd.s32 %s31, 1
    %s33 = scalar_select %p30, %s31, %s32
    %p36 = pneg %p30
    %p37 = scmp.eq.s32.totalorder %s9, 1
    %p38 = por %p36, %p37
    %p39 = scmp.ne.s32.totalorder %s31, %s34
    %p40 = scmp.eq.s32.totalorder %s9, 0
    %p41 = por %p39, %p40
    %p42 = scmp.ne.s32.totalorder %s31, %s34
    %p43 = scmp.eq.s32.totalorder %s14, 1
    %p44 = por %p42, %p43
    %p45 = scmp.ne.s32.totalorder %s34, %s35
    %p46 = scmp.eq.s32.totalorder %s14, 0
    %p47 = por %p45, %p46
    %p48 = scmp.ne.s32.totalorder %s34, %s35
    %p49 = scmp.eq.s32.totalorder %s15, 1
    %p50 = por %p48, %p49
    %p52 = scmp.ne.s32.totalorder %s35, %s51
    %p53 = scmp.eq.s32.totalorder %s15, 0
    %p54 = por %p52, %p53
    %s55 = ssub.s32 %s16, %s28
    %p56 = scmp.eq.s32.totalorder %s55, 0
    %s58 = sadd.s32 %s57, 1
    %s59 = scalar_select %p56, %s57, %s58
    %p62 = pneg %p56
    %p63 = scmp.eq.s32.totalorder %s9, 1
    %p64 = por %p62, %p63
    %p65 = scmp.ne.s32.totalorder %s57, %s60
    %p66 = scmp.eq.s32.totalorder %s9, 0
    %p67 = por %p65, %p66
    %p68 = scmp.ne.s32.totalorder %s57, %s60
    %p69 = scmp.eq.s32.totalorder %s14, 1
    %p70 = por %p68, %p69
    %p71 = scmp.ne.s32.totalorder %s60, %s61
    %p72 = scmp.eq.s32.totalorder %s14, 0
    %p73 = por %p71, %p72
    %p74 = scmp.ne.s32.totalorder %s60, %s61
    %p75 = scmp.eq.s32.totalorder %s15, 1
    %p76 = por %p74, %p75
    %p78 = scmp.ne.s32.totalorder %s61, %s77
    %p79 = scmp.eq.s32.totalorder %s15, 0
    %p80 = por %p78, %p79
    %s81 = ssub.s32 %s16, %s28
    %p82 = scmp.eq.s32.totalorder %s81, 0
    %s84 = sadd.s32 %s83, 1
    %s85 = scalar_select %p82, %s83, %s84
    %p88 = pneg %p82
    %p89 = scmp.eq.s32.totalorder %s9, 1
    %p90 = por %p88, %p89
    %p91 = scmp.ne.s32.totalorder %s83, %s86
    %p92 = scmp.eq.s32.totalorder %s9, 0
    %p93 = por %p91, %p92
    %p94 = scmp.ne.s32.totalorder %s83, %s86
    %p95 = scmp.eq.s32.totalorder %s14, 1
    %p96 = por %p94, %p95
    %p97 = scmp.ne.s32.totalorder %s86, %s87
    %p98 = scmp.eq.s32.totalorder %s14, 0
    %p99 = por %p97, %p98
    %p100 = scmp.ne.s32.totalorder %s86, %s87
    %p101 = scmp.eq.s32.totalorder %s15, 1
    %p102 = por %p100, %p101
    %p104 = scmp.ne.s32.totalorder %s87, %s103
    %p105 = scmp.eq.s32.totalorder %s15, 0
    %p106 = por %p104, %p105
    %s107 = ssub.s32 %s17, %s24
    %s108 = ssub.s32 %s16, %s28
    %s109 = sor.u32 %s107, %s108
    %p110 = scmp.eq.s32.totalorder %s109, 0
    %s112 = sadd.s32 %s111, 1
    %s113 = scalar_select %p110, %s111, %s112
    %p116 = pneg %p110
    %p117 = scmp.eq.s32.totalorder %s9, 1
    %p118 = por %p116, %p117
    %p119 = scmp.ne.s32.totalorder %s111, %s114
    %p120 = scmp.eq.s32.totalorder %s9, 0
    %p121 = por %p119, %p120
    %p122 = scmp.ne.s32.totalorder %s111, %s114
    %p123 = scmp.eq.s32.totalorder %s14, 1
    %p124 = por %p122, %p123
    %p125 = scmp.ne.s32.totalorder %s114, %s115
    %p126 = scmp.eq.s32.totalorder %s14, 0
    %p127 = por %p125, %p126
    %p128 = scmp.ne.s32.totalorder %s114, %s115
    %p129 = scmp.eq.s32.totalorder %s15, 1
    %p130 = por %p128, %p129
    %p132 = scmp.ne.s32.totalorder %s115, %s131
    %p133 = scmp.eq.s32.totalorder %s15, 0
    %p134 = por %p132, %p133
    %p135 = scmp.le.s32.totalorder 1, %s9
    %p136 = scmp.lt.s32.totalorder %s9, 3
    %p137 = pnand %p135, %p136
    %p138 = pneg %p137
    // Predicated region
    $region9: #{resblock_forward.2} parent=5 // pred_check
      _
    $region10: #{resblock_forward.2} parent=5 // pred_check_branch
      %140 = sbr.rel (%p137) target = $region12
    $region11: #{resblock_forward.2} parent=5 // pred_region
      %s141 = ssub.s32 %s9, 1
      // Predicated region
      $region13: #{resblock_forward.2} parent=11 // pred_check
        %p142 = pneg %p73
      $region14: #{resblock_forward.2} parent=11 // pred_check_branch
        %144 = sbr.rel (%p142) target = $region16
      $region15: #{resblock_forward.2} parent=11 // pred_region
        %p145 = scmp.lt.s32.totalorder %s18, 0
        %s146 = scalar_select %p145, %s18, 0
        %s147 = smul.addr %s146, 8
        %s148 = scalar_lea.vmem %s1, %s147
      $region16: #{resblock_forward.2} parent=11 // pred_fallthru
        _
      // Predicated region
      $region17: #{resblock_forward.2} parent=11 // pred_check
        %p149 = pneg %p99
      $region18: #{resblock_forward.2} parent=11 // pred_check_branch
        %151 = sbr.rel (%p149) target = $region20
      $region19: #{resblock_forward.2} parent=11 // pred_region
        %p152 = scmp.lt.s32.totalorder %s18, 0
        %s153 = scalar_select %p152, %s18, 0
        %s154 = scalar_lea.vmem %s2, %s153
      $region20: #{resblock_forward.2} parent=11 // pred_fallthru
        _
    $region12: #{resblock_forward.2} parent=5 // pred_fallthru
      _
    %p155 = scmp.lt.s32.totalorder %s9, 2
    // Predicated region
    $region21: #{resblock_forward.2} parent=5 // pred_check
      %p156 = pneg %p155
    $region22: #{resblock_forward.2} parent=5 // pred_check_branch
      %158 = sbr.rel (%p156) target = $region24
    $region23: #{resblock_forward.2} parent=5 // pred_region
      // Predicated region
      $region25: #{resblock_forward.2} parent=23 // pred_check
        %p159 = pneg %p41
      $region26: #{resblock_forward.2} parent=23 // pred_check_branch
        %161 = sbr.rel (%p159) target = $region28
      $region27: #{resblock_forward.2} parent=23 // pred_region
        %p162 = scmp.lt.s32.totalorder %s17, 1
        %s163 = scalar_select %p162, %s17, 1
        %s164 = smul.addr %s163, 54
        %s165 = smul.addr %s164, 8
        %s166 = scalar_lea.vmem %s0, %s165
      $region28: #{resblock_forward.2} parent=23 // pred_fallthru
        _
    $region24: #{resblock_forward.2} parent=5 // pred_fallthru
      _
    %p167 = scmp.le.s32.totalorder 1, %s9
    %p168 = scmp.lt.s32.totalorder %s9, 3
    %p169 = pnand %p167, %p168
    %p170 = pneg %p169
    // Predicated region
    $region29: #{resblock_forward.2} parent=5 // pred_check
      _
    $region30: #{resblock_forward.2} parent=5 // pred_check_branch
      %172 = sbr.rel (%p169) target = $region32
    $region31: #{resblock_forward.2} parent=5 // pred_region
      %s173 = ssub.s32 %s9, 1
      %p174 = scmp.lt.s32.totalorder %s19, 1
      %s175 = scalar_select %p174, %s19, 1
      %s176 = smul.addr %s175, 54
      %s177 = smul.addr %s176, 8
      %s178 = scalar_lea.vmem %s0, %s177
      %p179 = pneg %p47
      %p180 = pneg %p44
      %p181 = scmp.lt.s32.totalorder %s18, 0
      %s182 = scalar_select %p181, %s18, 0
      %s183 = smul.addr %s182, 8
      %s184 = scalar_lea.vmem %s1, %s183
      %p185 = pneg %p73
      %p186 = pneg %p70
      %p187 = scmp.lt.s32.totalorder %s18, 0
      %s188 = scalar_select %p187, %s18, 0
      %s189 = scalar_lea.vmem %s2, %s188
      %p190 = pneg %p99
      %p191 = pneg %p96
      %p192 = pneg %p127
      %p193 = pneg %p124
      %p194 = scmp.lt.s32.totalorder %s19, 1
      %s195 = scalar_select %p194, %s19, 1
      %p196 = scmp.lt.s32.totalorder %s18, 0
      %s197 = scalar_select %p196, %s18, 0
      %s198 = smul.addr %s195, 54
      %s199 = sadd.s32 %s197, %s198
      %s200 = smul.addr %s199, 8
      %s201 = scalar_lea.vmem %s3, %s200
      %p202 = scmp.lt.s32.totalorder %s19, 1
      %s203 = scalar_select %p202, %s19, 1
      %s204 = smul.addr %s203, 54
      %s205 = smul.addr %s204, 8
      %s206 = scalar_lea.vmem %s0, %s205
      %p207 = scmp.lt.s32.totalorder %s18, 0
      %s208 = scalar_select %p207, %s18, 0
      %s209 = smul.addr %s208, 8
      %s210 = scalar_lea.vmem %s1, %s209
      %p211 = scmp.lt.s32.totalorder %s18, 0
      %s212 = scalar_select %p211, %s18, 0
      %s213 = scalar_lea.vmem %s2, %s212
      %p214 = scmp.lt.s32.totalorder %s19, 1
      %s215 = scalar_select %p214, %s19, 1
      %p216 = scmp.lt.s32.totalorder %s18, 0
      %s217 = scalar_select %p216, %s18, 0
      %s218 = smul.addr %s215, 54
      %s219 = sadd.s32 %s217, %s218
      %s220 = smul.addr %s219, 8
      %s221 = scalar_lea.vmem %s3, %s220
      %222 = vst [vmem:[%s221] sm:$0xff] 0.0
      %223 = vst [vmem:[%s221 + $0x8] sm:$0xff] 0.0
      %224 = vst [vmem:[%s221 + $0x10] sm:$0x3] 0.0
      %s225 = scalar_lea.vmem %s221, 408
      %226 = vst [vmem:[%s225] sm:$0xff] 0.0
      %227 = vst [vmem:[%s225 + $0x8] sm:$0xff] 0.0
      %228 = vst [vmem:[%s225 + $0x10] sm:$0x3] 0.0
      %v229 = vld [vmem:[%s213] sm:$0x1]
      %v231 = vlaneseq
      %v232 = vshrl.u32 %v231, 7
      %v233 = vsub.s32 0, %v232
      %v234 = vrot.slane %v229, %v233
      %v236 = vld [vmem:[%s210] sm:$0xff]
      %v237 = vld [vmem:[%s210 + $0x8] sm:$0xff]
      %v238 = vld [vmem:[%s210 + $0x10] sm:$0xff]
      %v239 = vld [vmem:[%s210 + $0x18] sm:$0xff]
      %v240 = vld [vmem:[%s210 + $0x20] sm:$0xf]
      %s241 = smul.u32 0, 24
      %s242 = scalar_lea.vmem %s206, %s241
      %v243 = vld [vmem:[%s242] sm:$0xff]
      %v244 = vld [vmem:[%s242 + $0x8] sm:$0xff]
      %v245 = vld [vmem:[%s242 + $0x18] sm:$0xff]
      %v246 = vld [vmem:[%s242 + $0x20] sm:$0xff]
      %v247 = vld [vmem:[%s242 + $0x30] sm:$0xff]
      %v248 = vld [vmem:[%s242 + $0x38] sm:$0xff]
      %v249 = vld [vmem:[%s242 + $0x48] sm:$0xff]
      %v250 = vld [vmem:[%s242 + $0x50] sm:$0xff]
      %v251 = vld [vmem:[%s242 + $0x60] sm:$0xff]
      %v252 = vld [vmem:[%s242 + $0x68] sm:$0xff]
      %v253 = vld [vmem:[%s242 + $0x78] sm:$0xff]
      %v254 = vld [vmem:[%s242 + $0x80] sm:$0xff]
      %v255 = vld [vmem:[%s242 + $0x90] sm:$0xff]
      %v256 = vld [vmem:[%s242 + $0x98] sm:$0xff]
      %v257 = vld [vmem:[%s242 + $0xa8] sm:$0xff]
      %v258 = vld [vmem:[%s242 + $0xb0] sm:$0xff]
      %v259 = vld [vmem:[%s242 + $0xc0] sm:$0xff]
      %v260 = vld [vmem:[%s242 + $0xc8] sm:$0xff]
      %v261 = vld [vmem:[%s242 + $0xd8] sm:$0xff]
      %v262 = vld [vmem:[%s242 + $0xe0] sm:$0xff]
      %v263 = vld [vmem:[%s242 + $0xf0] sm:$0xff]
      %v264 = vld [vmem:[%s242 + $0xf8] sm:$0xff]
      %v265 = vld [vmem:[%s242 + $0x108] sm:$0xff]
      %v266 = vld [vmem:[%s242 + $0x110] sm:$0xff]
      %v267 = vld [vmem:[%s242 + $0x120] sm:$0xff]
      %v268 = vld [vmem:[%s242 + $0x128] sm:$0xff]
      %v269 = vld [vmem:[%s242 + $0x138] sm:$0xff]
      %v270 = vld [vmem:[%s242 + $0x140] sm:$0xff]
      %v271 = vld [vmem:[%s242 + $0x150] sm:$0xff]
      %v272 = vld [vmem:[%s242 + $0x158] sm:$0xff]
      %v273 = vld [vmem:[%s242 + $0x168] sm:$0xff]
      %v274 = vld [vmem:[%s242 + $0x170] sm:$0xff]
      %v275 = vld [vmem:[%s242 + $0x1] sm:$0xff]
      %v276 = vld [vmem:[%s242 + $0x9] sm:$0xff]
      %v277 = vld [vmem:[%s242 + $0x19] sm:$0xff]
      %v278 = vld [vmem:[%s242 + $0x21] sm:$0xff]
      %v279 = vld [vmem:[%s242 + $0x31] sm:$0xff]
      %v280 = vld [vmem:[%s242 + $0x39] sm:$0xff]
      %v281 = vld [vmem:[%s242 + $0x49] sm:$0xff]
      %v282 = vld [vmem:[%s242 + $0x51] sm:$0xff]
      %v283 = vld [vmem:[%s242 + $0x61] sm:$0xff]
      %v284 = vld [vmem:[%s242 + $0x69] sm:$0xff]
      %v285 = vld [vmem:[%s242 + $0x79] sm:$0xff]
      %v286 = vld [vmem:[%s242 + $0x81] sm:$0xff]
      %v287 = vld [vmem:[%s242 + $0x91] sm:$0xff]
      %v288 = vld [vmem:[%s242 + $0x99] sm:$0xff]
      %v289 = vld [vmem:[%s242 + $0xa9] sm:$0xff]
      %v290 = vld [vmem:[%s242 + $0xb1] sm:$0xff]
      %v291 = vld [vmem:[%s242 + $0xc1] sm:$0xff]
      %v292 = vld [vmem:[%s242 + $0xc9] sm:$0xff]
      %v293 = vld [vmem:[%s242 + $0xd9] sm:$0xff]
      %v294 = vld [vmem:[%s242 + $0xe1] sm:$0xff]
      %v295 = vld [vmem:[%s242 + $0xf1] sm:$0xff]
      %v296 = vld [vmem:[%s242 + $0xf9] sm:$0xff]
      %v297 = vld [vmem:[%s242 + $0x109] sm:$0xff]
      %v298 = vld [vmem:[%s242 + $0x111] sm:$0xff]
      %v299 = vld [vmem:[%s242 + $0x121] sm:$0xff]
      %v300 = vld [vmem:[%s242 + $0x129] sm:$0xff]
      %v301 = vld [vmem:[%s242 + $0x139] sm:$0xff]
      %v302 = vld [vmem:[%s242 + $0x141] sm:$0xff]
      %v303 = vld [vmem:[%s242 + $0x151] sm:$0xff]
      %v304 = vld [vmem:[%s242 + $0x159] sm:$0xff]
      %v305 = vld [vmem:[%s242 + $0x169] sm:$0xff]
      %v306 = vld [vmem:[%s242 + $0x171] sm:$0xff]
      %v307 = vld [vmem:[%s242 + $0x2] sm:$0xff]
      %v308 = vld [vmem:[%s242 + $0xa] sm:$0xff]
      %v309 = vld [vmem:[%s242 + $0x1a] sm:$0xff]
      %v310 = vld [vmem:[%s242 + $0x22] sm:$0xff]
      %v311 = vld [vmem:[%s242 + $0x32] sm:$0xff]
      %v312 = vld [vmem:[%s242 + $0x3a] sm:$0xff]
      %v313 = vld [vmem:[%s242 + $0x4a] sm:$0xff]
      %v314 = vld [vmem:[%s242 + $0x52] sm:$0xff]
      %v315 = vld [vmem:[%s242 + $0x62] sm:$0xff]
      %v316 = vld [vmem:[%s242 + $0x6a] sm:$0xff]
      %v317 = vld [vmem:[%s242 + $0x7a] sm:$0xff]
      %v318 = vld [vmem:[%s242 + $0x82] sm:$0xff]
      %v319 = vld [vmem:[%s242 + $0x92] sm:$0xff]
      %v320 = vld [vmem:[%s242 + $0x9a] sm:$0xff]
      %v321 = vld [vmem:[%s242 + $0xaa] sm:$0xff]
      %v322 = vld [vmem:[%s242 + $0xb2] sm:$0xff]
      %v323 = vld [vmem:[%s242 + $0xc2] sm:$0xff]
      %v324 = vld [vmem:[%s242 + $0xca] sm:$0xff]
      %v325 = vld [vmem:[%s242 + $0xda] sm:$0xff]
      %v326 = vld [vmem:[%s242 + $0xe2] sm:$0xff]
      %v327 = vld [vmem:[%s242 + $0xf2] sm:$0xff]
      %v328 = vld [vmem:[%s242 + $0xfa] sm:$0xff]
      %v329 = vld [vmem:[%s242 + $0x10a] sm:$0xff]
      %v330 = vld [vmem:[%s242 + $0x112] sm:$0xff]
      %v331 = vld [vmem:[%s242 + $0x122] sm:$0xff]
      %v332 = vld [vmem:[%s242 + $0x12a] sm:$0xff]
      %v333 = vld [vmem:[%s242 + $0x13a] sm:$0xff]
      %v334 = vld [vmem:[%s242 + $0x142] sm:$0xff]
      %v335 = vld [vmem:[%s242 + $0x152] sm:$0xff]
      %v336 = vld [vmem:[%s242 + $0x15a] sm:$0xff]
      %v337 = vld [vmem:[%s242 + $0x16a] sm:$0xff]
      %v338 = vld [vmem:[%s242 + $0x172] sm:$0xff]
      %s339 = sadd.s32 0, 1
      %s340 = smul.u32 %s339, 24
      %s341 = scalar_lea.vmem %s206, %s340
      %v342 = vld [vmem:[%s341] sm:$0xff]
      %v343 = vld [vmem:[%s341 + $0x8] sm:$0xff]
      %v344 = vld [vmem:[%s341 + $0x18] sm:$0xff]
      %v345 = vld [vmem:[%s341 + $0x20] sm:$0xff]
      %v346 = vld [vmem:[%s341 + $0x30] sm:$0xff]
      %v347 = vld [vmem:[%s341 + $0x38] sm:$0xff]
      %v348 = vld [vmem:[%s341 + $0x48] sm:$0xff]
      %v349 = vld [vmem:[%s341 + $0x50] sm:$0xff]
      %v350 = vld [vmem:[%s341 + $0x60] sm:$0xff]
      %v351 = vld [vmem:[%s341 + $0x68] sm:$0xff]
      %v352 = vld [vmem:[%s341 + $0x78] sm:$0xff]
      %v353 = vld [vmem:[%s341 + $0x80] sm:$0xff]
      %v354 = vld [vmem:[%s341 + $0x90] sm:$0xff]
      %v355 = vld [vmem:[%s341 + $0x98] sm:$0xff]
      %v356 = vld [vmem:[%s341 + $0xa8] sm:$0xff]
      %v357 = vld [vmem:[%s341 + $0xb0] sm:$0xff]
      %v358 = vld [vmem:[%s341 + $0xc0] sm:$0xff]
      %v359 = vld [vmem:[%s341 + $0xc8] sm:$0xff]
      %v360 = vld [vmem:[%s341 + $0xd8] sm:$0xff]
      %v361 = vld [vmem:[%s341 + $0xe0] sm:$0xff]
      %v362 = vld [vmem:[%s341 + $0xf0] sm:$0xff]
      %v363 = vld [vmem:[%s341 + $0xf8] sm:$0xff]
      %v364 = vld [vmem:[%s341 + $0x108] sm:$0xff]
      %v365 = vld [vmem:[%s341 + $0x110] sm:$0xff]
      %v366 = vld [vmem:[%s341 + $0x120] sm:$0xff]
      %v367 = vld [vmem:[%s341 + $0x128] sm:$0xff]
      %v368 = vld [vmem:[%s341 + $0x138] sm:$0xff]
      %v369 = vld [vmem:[%s341 + $0x140] sm:$0xff]
      %v370 = vld [vmem:[%s341 + $0x150] sm:$0xff]
      %v371 = vld [vmem:[%s341 + $0x158] sm:$0xff]
      %v372 = vld [vmem:[%s341 + $0x168] sm:$0xff]
      %v373 = vld [vmem:[%s341 + $0x170] sm:$0xff]
      %v374 = vld [vmem:[%s341 + $0x1] sm:$0xff]
      %v375 = vld [vmem:[%s341 + $0x9] sm:$0xff]
      %v376 = vld [vmem:[%s341 + $0x19] sm:$0xff]
      %v377 = vld [vmem:[%s341 + $0x21] sm:$0xff]
      %v378 = vld [vmem:[%s341 + $0x31] sm:$0xff]
      %v379 = vld [vmem:[%s341 + $0x39] sm:$0xff]
      %v380 = vld [vmem:[%s341 + $0x49] sm:$0xff]
      %v381 = vld [vmem:[%s341 + $0x51] sm:$0xff]
      %v382 = vld [vmem:[%s341 + $0x61] sm:$0xff]
      %v383 = vld [vmem:[%s341 + $0x69] sm:$0xff]
      %v384 = vld [vmem:[%s341 + $0x79] sm:$0xff]
      %v385 = vld [vmem:[%s341 + $0x81] sm:$0xff]
      %v386 = vld [vmem:[%s341 + $0x91] sm:$0xff]
      %v387 = vld [vmem:[%s341 + $0x99] sm:$0xff]
      %v388 = vld [vmem:[%s341 + $0xa9] sm:$0xff]
      %v389 = vld [vmem:[%s341 + $0xb1] sm:$0xff]
      %v390 = vld [vmem:[%s341 + $0xc1] sm:$0xff]
      %v391 = vld [vmem:[%s341 + $0xc9] sm:$0xff]
      %v392 = vld [vmem:[%s341 + $0xd9] sm:$0xff]
      %v393 = vld [vmem:[%s341 + $0xe1] sm:$0xff]
      %v394 = vld [vmem:[%s341 + $0xf1] sm:$0xff]
      %v395 = vld [vmem:[%s341 + $0xf9] sm:$0xff]
      %v396 = vld [vmem:[%s341 + $0x109] sm:$0xff]
      %v397 = vld [vmem:[%s341 + $0x111] sm:$0xff]
      %v398 = vld [vmem:[%s341 + $0x121] sm:$0xff]
      %v399 = vld [vmem:[%s341 + $0x129] sm:$0xff]
      %v400 = vld [vmem:[%s341 + $0x139] sm:$0xff]
      %v401 = vld [vmem:[%s341 + $0x141] sm:$0xff]
      %v402 = vld [vmem:[%s341 + $0x151] sm:$0xff]
      %v403 = vld [vmem:[%s341 + $0x159] sm:$0xff]
      %v404 = vld [vmem:[%s341 + $0x169] sm:$0xff]
      %v405 = vld [vmem:[%s341 + $0x171] sm:$0xff]
      %v406 = vld [vmem:[%s341 + $0x2] sm:$0xff]
      %v407 = vld [vmem:[%s341 + $0xa] sm:$0xff]
      %v408 = vld [vmem:[%s341 + $0x1a] sm:$0xff]
      %v409 = vld [vmem:[%s341 + $0x22] sm:$0xff]
      %v410 = vld [vmem:[%s341 + $0x32] sm:$0xff]
      %v411 = vld [vmem:[%s341 + $0x3a] sm:$0xff]
      %v412 = vld [vmem:[%s341 + $0x4a] sm:$0xff]
      %v413 = vld [vmem:[%s341 + $0x52] sm:$0xff]
      %v414 = vld [vmem:[%s341 + $0x62] sm:$0xff]
      %v415 = vld [vmem:[%s341 + $0x6a] sm:$0xff]
      %v416 = vld [vmem:[%s341 + $0x7a] sm:$0xff]
      %v417 = vld [vmem:[%s341 + $0x82] sm:$0xff]
      %v418 = vld [vmem:[%s341 + $0x92] sm:$0xff]
      %v419 = vld [vmem:[%s341 + $0x9a] sm:$0xff]
      %v420 = vld [vmem:[%s341 + $0xaa] sm:$0xff]
      %v421 = vld [vmem:[%s341 + $0xb2] sm:$0xff]
      %v422 = vld [vmem:[%s341 + $0xc2] sm:$0xff]
      %v423 = vld [vmem:[%s341 + $0xca] sm:$0xff]
      %v424 = vld [vmem:[%s341 + $0xda] sm:$0xff]
      %v425 = vld [vmem:[%s341 + $0xe2] sm:$0xff]
      %v426 = vld [vmem:[%s341 + $0xf2] sm:$0xff]
      %v427 = vld [vmem:[%s341 + $0xfa] sm:$0xff]
      %v428 = vld [vmem:[%s341 + $0x10a] sm:$0xff]
      %v429 = vld [vmem:[%s341 + $0x112] sm:$0xff]
      %v430 = vld [vmem:[%s341 + $0x122] sm:$0xff]
      %v431 = vld [vmem:[%s341 + $0x12a] sm:$0xff]
      %v432 = vld [vmem:[%s341 + $0x13a] sm:$0xff]
      %v433 = vld [vmem:[%s341 + $0x142] sm:$0xff]
      %v434 = vld [vmem:[%s341 + $0x152] sm:$0xff]
      %v435 = vld [vmem:[%s341 + $0x15a] sm:$0xff]
      %v436 = vld [vmem:[%s341 + $0x16a] sm:$0xff]
      %v437 = vld [vmem:[%s341 + $0x172] sm:$0xff]
      %s438 = sadd.s32 0, 2
      %s439 = smul.u32 %s438, 24
      %s440 = scalar_lea.vmem %s206, %s439
      %v441 = vld [vmem:[%s440] sm:$0xff]
      %v442 = vld [vmem:[%s440 + $0x8] sm:$0xff]
      %v443 = vld [vmem:[%s440 + $0x18] sm:$0xff]
      %v444 = vld [vmem:[%s440 + $0x20] sm:$0xff]
      %v445 = vld [vmem:[%s440 + $0x30] sm:$0xff]
      %v446 = vld [vmem:[%s440 + $0x38] sm:$0xff]
      %v447 = vld [vmem:[%s440 + $0x48] sm:$0xff]
      %v448 = vld [vmem:[%s440 + $0x50] sm:$0xff]
      %v449 = vld [vmem:[%s440 + $0x60] sm:$0xff]
      %v450 = vld [vmem:[%s440 + $0x68] sm:$0xff]
      %v451 = vld [vmem:[%s440 + $0x78] sm:$0xff]
      %v452 = vld [vmem:[%s440 + $0x80] sm:$0xff]
      %v453 = vld [vmem:[%s440 + $0x90] sm:$0xff]
      %v454 = vld [vmem:[%s440 + $0x98] sm:$0xff]
      %v455 = vld [vmem:[%s440 + $0xa8] sm:$0xff]
      %v456 = vld [vmem:[%s440 + $0xb0] sm:$0xff]
      %v457 = vld [vmem:[%s440 + $0xc0] sm:$0xff]
      %v458 = vld [vmem:[%s440 + $0xc8] sm:$0xff]
      %v459 = vld [vmem:[%s440 + $0xd8] sm:$0xff]
      %v460 = vld [vmem:[%s440 + $0xe0] sm:$0xff]
      %v461 = vld [vmem:[%s440 + $0xf0] sm:$0xff]
      %v462 = vld [vmem:[%s440 + $0xf8] sm:$0xff]
      %v463 = vld [vmem:[%s440 + $0x108] sm:$0xff]
      %v464 = vld [vmem:[%s440 + $0x110] sm:$0xff]
      %v465 = vld [vmem:[%s440 + $0x120] sm:$0xff]
      %v466 = vld [vmem:[%s440 + $0x128] sm:$0xff]
      %v467 = vld [vmem:[%s440 + $0x138] sm:$0xff]
      %v468 = vld [vmem:[%s440 + $0x140] sm:$0xff]
      %v469 = vld [vmem:[%s440 + $0x150] sm:$0xff]
      %v470 = vld [vmem:[%s440 + $0x158] sm:$0xff]
      %v471 = vld [vmem:[%s440 + $0x168] sm:$0xff]
      %v472 = vld [vmem:[%s440 + $0x170] sm:$0xff]
      %v473 = vld [vmem:[%s440 + $0x1] sm:$0xff]
      %v474 = vld [vmem:[%s440 + $0x9] sm:$0xff]
      %v475 = vld [vmem:[%s440 + $0x19] sm:$0xff]
      %v476 = vld [vmem:[%s440 + $0x21] sm:$0xff]
      %v477 = vld [vmem:[%s440 + $0x31] sm:$0xff]
      %v478 = vld [vmem:[%s440 + $0x39] sm:$0xff]
      %v479 = vld [vmem:[%s440 + $0x49] sm:$0xff]
      %v480 = vld [vmem:[%s440 + $0x51] sm:$0xff]
      %v481 = vld [vmem:[%s440 + $0x61] sm:$0xff]
      %v482 = vld [vmem:[%s440 + $0x69] sm:$0xff]
      %v483 = vld [vmem:[%s440 + $0x79] sm:$0xff]
      %v484 = vld [vmem:[%s440 + $0x81] sm:$0xff]
      %v485 = vld [vmem:[%s440 + $0x91] sm:$0xff]
      %v486 = vld [vmem:[%s440 + $0x99] sm:$0xff]
      %v487 = vld [vmem:[%s440 + $0xa9] sm:$0xff]
      %v488 = vld [vmem:[%s440 + $0xb1] sm:$0xff]
      %v489 = vld [vmem:[%s440 + $0xc1] sm:$0xff]
      %v490 = vld [vmem:[%s440 + $0xc9] sm:$0xff]
      %v491 = vld [vmem:[%s440 + $0xd9] sm:$0xff]
      %v492 = vld [vmem:[%s440 + $0xe1] sm:$0xff]
      %v493 = vld [vmem:[%s440 + $0xf1] sm:$0xff]
      %v494 = vld [vmem:[%s440 + $0xf9] sm:$0xff]
      %v495 = vld [vmem:[%s440 + $0x109] sm:$0xff]
      %v496 = vld [vmem:[%s440 + $0x111] sm:$0xff]
      %v497 = vld [vmem:[%s440 + $0x121] sm:$0xff]
      %v498 = vld [vmem:[%s440 + $0x129] sm:$0xff]
      %v499 = vld [vmem:[%s440 + $0x139] sm:$0xff]
      %v500 = vld [vmem:[%s440 + $0x141] sm:$0xff]
      %v501 = vld [vmem:[%s440 + $0x151] sm:$0xff]
      %v502 = vld [vmem:[%s440 + $0x159] sm:$0xff]
      %v503 = vld [vmem:[%s440 + $0x169] sm:$0xff]
      %v504 = vld [vmem:[%s440 + $0x171] sm:$0xff]
      %v505 = vld [vmem:[%s440 + $0x2] sm:$0xff]
      %v506 = vld [vmem:[%s440 + $0xa] sm:$0xff]
      %v507 = vld [vmem:[%s440 + $0x1a] sm:$0xff]
      %v508 = vld [vmem:[%s440 + $0x22] sm:$0xff]
      %v509 = vld [vmem:[%s440 + $0x32] sm:$0xff]
      %v510 = vld [vmem:[%s440 + $0x3a] sm:$0xff]
      %v511 = vld [vmem:[%s440 + $0x4a] sm:$0xff]
      %v512 = vld [vmem:[%s440 + $0x52] sm:$0xff]
      %v513 = vld [vmem:[%s440 + $0x62] sm:$0xff]
      %v514 = vld [vmem:[%s440 + $0x6a] sm:$0xff]
      %v515 = vld [vmem:[%s440 + $0x7a] sm:$0xff]
      %v516 = vld [vmem:[%s440 + $0x82] sm:$0xff]
      %v517 = vld [vmem:[%s440 + $0x92] sm:$0xff]
      %v518 = vld [vmem:[%s440 + $0x9a] sm:$0xff]
      %v519 = vld [vmem:[%s440 + $0xaa] sm:$0xff]
      %v520 = vld [vmem:[%s440 + $0xb2] sm:$0xff]
      %v521 = vld [vmem:[%s440 + $0xc2] sm:$0xff]
      %v522 = vld [vmem:[%s440 + $0xca] sm:$0xff]
      %v523 = vld [vmem:[%s440 + $0xda] sm:$0xff]
      %v524 = vld [vmem:[%s440 + $0xe2] sm:$0xff]
      %v525 = vld [vmem:[%s440 + $0xf2] sm:$0xff]
      %v526 = vld [vmem:[%s440 + $0xfa] sm:$0xff]
      %v527 = vld [vmem:[%s440 + $0x10a] sm:$0xff]
      %v528 = vld [vmem:[%s440 + $0x112] sm:$0xff]
      %v529 = vld [vmem:[%s440 + $0x122] sm:$0xff]
      %v530 = vld [vmem:[%s440 + $0x12a] sm:$0xff]
      %v531 = vld [vmem:[%s440 + $0x13a] sm:$0xff]
      %v532 = vld [vmem:[%s440 + $0x142] sm:$0xff]
      %v533 = vld [vmem:[%s440 + $0x152] sm:$0xff]
      %v534 = vld [vmem:[%s440 + $0x15a] sm:$0xff]
      %v535 = vld [vmem:[%s440 + $0x16a] sm:$0xff]
      %v536 = vld [vmem:[%s440 + $0x172] sm:$0xff]
      %569 = vrot.lane.b32.xlu0 %v275, 4
      %v570 = vpop.permute.xlu0 %569
      %571 = vrot.lane.b32.xlu0 %v276, 4
      %v572 = vpop.permute.xlu0 %571
      %573 = vrot.lane.b32.xlu0 %v277, 4
      %v574 = vpop.permute.xlu0 %573
      %575 = vrot.lane.b32.xlu0 %v278, 4
      %v576 = vpop.permute.xlu0 %575
      %577 = vrot.lane.b32.xlu0 %v279, 4
      %v578 = vpop.permute.xlu0 %577
      %579 = vrot.lane.b32.xlu0 %v280, 4
      %v580 = vpop.permute.xlu0 %579
      %581 = vrot.lane.b32.xlu0 %v281, 4
      %v582 = vpop.permute.xlu0 %581
      %583 = vrot.lane.b32.xlu0 %v282, 4
      %v584 = vpop.permute.xlu0 %583
      %585 = vrot.lane.b32.xlu0 %v283, 4
      %v586 = vpop.permute.xlu0 %585
      %587 = vrot.lane.b32.xlu0 %v284, 4
      %v588 = vpop.permute.xlu0 %587
      %589 = vrot.lane.b32.xlu0 %v285, 4
      %v590 = vpop.permute.xlu0 %589
      %591 = vrot.lane.b32.xlu0 %v286, 4
      %v592 = vpop.permute.xlu0 %591
      %593 = vrot.lane.b32.xlu0 %v287, 4
      %v594 = vpop.permute.xlu0 %593
      %595 = vrot.lane.b32.xlu0 %v288, 4
      %v596 = vpop.permute.xlu0 %595
      %597 = vrot.lane.b32.xlu0 %v289, 4
      %v598 = vpop.permute.xlu0 %597
      %599 = vrot.lane.b32.xlu0 %v290, 4
      %v600 = vpop.permute.xlu0 %599
      %601 = vrot.lane.b32.xlu0 %v291, 4
      %v602 = vpop.permute.xlu0 %601
      %603 = vrot.lane.b32.xlu0 %v292, 4
      %v604 = vpop.permute.xlu0 %603
      %605 = vrot.lane.b32.xlu0 %v293, 4
      %v606 = vpop.permute.xlu0 %605
      %607 = vrot.lane.b32.xlu0 %v294, 4
      %v608 = vpop.permute.xlu0 %607
      %609 = vrot.lane.b32.xlu0 %v295, 4
      %v610 = vpop.permute.xlu0 %609
      %611 = vrot.lane.b32.xlu0 %v296, 4
      %v612 = vpop.permute.xlu0 %611
      %613 = vrot.lane.b32.xlu0 %v297, 4
      %v614 = vpop.permute.xlu0 %613
      %615 = vrot.lane.b32.xlu0 %v298, 4
      %v616 = vpop.permute.xlu0 %615
      %617 = vrot.lane.b32.xlu0 %v299, 4
      %v618 = vpop.permute.xlu0 %617
      %619 = vrot.lane.b32.xlu0 %v300, 4
      %v620 = vpop.permute.xlu0 %619
      %621 = vrot.lane.b32.xlu0 %v301, 4
      %v622 = vpop.permute.xlu0 %621
      %623 = vrot.lane.b32.xlu0 %v302, 4
      %v624 = vpop.permute.xlu0 %623
      %625 = vrot.lane.b32.xlu0 %v303, 4
      %v626 = vpop.permute.xlu0 %625
      %627 = vrot.lane.b32.xlu0 %v304, 4
      %v628 = vpop.permute.xlu0 %627
      %629 = vrot.lane.b32.xlu0 %v305, 4
      %v630 = vpop.permute.xlu0 %629
      %631 = vrot.lane.b32.xlu0 %v306, 4
      %v632 = vpop.permute.xlu0 %631
      %697 = vrot.lane.b32.xlu0 %v307, 8
      %v698 = vpop.permute.xlu0 %697
      %699 = vrot.lane.b32.xlu0 %v308, 8
      %v700 = vpop.permute.xlu0 %699
      %701 = vrot.lane.b32.xlu0 %v309, 8
      %v702 = vpop.permute.xlu0 %701
      %703 = vrot.lane.b32.xlu0 %v310, 8
      %v704 = vpop.permute.xlu0 %703
      %705 = vrot.lane.b32.xlu0 %v311, 8
      %v706 = vpop.permute.xlu0 %705
      %707 = vrot.lane.b32.xlu0 %v312, 8
      %v708 = vpop.permute.xlu0 %707
      %709 = vrot.lane.b32.xlu0 %v313, 8
      %v710 = vpop.permute.xlu0 %709
      %711 = vrot.lane.b32.xlu0 %v314, 8
      %v712 = vpop.permute.xlu0 %711
      %713 = vrot.lane.b32.xlu0 %v315, 8
      %v714 = vpop.permute.xlu0 %713
      %715 = vrot.lane.b32.xlu0 %v316, 8
      %v716 = vpop.permute.xlu0 %715
      %717 = vrot.lane.b32.xlu0 %v317, 8
      %v718 = vpop.permute.xlu0 %717
      %719 = vrot.lane.b32.xlu0 %v318, 8
      %v720 = vpop.permute.xlu0 %719
      %721 = vrot.lane.b32.xlu0 %v319, 8
      %v722 = vpop.permute.xlu0 %721
      %723 = vrot.lane.b32.xlu0 %v320, 8
      %v724 = vpop.permute.xlu0 %723
      %725 = vrot.lane.b32.xlu0 %v321, 8
      %v726 = vpop.permute.xlu0 %725
      %727 = vrot.lane.b32.xlu0 %v322, 8
      %v728 = vpop.permute.xlu0 %727
      %729 = vrot.lane.b32.xlu0 %v323, 8
      %v730 = vpop.permute.xlu0 %729
      %731 = vrot.lane.b32.xlu0 %v324, 8
      %v732 = vpop.permute.xlu0 %731
      %733 = vrot.lane.b32.xlu0 %v325, 8
      %v734 = vpop.permute.xlu0 %733
      %735 = vrot.lane.b32.xlu0 %v326, 8
      %v736 = vpop.permute.xlu0 %735
      %737 = vrot.lane.b32.xlu0 %v327, 8
      %v738 = vpop.permute.xlu0 %737
      %739 = vrot.lane.b32.xlu0 %v328, 8
      %v740 = vpop.permute.xlu0 %739
      %741 = vrot.lane.b32.xlu0 %v329, 8
      %v742 = vpop.permute.xlu0 %741
      %743 = vrot.lane.b32.xlu0 %v330, 8
      %v744 = vpop.permute.xlu0 %743
      %745 = vrot.lane.b32.xlu0 %v331, 8
      %v746 = vpop.permute.xlu0 %745
      %747 = vrot.lane.b32.xlu0 %v332, 8
      %v748 = vpop.permute.xlu0 %747
      %749 = vrot.lane.b32.xlu0 %v333, 8
      %v750 = vpop.permute.xlu0 %749
      %751 = vrot.lane.b32.xlu0 %v334, 8
      %v752 = vpop.permute.xlu0 %751
      %753 = vrot.lane.b32.xlu0 %v335, 8
      %v754 = vpop.permute.xlu0 %753
      %755 = vrot.lane.b32.xlu0 %v336, 8
      %v756 = vpop.permute.xlu0 %755
      %757 = vrot.lane.b32.xlu0 %v337, 8
      %v758 = vpop.permute.xlu0 %757
      %759 = vrot.lane.b32.xlu0 %v338, 8
      %v760 = vpop.permute.xlu0 %759
      %825 = vrot.lane.b32.xlu0 %v342, 12
      %v826 = vpop.permute.xlu0 %825
      %827 = vrot.lane.b32.xlu0 %v343, 12
      %v828 = vpop.permute.xlu0 %827
      %829 = vrot.lane.b32.xlu0 %v344, 12
      %v830 = vpop.permute.xlu0 %829
      %831 = vrot.lane.b32.xlu0 %v345, 12
      %v832 = vpop.permute.xlu0 %831
      %833 = vrot.lane.b32.xlu0 %v346, 12
      %v834 = vpop.permute.xlu0 %833
      %835 = vrot.lane.b32.xlu0 %v347, 12
      %v836 = vpop.permute.xlu0 %835
      %837 = vrot.lane.b32.xlu0 %v348, 12
      %v838 = vpop.permute.xlu0 %837
      %839 = vrot.lane.b32.xlu0 %v349, 12
      %v840 = vpop.permute.xlu0 %839
      %841 = vrot.lane.b32.xlu0 %v350, 12
      %v842 = vpop.permute.xlu0 %841
      %843 = vrot.lane.b32.xlu0 %v351, 12
      %v844 = vpop.permute.xlu0 %843
      %845 = vrot.lane.b32.xlu0 %v352, 12
      %v846 = vpop.permute.xlu0 %845
      %847 = vrot.lane.b32.xlu0 %v353, 12
      %v848 = vpop.permute.xlu0 %847
      %849 = vrot.lane.b32.xlu0 %v354, 12
      %v850 = vpop.permute.xlu0 %849
      %851 = vrot.lane.b32.xlu0 %v355, 12
      %v852 = vpop.permute.xlu0 %851
      %853 = vrot.lane.b32.xlu0 %v356, 12
      %v854 = vpop.permute.xlu0 %853
      %855 = vrot.lane.b32.xlu0 %v357, 12
      %v856 = vpop.permute.xlu0 %855
      %857 = vrot.lane.b32.xlu0 %v358, 12
      %v858 = vpop.permute.xlu0 %857
      %859 = vrot.lane.b32.xlu0 %v359, 12
      %v860 = vpop.permute.xlu0 %859
      %861 = vrot.lane.b32.xlu0 %v360, 12
      %v862 = vpop.permute.xlu0 %861
      %863 = vrot.lane.b32.xlu0 %v361, 12
      %v864 = vpop.permute.xlu0 %863
      %865 = vrot.lane.b32.xlu0 %v362, 12
      %v866 = vpop.permute.xlu0 %865
      %867 = vrot.lane.b32.xlu0 %v363, 12
      %v868 = vpop.permute.xlu0 %867
      %869 = vrot.lane.b32.xlu0 %v364, 12
      %v870 = vpop.permute.xlu0 %869
      %871 = vrot.lane.b32.xlu0 %v365, 12
      %v872 = vpop.permute.xlu0 %871
      %873 = vrot.lane.b32.xlu0 %v366, 12
      %v874 = vpop.permute.xlu0 %873
      %875 = vrot.lane.b32.xlu0 %v367, 12
      %v876 = vpop.permute.xlu0 %875
      %877 = vrot.lane.b32.xlu0 %v368, 12
      %v878 = vpop.permute.xlu0 %877
      %879 = vrot.lane.b32.xlu0 %v369, 12
      %v880 = vpop.permute.xlu0 %879
      %881 = vrot.lane.b32.xlu0 %v370, 12
      %v882 = vpop.permute.xlu0 %881
      %883 = vrot.lane.b32.xlu0 %v371, 12
      %v884 = vpop.permute.xlu0 %883
      %885 = vrot.lane.b32.xlu0 %v372, 12
      %v886 = vpop.permute.xlu0 %885
      %887 = vrot.lane.b32.xlu0 %v373, 12
      %v888 = vpop.permute.xlu0 %887
      %953 = vrot.lane.b32.xlu0 %v374, 16
      %v954 = vpop.permute.xlu0 %953
      %955 = vrot.lane.b32.xlu0 %v375, 16
      %v956 = vpop.permute.xlu0 %955
      %957 = vrot.lane.b32.xlu0 %v376, 16
      %v958 = vpop.permute.xlu0 %957
      %959 = vrot.lane.b32.xlu0 %v377, 16
      %v960 = vpop.permute.xlu0 %959
      %961 = vrot.lane.b32.xlu0 %v378, 16
      %v962 = vpop.permute.xlu0 %961
      %963 = vrot.lane.b32.xlu0 %v379, 16
      %v964 = vpop.permute.xlu0 %963
      %965 = vrot.lane.b32.xlu0 %v380, 16
      %v966 = vpop.permute.xlu0 %965
      %967 = vrot.lane.b32.xlu0 %v381, 16
      %v968 = vpop.permute.xlu0 %967
      %969 = vrot.lane.b32.xlu0 %v382, 16
      %v970 = vpop.permute.xlu0 %969
      %971 = vrot.lane.b32.xlu0 %v383, 16
      %v972 = vpop.permute.xlu0 %971
      %973 = vrot.lane.b32.xlu0 %v384, 16
      %v974 = vpop.permute.xlu0 %973
      %975 = vrot.lane.b32.xlu0 %v385, 16
      %v976 = vpop.permute.xlu0 %975
      %977 = vrot.lane.b32.xlu0 %v386, 16
      %v978 = vpop.permute.xlu0 %977
      %979 = vrot.lane.b32.xlu0 %v387, 16
      %v980 = vpop.permute.xlu0 %979
      %981 = vrot.lane.b32.xlu0 %v388, 16
      %v982 = vpop.permute.xlu0 %981
      %983 = vrot.lane.b32.xlu0 %v389, 16
      %v984 = vpop.permute.xlu0 %983
      %985 = vrot.lane.b32.xlu0 %v390, 16
      %v986 = vpop.permute.xlu0 %985
      %987 = vrot.lane.b32.xlu0 %v391, 16
      %v988 = vpop.permute.xlu0 %987
      %989 = vrot.lane.b32.xlu0 %v392, 16
      %v990 = vpop.permute.xlu0 %989
      %991 = vrot.lane.b32.xlu0 %v393, 16
      %v992 = vpop.permute.xlu0 %991
      %993 = vrot.lane.b32.xlu0 %v394, 16
      %v994 = vpop.permute.xlu0 %993
      %995 = vrot.lane.b32.xlu0 %v395, 16
      %v996 = vpop.permute.xlu0 %995
      %997 = vrot.lane.b32.xlu0 %v396, 16
      %v998 = vpop.permute.xlu0 %997
      %999 = vrot.lane.b32.xlu0 %v397, 16
      %v1000 = vpop.permute.xlu0 %999
      %1001 = vrot.lane.b32.xlu0 %v398, 16
      %v1002 = vpop.permute.xlu0 %1001
      %1003 = vrot.lane.b32.xlu0 %v399, 16
      %v1004 = vpop.permute.xlu0 %1003
      %1005 = vrot.lane.b32.xlu0 %v400, 16
      %v1006 = vpop.permute.xlu0 %1005
      %1007 = vrot.lane.b32.xlu0 %v401, 16
      %v1008 = vpop.permute.xlu0 %1007
      %1009 = vrot.lane.b32.xlu0 %v402, 16
      %v1010 = vpop.permute.xlu0 %1009
      %1011 = vrot.lane.b32.xlu0 %v403, 16
      %v1012 = vpop.permute.xlu0 %1011
      %1013 = vrot.lane.b32.xlu0 %v404, 16
      %v1014 = vpop.permute.xlu0 %1013
      %1015 = vrot.lane.b32.xlu0 %v405, 16
      %v1016 = vpop.permute.xlu0 %1015
      %1081 = vrot.lane.b32.xlu0 %v406, 20
      %v1082 = vpop.permute.xlu0 %1081
      %1083 = vrot.lane.b32.xlu0 %v407, 20
      %v1084 = vpop.permute.xlu0 %1083
      %1085 = vrot.lane.b32.xlu0 %v408, 20
      %v1086 = vpop.permute.xlu0 %1085
      %1087 = vrot.lane.b32.xlu0 %v409, 20
      %v1088 = vpop.permute.xlu0 %1087
      %1089 = vrot.lane.b32.xlu0 %v410, 20
      %v1090 = vpop.permute.xlu0 %1089
      %1091 = vrot.lane.b32.xlu0 %v411, 20
      %v1092 = vpop.permute.xlu0 %1091
      %1093 = vrot.lane.b32.xlu0 %v412, 20
      %v1094 = vpop.permute.xlu0 %1093
      %1095 = vrot.lane.b32.xlu0 %v413, 20
      %v1096 = vpop.permute.xlu0 %1095
      %1097 = vrot.lane.b32.xlu0 %v414, 20
      %v1098 = vpop.permute.xlu0 %1097
      %1099 = vrot.lane.b32.xlu0 %v415, 20
      %v1100 = vpop.permute.xlu0 %1099
      %1101 = vrot.lane.b32.xlu0 %v416, 20
      %v1102 = vpop.permute.xlu0 %1101
      %1103 = vrot.lane.b32.xlu0 %v417, 20
      %v1104 = vpop.permute.xlu0 %1103
      %1105 = vrot.lane.b32.xlu0 %v418, 20
      %v1106 = vpop.permute.xlu0 %1105
      %1107 = vrot.lane.b32.xlu0 %v419, 20
      %v1108 = vpop.permute.xlu0 %1107
      %1109 = vrot.lane.b32.xlu0 %v420, 20
      %v1110 = vpop.permute.xlu0 %1109
      %1111 = vrot.lane.b32.xlu0 %v421, 20
      %v1112 = vpop.permute.xlu0 %1111
      %1113 = vrot.lane.b32.xlu0 %v422, 20
      %v1114 = vpop.permute.xlu0 %1113
      %1115 = vrot.lane.b32.xlu0 %v423, 20
      %v1116 = vpop.permute.xlu0 %1115
      %1117 = vrot.lane.b32.xlu0 %v424, 20
      %v1118 = vpop.permute.xlu0 %1117
      %1119 = vrot.lane.b32.xlu0 %v425, 20
      %v1120 = vpop.permute.xlu0 %1119
      %1121 = vrot.lane.b32.xlu0 %v426, 20
      %v1122 = vpop.permute.xlu0 %1121
      %1123 = vrot.lane.b32.xlu0 %v427, 20
      %v1124 = vpop.permute.xlu0 %1123
      %1125 = vrot.lane.b32.xlu0 %v428, 20
      %v1126 = vpop.permute.xlu0 %1125
      %1127 = vrot.lane.b32.xlu0 %v429, 20
      %v1128 = vpop.permute.xlu0 %1127
      %1129 = vrot.lane.b32.xlu0 %v430, 20
      %v1130 = vpop.permute.xlu0 %1129
      %1131 = vrot.lane.b32.xlu0 %v431, 20
      %v1132 = vpop.permute.xlu0 %1131
      %1133 = vrot.lane.b32.xlu0 %v432, 20
      %v1134 = vpop.permute.xlu0 %1133
      %1135 = vrot.lane.b32.xlu0 %v433, 20
      %v1136 = vpop.permute.xlu0 %1135
      %1137 = vrot.lane.b32.xlu0 %v434, 20
      %v1138 = vpop.permute.xlu0 %1137
      %1139 = vrot.lane.b32.xlu0 %v435, 20
      %v1140 = vpop.permute.xlu0 %1139
      %1141 = vrot.lane.b32.xlu0 %v436, 20
      %v1142 = vpop.permute.xlu0 %1141
      %1143 = vrot.lane.b32.xlu0 %v437, 20
      %v1144 = vpop.permute.xlu0 %1143
      %1209 = vrot.lane.b32.xlu0 %v441, 24
      %v1210 = vpop.permute.xlu0 %1209
      %1211 = vrot.lane.b32.xlu0 %v442, 24
      %v1212 = vpop.permute.xlu0 %1211
      %1213 = vrot.lane.b32.xlu0 %v443, 24
      %v1214 = vpop.permute.xlu0 %1213
      %1215 = vrot.lane.b32.xlu0 %v444, 24
      %v1216 = vpop.permute.xlu0 %1215
      %1217 = vrot.lane.b32.xlu0 %v445, 24
      %v1218 = vpop.permute.xlu0 %1217
      %1219 = vrot.lane.b32.xlu0 %v446, 24
      %v1220 = vpop.permute.xlu0 %1219
      %1221 = vrot.lane.b32.xlu0 %v447, 24
      %v1222 = vpop.permute.xlu0 %1221
      %1223 = vrot.lane.b32.xlu0 %v448, 24
      %v1224 = vpop.permute.xlu0 %1223
      %1225 = vrot.lane.b32.xlu0 %v449, 24
      %v1226 = vpop.permute.xlu0 %1225
      %1227 = vrot.lane.b32.xlu0 %v450, 24
      %v1228 = vpop.permute.xlu0 %1227
      %1229 = vrot.lane.b32.xlu0 %v451, 24
      %v1230 = vpop.permute.xlu0 %1229
      %1231 = vrot.lane.b32.xlu0 %v452, 24
      %v1232 = vpop.permute.xlu0 %1231
      %1233 = vrot.lane.b32.xlu0 %v453, 24
      %v1234 = vpop.permute.xlu0 %1233
      %1235 = vrot.lane.b32.xlu0 %v454, 24
      %v1236 = vpop.permute.xlu0 %1235
      %1237 = vrot.lane.b32.xlu0 %v455, 24
      %v1238 = vpop.permute.xlu0 %1237
      %1239 = vrot.lane.b32.xlu0 %v456, 24
      %v1240 = vpop.permute.xlu0 %1239
      %1241 = vrot.lane.b32.xlu0 %v457, 24
      %v1242 = vpop.permute.xlu0 %1241
      %1243 = vrot.lane.b32.xlu0 %v458, 24
      %v1244 = vpop.permute.xlu0 %1243
      %1245 = vrot.lane.b32.xlu0 %v459, 24
      %v1246 = vpop.permute.xlu0 %1245
      %1247 = vrot.lane.b32.xlu0 %v460, 24
      %v1248 = vpop.permute.xlu0 %1247
      %1249 = vrot.lane.b32.xlu0 %v461, 24
      %v1250 = vpop.permute.xlu0 %1249
      %1251 = vrot.lane.b32.xlu0 %v462, 24
      %v1252 = vpop.permute.xlu0 %1251
      %1253 = vrot.lane.b32.xlu0 %v463, 24
      %v1254 = vpop.permute.xlu0 %1253
      %1255 = vrot.lane.b32.xlu0 %v464, 24
      %v1256 = vpop.permute.xlu0 %1255
      %1257 = vrot.lane.b32.xlu0 %v465, 24
      %v1258 = vpop.permute.xlu0 %1257
      %1259 = vrot.lane.b32.xlu0 %v466, 24
      %v1260 = vpop.permute.xlu0 %1259
      %1261 = vrot.lane.b32.xlu0 %v467, 24
      %v1262 = vpop.permute.xlu0 %1261
      %1263 = vrot.lane.b32.xlu0 %v468, 24
      %v1264 = vpop.permute.xlu0 %1263
      %1265 = vrot.lane.b32.xlu0 %v469, 24
      %v1266 = vpop.permute.xlu0 %1265
      %1267 = vrot.lane.b32.xlu0 %v470, 24
      %v1268 = vpop.permute.xlu0 %1267
      %1269 = vrot.lane.b32.xlu0 %v471, 24
      %v1270 = vpop.permute.xlu0 %1269
      %1271 = vrot.lane.b32.xlu0 %v472, 24
      %v1272 = vpop.permute.xlu0 %1271
      %1337 = vrot.lane.b32.xlu0 %v473, 28
      %v1338 = vpop.permute.xlu0 %1337
      %1339 = vrot.lane.b32.xlu0 %v474, 28
      %v1340 = vpop.permute.xlu0 %1339
      %1341 = vrot.lane.b32.xlu0 %v475, 28
      %v1342 = vpop.permute.xlu0 %1341
      %1343 = vrot.lane.b32.xlu0 %v476, 28
      %v1344 = vpop.permute.xlu0 %1343
      %1345 = vrot.lane.b32.xlu0 %v477, 28
      %v1346 = vpop.permute.xlu0 %1345
      %1347 = vrot.lane.b32.xlu0 %v478, 28
      %v1348 = vpop.permute.xlu0 %1347
      %1349 = vrot.lane.b32.xlu0 %v479, 28
      %v1350 = vpop.permute.xlu0 %1349
      %1351 = vrot.lane.b32.xlu0 %v480, 28
      %v1352 = vpop.permute.xlu0 %1351
      %1353 = vrot.lane.b32.xlu0 %v481, 28
      %v1354 = vpop.permute.xlu0 %1353
      %1355 = vrot.lane.b32.xlu0 %v482, 28
      %v1356 = vpop.permute.xlu0 %1355
      %1357 = vrot.lane.b32.xlu0 %v483, 28
      %v1358 = vpop.permute.xlu0 %1357
      %1359 = vrot.lane.b32.xlu0 %v484, 28
      %v1360 = vpop.permute.xlu0 %1359
      %1361 = vrot.lane.b32.xlu0 %v485, 28
      %v1362 = vpop.permute.xlu0 %1361
      %1363 = vrot.lane.b32.xlu0 %v486, 28
      %v1364 = vpop.permute.xlu0 %1363
      %1365 = vrot.lane.b32.xlu0 %v487, 28
      %v1366 = vpop.permute.xlu0 %1365
      %1367 = vrot.lane.b32.xlu0 %v488, 28
      %v1368 = vpop.permute.xlu0 %1367
      %1369 = vrot.lane.b32.xlu0 %v489, 28
      %v1370 = vpop.permute.xlu0 %1369
      %1371 = vrot.lane.b32.xlu0 %v490, 28
      %v1372 = vpop.permute.xlu0 %1371
      %1373 = vrot.lane.b32.xlu0 %v491, 28
      %v1374 = vpop.permute.xlu0 %1373
      %1375 = vrot.lane.b32.xlu0 %v492, 28
      %v1376 = vpop.permute.xlu0 %1375
      %1377 = vrot.lane.b32.xlu0 %v493, 28
      %v1378 = vpop.permute.xlu0 %1377
      %1379 = vrot.lane.b32.xlu0 %v494, 28
      %v1380 = vpop.permute.xlu0 %1379
      %1381 = vrot.lane.b32.xlu0 %v495, 28
      %v1382 = vpop.permute.xlu0 %1381
      %1383 = vrot.lane.b32.xlu0 %v496, 28
      %v1384 = vpop.permute.xlu0 %1383
      %1385 = vrot.lane.b32.xlu0 %v497, 28
      %v1386 = vpop.permute.xlu0 %1385
      %1387 = vrot.lane.b32.xlu0 %v498, 28
      %v1388 = vpop.permute.xlu0 %1387
      %1389 = vrot.lane.b32.xlu0 %v499, 28
      %v1390 = vpop.permute.xlu0 %1389
      %1391 = vrot.lane.b32.xlu0 %v500, 28
      %v1392 = vpop.permute.xlu0 %1391
      %1393 = vrot.lane.b32.xlu0 %v501, 28
      %v1394 = vpop.permute.xlu0 %1393
      %1395 = vrot.lane.b32.xlu0 %v502, 28
      %v1396 = vpop.permute.xlu0 %1395
      %1397 = vrot.lane.b32.xlu0 %v503, 28
      %v1398 = vpop.permute.xlu0 %1397
      %1399 = vrot.lane.b32.xlu0 %v504, 28
      %v1400 = vpop.permute.xlu0 %1399
      %1465 = vrot.lane.b32.xlu0 %v505, 32
      %v1466 = vpop.permute.xlu0 %1465
      %1467 = vrot.lane.b32.xlu0 %v506, 32
      %v1468 = vpop.permute.xlu0 %1467
      %1469 = vrot.lane.b32.xlu0 %v507, 32
      %v1470 = vpop.permute.xlu0 %1469
      %1471 = vrot.lane.b32.xlu0 %v508, 32
      %v1472 = vpop.permute.xlu0 %1471
      %1473 = vrot.lane.b32.xlu0 %v509, 32
      %v1474 = vpop.permute.xlu0 %1473
      %1475 = vrot.lane.b32.xlu0 %v510, 32
      %v1476 = vpop.permute.xlu0 %1475
      %1477 = vrot.lane.b32.xlu0 %v511, 32
      %v1478 = vpop.permute.xlu0 %1477
      %1479 = vrot.lane.b32.xlu0 %v512, 32
      %v1480 = vpop.permute.xlu0 %1479
      %1481 = vrot.lane.b32.xlu0 %v513, 32
      %v1482 = vpop.permute.xlu0 %1481
      %1483 = vrot.lane.b32.xlu0 %v514, 32
      %v1484 = vpop.permute.xlu0 %1483
      %1485 = vrot.lane.b32.xlu0 %v515, 32
      %v1486 = vpop.permute.xlu0 %1485
      %1487 = vrot.lane.b32.xlu0 %v516, 32
      %v1488 = vpop.permute.xlu0 %1487
      %1489 = vrot.lane.b32.xlu0 %v517, 32
      %v1490 = vpop.permute.xlu0 %1489
      %1491 = vrot.lane.b32.xlu0 %v518, 32
      %v1492 = vpop.permute.xlu0 %1491
      %1493 = vrot.lane.b32.xlu0 %v519, 32
      %v1494 = vpop.permute.xlu0 %1493
      %1495 = vrot.lane.b32.xlu0 %v520, 32
      %v1496 = vpop.permute.xlu0 %1495
      %1497 = vrot.lane.b32.xlu0 %v521, 32
      %v1498 = vpop.permute.xlu0 %1497
      %1499 = vrot.lane.b32.xlu0 %v522, 32
      %v1500 = vpop.permute.xlu0 %1499
      %1501 = vrot.lane.b32.xlu0 %v523, 32
      %v1502 = vpop.permute.xlu0 %1501
      %1503 = vrot.lane.b32.xlu0 %v524, 32
      %v1504 = vpop.permute.xlu0 %1503
      %1505 = vrot.lane.b32.xlu0 %v525, 32
      %v1506 = vpop.permute.xlu0 %1505
      %1507 = vrot.lane.b32.xlu0 %v526, 32
      %v1508 = vpop.permute.xlu0 %1507
      %1509 = vrot.lane.b32.xlu0 %v527, 32
      %v1510 = vpop.permute.xlu0 %1509
      %1511 = vrot.lane.b32.xlu0 %v528, 32
      %v1512 = vpop.permute.xlu0 %1511
      %1513 = vrot.lane.b32.xlu0 %v529, 32
      %v1514 = vpop.permute.xlu0 %1513
      %1515 = vrot.lane.b32.xlu0 %v530, 32
      %v1516 = vpop.permute.xlu0 %1515
      %1517 = vrot.lane.b32.xlu0 %v531, 32
      %v1518 = vpop.permute.xlu0 %1517
      %1519 = vrot.lane.b32.xlu0 %v532, 32
      %v1520 = vpop.permute.xlu0 %1519
      %1521 = vrot.lane.b32.xlu0 %v533, 32
      %v1522 = vpop.permute.xlu0 %1521
      %1523 = vrot.lane.b32.xlu0 %v534, 32
      %v1524 = vpop.permute.xlu0 %1523
      %1525 = vrot.lane.b32.xlu0 %v535, 32
      %v1526 = vpop.permute.xlu0 %1525
      %1527 = vrot.lane.b32.xlu0 %v536, 32
      %v1528 = vpop.permute.xlu0 %1527
      %vm1561 = vcmask 31744
      %v1562 = vsel %vm1561, %v243, %v570
      %v1563 = vsel %vm1561, %v244, %v572
      %v1564 = vsel %vm1561, %v245, %v574
      %v1565 = vsel %vm1561, %v246, %v576
      %v1566 = vsel %vm1561, %v247, %v578
      %v1567 = vsel %vm1561, %v248, %v580
      %v1568 = vsel %vm1561, %v249, %v582
      %v1569 = vsel %vm1561, %v250, %v584
      %v1570 = vsel %vm1561, %v251, %v586
      %v1571 = vsel %vm1561, %v252, %v588
      %v1572 = vsel %vm1561, %v253, %v590
      %v1573 = vsel %vm1561, %v254, %v592
      %v1574 = vsel %vm1561, %v255, %v594
      %v1575 = vsel %vm1561, %v256, %v596
      %v1576 = vsel %vm1561, %v257, %v598
      %v1577 = vsel %vm1561, %v258, %v600
      %v1578 = vsel %vm1561, %v259, %v602
      %v1579 = vsel %vm1561, %v260, %v604
      %v1580 = vsel %vm1561, %v261, %v606
      %v1581 = vsel %vm1561, %v262, %v608
      %v1582 = vsel %vm1561, %v263, %v610
      %v1583 = vsel %vm1561, %v264, %v612
      %v1584 = vsel %vm1561, %v265, %v614
      %v1585 = vsel %vm1561, %v266, %v616
      %v1586 = vsel %vm1561, %v267, %v618
      %v1587 = vsel %vm1561, %v268, %v620
      %v1588 = vsel %vm1561, %v269, %v622
      %v1589 = vsel %vm1561, %v270, %v624
      %v1590 = vsel %vm1561, %v271, %v626
      %v1591 = vsel %vm1561, %v272, %v628
      %v1592 = vsel %vm1561, %v273, %v630
      %v1593 = vsel %vm1561, %v274, %v632
      %vm1594 = vcmask 64512
      %v1595 = vsel %vm1594, %v1562, %v698
      %v1596 = vsel %vm1594, %v1563, %v700
      %v1597 = vsel %vm1594, %v1564, %v702
      %v1598 = vsel %vm1594, %v1565, %v704
      %v1599 = vsel %vm1594, %v1566, %v706
      %v1600 = vsel %vm1594, %v1567, %v708
      %v1601 = vsel %vm1594, %v1568, %v710
      %v1602 = vsel %vm1594, %v1569, %v712
      %v1603 = vsel %vm1594, %v1570, %v714
      %v1604 = vsel %vm1594, %v1571, %v716
      %v1605 = vsel %vm1594, %v1572, %v718
      %v1606 = vsel %vm1594, %v1573, %v720
      %v1607 = vsel %vm1594, %v1574, %v722
      %v1608 = vsel %vm1594, %v1575, %v724
      %v1609 = vsel %vm1594, %v1576, %v726
      %v1610 = vsel %vm1594, %v1577, %v728
      %v1611 = vsel %vm1594, %v1578, %v730
      %v1612 = vsel %vm1594, %v1579, %v732
      %v1613 = vsel %vm1594, %v1580, %v734
      %v1614 = vsel %vm1594, %v1581, %v736
      %v1615 = vsel %vm1594, %v1582, %v738
      %v1616 = vsel %vm1594, %v1583, %v740
      %v1617 = vsel %vm1594, %v1584, %v742
      %v1618 = vsel %vm1594, %v1585, %v744
      %v1619 = vsel %vm1594, %v1586, %v746
      %v1620 = vsel %vm1594, %v1587, %v748
      %v1621 = vsel %vm1594, %v1588, %v750
      %v1622 = vsel %vm1594, %v1589, %v752
      %v1623 = vsel %vm1594, %v1590, %v754
      %v1624 = vsel %vm1594, %v1591, %v756
      %v1625 = vsel %vm1594, %v1592, %v758
      %v1626 = vsel %vm1594, %v1593, %v760
      %vm1627 = vcmask 97280
      %v1628 = vsel %vm1627, %v1595, %v826
      %v1629 = vsel %vm1627, %v1596, %v828
      %v1630 = vsel %vm1627, %v1597, %v830
      %v1631 = vsel %vm1627, %v1598, %v832
      %v1632 = vsel %vm1627, %v1599, %v834
      %v1633 = vsel %vm1627, %v1600, %v836
      %v1634 = vsel %vm1627, %v1601, %v838
      %v1635 = vsel %vm1627, %v1602, %v840
      %v1636 = vsel %vm1627, %v1603, %v842
      %v1637 = vsel %vm1627, %v1604, %v844
      %v1638 = vsel %vm1627, %v1605, %v846
      %v1639 = vsel %vm1627, %v1606, %v848
      %v1640 = vsel %vm1627, %v1607, %v850
      %v1641 = vsel %vm1627, %v1608, %v852
      %v1642 = vsel %vm1627, %v1609, %v854
      %v1643 = vsel %vm1627, %v1610, %v856
      %v1644 = vsel %vm1627, %v1611, %v858
      %v1645 = vsel %vm1627, %v1612, %v860
      %v1646 = vsel %vm1627, %v1613, %v862
      %v1647 = vsel %vm1627, %v1614, %v864
      %v1648 = vsel %vm1627, %v1615, %v866
      %v1649 = vsel %vm1627, %v1616, %v868
      %v1650 = vsel %vm1627, %v1617, %v870
      %v1651 = vsel %vm1627, %v1618, %v872
      %v1652 = vsel %vm1627, %v1619, %v874
      %v1653 = vsel %vm1627, %v1620, %v876
      %v1654 = vsel %vm1627, %v1621, %v878
      %v1655 = vsel %vm1627, %v1622, %v880
      %v1656 = vsel %vm1627, %v1623, %v882
      %v1657 = vsel %vm1627, %v1624, %v884
      %v1658 = vsel %vm1627, %v1625, %v886
      %v1659 = vsel %vm1627, %v1626, %v888
      %vm1660 = vcmask 130048
      %v1661 = vsel %vm1660, %v1628, %v954
      %v1662 = vsel %vm1660, %v1629, %v956
      %v1663 = vsel %vm1660, %v1630, %v958
      %v1664 = vsel %vm1660, %v1631, %v960
      %v1665 = vsel %vm1660, %v1632, %v962
      %v1666 = vsel %vm1660, %v1633, %v964
      %v1667 = vsel %vm1660, %v1634, %v966
      %v1668 = vsel %vm1660, %v1635, %v968
      %v1669 = vsel %vm1660, %v1636, %v970
      %v1670 = vsel %vm1660, %v1637, %v972
      %v1671 = vsel %vm1660, %v1638, %v974
      %v1672 = vsel %vm1660, %v1639, %v976
      %v1673 = vsel %vm1660, %v1640, %v978
      %v1674 = vsel %vm1660, %v1641, %v980
      %v1675 = vsel %vm1660, %v1642, %v982
      %v1676 = vsel %vm1660, %v1643, %v984
      %v1677 = vsel %vm1660, %v1644, %v986
      %v1678 = vsel %vm1660, %v1645, %v988
      %v1679 = vsel %vm1660, %v1646, %v990
      %v1680 = vsel %vm1660, %v1647, %v992
      %v1681 = vsel %vm1660, %v1648, %v994
      %v1682 = vsel %vm1660, %v1649, %v996
      %v1683 = vsel %vm1660, %v1650, %v998
      %v1684 = vsel %vm1660, %v1651, %v1000
      %v1685 = vsel %vm1660, %v1652, %v1002
      %v1686 = vsel %vm1660, %v1653, %v1004
      %v1687 = vsel %vm1660, %v1654, %v1006
      %v1688 = vsel %vm1660, %v1655, %v1008
      %v1689 = vsel %vm1660, %v1656, %v1010
      %v1690 = vsel %vm1660, %v1657, %v1012
      %v1691 = vsel %vm1660, %v1658, %v1014
      %v1692 = vsel %vm1660, %v1659, %v1016
      %vm1693 = vcmask 162816
      %v1694 = vsel %vm1693, %v1661, %v1082
      %v1695 = vsel %vm1693, %v1662, %v1084
      %v1696 = vsel %vm1693, %v1663, %v1086
      %v1697 = vsel %vm1693, %v1664, %v1088
      %v1698 = vsel %vm1693, %v1665, %v1090
      %v1699 = vsel %vm1693, %v1666, %v1092
      %v1700 = vsel %vm1693, %v1667, %v1094
      %v1701 = vsel %vm1693, %v1668, %v1096
      %v1702 = vsel %vm1693, %v1669, %v1098
      %v1703 = vsel %vm1693, %v1670, %v1100
      %v1704 = vsel %vm1693, %v1671, %v1102
      %v1705 = vsel %vm1693, %v1672, %v1104
      %v1706 = vsel %vm1693, %v1673, %v1106
      %v1707 = vsel %vm1693, %v1674, %v1108
      %v1708 = vsel %vm1693, %v1675, %v1110
      %v1709 = vsel %vm1693, %v1676, %v1112
      %v1710 = vsel %vm1693, %v1677, %v1114
      %v1711 = vsel %vm1693, %v1678, %v1116
      %v1712 = vsel %vm1693, %v1679, %v1118
      %v1713 = vsel %vm1693, %v1680, %v1120
      %v1714 = vsel %vm1693, %v1681, %v1122
      %v1715 = vsel %vm1693, %v1682, %v1124
      %v1716 = vsel %vm1693, %v1683, %v1126
      %v1717 = vsel %vm1693, %v1684, %v1128
      %v1718 = vsel %vm1693, %v1685, %v1130
      %v1719 = vsel %vm1693, %v1686, %v1132
      %v1720 = vsel %vm1693, %v1687, %v1134
      %v1721 = vsel %vm1693, %v1688, %v1136
      %v1722 = vsel %vm1693, %v1689, %v1138
      %v1723 = vsel %vm1693, %v1690, %v1140
      %v1724 = vsel %vm1693, %v1691, %v1142
      %v1725 = vsel %vm1693, %v1692, %v1144
      %vm1726 = vcmask 195584
      %v1727 = vsel %vm1726, %v1694, %v1210
      %v1728 = vsel %vm1726, %v1695, %v1212
      %v1729 = vsel %vm1726, %v1696, %v1214
      %v1730 = vsel %vm1726, %v1697, %v1216
      %v1731 = vsel %vm1726, %v1698, %v1218
      %v1732 = vsel %vm1726, %v1699, %v1220
      %v1733 = vsel %vm1726, %v1700, %v1222
      %v1734 = vsel %vm1726, %v1701, %v1224
      %v1735 = vsel %vm1726, %v1702, %v1226
      %v1736 = vsel %vm1726, %v1703, %v1228
      %v1737 = vsel %vm1726, %v1704, %v1230
      %v1738 = vsel %vm1726, %v1705, %v1232
      %v1739 = vsel %vm1726, %v1706, %v1234
      %v1740 = vsel %vm1726, %v1707, %v1236
      %v1741 = vsel %vm1726, %v1708, %v1238
      %v1742 = vsel %vm1726, %v1709, %v1240
      %v1743 = vsel %vm1726, %v1710, %v1242
      %v1744 = vsel %vm1726, %v1711, %v1244
      %v1745 = vsel %vm1726, %v1712, %v1246
      %v1746 = vsel %vm1726, %v1713, %v1248
      %v1747 = vsel %vm1726, %v1714, %v1250
      %v1748 = vsel %vm1726, %v1715, %v1252
      %v1749 = vsel %vm1726, %v1716, %v1254
      %v1750 = vsel %vm1726, %v1717, %v1256
      %v1751 = vsel %vm1726, %v1718, %v1258
      %v1752 = vsel %vm1726, %v1719, %v1260
      %v1753 = vsel %vm1726, %v1720, %v1262
      %v1754 = vsel %vm1726, %v1721, %v1264
      %v1755 = vsel %vm1726, %v1722, %v1266
      %v1756 = vsel %vm1726, %v1723, %v1268
      %v1757 = vsel %vm1726, %v1724, %v1270
      %v1758 = vsel %vm1726, %v1725, %v1272
      %vm1759 = vcmask 228352
      %v1760 = vsel %vm1759, %v1727, %v1338
      %v1761 = vsel %vm1759, %v1728, %v1340
      %v1762 = vsel %vm1759, %v1729, %v1342
      %v1763 = vsel %vm1759, %v1730, %v1344
      %v1764 = vsel %vm1759, %v1731, %v1346
      %v1765 = vsel %vm1759, %v1732, %v1348
      %v1766 = vsel %vm1759, %v1733, %v1350
      %v1767 = vsel %vm1759, %v1734, %v1352
      %v1768 = vsel %vm1759, %v1735, %v1354
      %v1769 = vsel %vm1759, %v1736, %v1356
      %v1770 = vsel %vm1759, %v1737, %v1358
      %v1771 = vsel %vm1759, %v1738, %v1360
      %v1772 = vsel %vm1759, %v1739, %v1362
      %v1773 = vsel %vm1759, %v1740, %v1364
      %v1774 = vsel %vm1759, %v1741, %v1366
      %v1775 = vsel %vm1759, %v1742, %v1368
      %v1776 = vsel %vm1759, %v1743, %v1370
      %v1777 = vsel %vm1759, %v1744, %v1372
      %v1778 = vsel %vm1759, %v1745, %v1374
      %v1779 = vsel %vm1759, %v1746, %v1376
      %v1780 = vsel %vm1759, %v1747, %v1378
      %v1781 = vsel %vm1759, %v1748, %v1380
      %v1782 = vsel %vm1759, %v1749, %v1382
      %v1783 = vsel %vm1759, %v1750, %v1384
      %v1784 = vsel %vm1759, %v1751, %v1386
      %v1785 = vsel %vm1759, %v1752, %v1388
      %v1786 = vsel %vm1759, %v1753, %v1390
      %v1787 = vsel %vm1759, %v1754, %v1392
      %v1788 = vsel %vm1759, %v1755, %v1394
      %v1789 = vsel %vm1759, %v1756, %v1396
      %v1790 = vsel %vm1759, %v1757, %v1398
      %v1791 = vsel %vm1759, %v1758, %v1400
      %vm1792 = vcmask 261120
      %v1793 = vsel %vm1792, %v1760, %v1466
      %v1794 = vsel %vm1792, %v1761, %v1468
      %v1795 = vsel %vm1792, %v1762, %v1470
      %v1796 = vsel %vm1792, %v1763, %v1472
      %v1797 = vsel %vm1792, %v1764, %v1474
      %v1798 = vsel %vm1792, %v1765, %v1476
      %v1799 = vsel %vm1792, %v1766, %v1478
      %v1800 = vsel %vm1792, %v1767, %v1480
      %v1801 = vsel %vm1792, %v1768, %v1482
      %v1802 = vsel %vm1792, %v1769, %v1484
      %v1803 = vsel %vm1792, %v1770, %v1486
      %v1804 = vsel %vm1792, %v1771, %v1488
      %v1805 = vsel %vm1792, %v1772, %v1490
      %v1806 = vsel %vm1792, %v1773, %v1492
      %v1807 = vsel %vm1792, %v1774, %v1494
      %v1808 = vsel %vm1792, %v1775, %v1496
      %v1809 = vsel %vm1792, %v1776, %v1498
      %v1810 = vsel %vm1792, %v1777, %v1500
      %v1811 = vsel %vm1792, %v1778, %v1502
      %v1812 = vsel %vm1792, %v1779, %v1504
      %v1813 = vsel %vm1792, %v1780, %v1506
      %v1814 = vsel %vm1792, %v1781, %v1508
      %v1815 = vsel %vm1792, %v1782, %v1510
      %v1816 = vsel %vm1792, %v1783, %v1512
      %v1817 = vsel %vm1792, %v1784, %v1514
      %v1818 = vsel %vm1792, %v1785, %v1516
      %v1819 = vsel %vm1792, %v1786, %v1518
      %v1820 = vsel %vm1792, %v1787, %v1520
      %v1821 = vsel %vm1792, %v1788, %v1522
      %v1822 = vsel %vm1792, %v1789, %v1524
      %v1823 = vsel %vm1792, %v1790, %v1526
      %v1824 = vsel %vm1792, %v1791, %v1528
      %vm1825 = vcmask 293888
      %v1827 = vsel %vm1825, %v1793, 0
      %v1830 = vsel %vm1825, %v1794, 0
      %v1833 = vsel %vm1825, %v1795, 0
      %v1836 = vsel %vm1825, %v1796, 0
      %v1839 = vsel %vm1825, %v1797, 0
      %v1842 = vsel %vm1825, %v1798, 0
      %v1845 = vsel %vm1825, %v1799, 0
      %v1848 = vsel %vm1825, %v1800, 0
      %v1851 = vsel %vm1825, %v1801, 0
      %v1854 = vsel %vm1825, %v1802, 0
      %v1857 = vsel %vm1825, %v1803, 0
      %v1860 = vsel %vm1825, %v1804, 0
      %v1863 = vsel %vm1825, %v1805, 0
      %v1866 = vsel %vm1825, %v1806, 0
      %v1869 = vsel %vm1825, %v1807, 0
      %v1872 = vsel %vm1825, %v1808, 0
      %v1875 = vsel %vm1825, %v1809, 0
      %v1878 = vsel %vm1825, %v1810, 0
      %v1881 = vsel %vm1825, %v1811, 0
      %v1884 = vsel %vm1825, %v1812, 0
      %v1887 = vsel %vm1825, %v1813, 0
      %v1890 = vsel %vm1825, %v1814, 0
      %v1893 = vsel %vm1825, %v1815, 0
      %v1896 = vsel %vm1825, %v1816, 0
      %v1899 = vsel %vm1825, %v1817, 0
      %v1902 = vsel %vm1825, %v1818, 0
      %v1905 = vsel %vm1825, %v1819, 0
      %v1908 = vsel %vm1825, %v1820, 0
      %v1911 = vsel %vm1825, %v1821, 0
      %v1914 = vsel %vm1825, %v1822, 0
      %v1917 = vsel %vm1825, %v1823, 0
      %v1920 = vsel %vm1825, %v1824, 0
      %vm1922 = vcmask 1043456
      %v1924 = vsel %vm1922, %v240, 0
      %1926 = vmatprep.subr.mxu0 0.0
      %1927 = vmatpush1.msra.mxu0 %v236
      %1928 = vmatprep.subr.mxu0 0.0
      %1929 = vmatpush1.msra.mxu0 %v237
      %1930 = vmatprep.subr.mxu0 0.0
      %1931 = vmatpush1.msra.mxu0 %v238
      %1932 = vmatprep.subr.mxu0 0.0
      %1933 = vmatpush1.msra.mxu0 %v239
      %1934 = vmatprep.subr.mxu0 0.0
      %1935 = vmatpush1.msra.mxu0 %v1924
      %1936 = vmatprep.subr.mxu0 0.0
      %1937 = vmatpush1.msra.mxu0 0.0
      %1938 = vmatprep.subr.mxu0 0.0
      %1939 = vmatpush1.msra.mxu0 0.0
      %1940 = vmatprep.subr.mxu0 0.0
      %1941 = vmatpush1.msra.mxu0 0.0
      %1942 = vmatprep.subr.mxu0 0.0
      %1943 = vmatpush1.msra.mxu0 0.0
      %1944 = vmatprep.subr.mxu0 0.0
      %1945 = vmatpush1.msra.mxu0 0.0
      %1946 = vmatprep.subr.mxu0 0.0
      %1947 = vmatpush1.msra.mxu0 0.0
      %1948 = vmatprep.subr.mxu0 0.0
      %1949 = vmatpush1.msra.mxu0 0.0
      %1950 = vmatprep.subr.mxu0 0.0
      %1951 = vmatpush1.msra.mxu0 0.0
      %1952 = vmatprep.subr.mxu0 0.0
      %1953 = vmatpush1.msra.mxu0 0.0
      %1954 = vmatprep.subr.mxu0 0.0
      %1955 = vmatpush1.msra.mxu0 0.0
      %1956 = vmatprep.subr.mxu0 0.0
      %1957 = vmatpush1.msra.mxu0 0.0
      %1958 = vmatprep.subr.mxu0 0.0
      %1959 = vmatpush1.msra.mxu0 0.0
      %1960 = vmatprep.subr.mxu0 0.0
      %1961 = vmatpush1.msra.mxu0 0.0
      %1962 = vmatprep.subr.mxu0 0.0
      %1963 = vmatpush1.msra.mxu0 0.0
      %1964 = vmatprep.subr.mxu0 0.0
      %1965 = vmatpush1.msra.mxu0 0.0
      %1966 = vmatprep.subr.mxu0 0.0
      %1967 = vmatpush1.msra.mxu0 0.0
      %1968 = vmatprep.subr.mxu0 0.0
      %1969 = vmatpush1.msra.mxu0 0.0
      %1970 = vmatprep.subr.mxu0 0.0
      %1971 = vmatpush1.msra.mxu0 0.0
      %1972 = vmatprep.subr.mxu0 0.0
      %1973 = vmatpush1.msra.mxu0 0.0
      %1974 = vmatprep.subr.mxu0 0.0
      %1975 = vmatpush1.msra.mxu0 0.0
      %1976 = vmatprep.subr.mxu0 0.0
      %1977 = vmatpush1.msra.mxu0 0.0
      %1978 = vmatprep.subr.mxu0 0.0
      %1979 = vmatpush1.msra.mxu0 0.0
      %1980 = vmatprep.subr.mxu0 0.0
      %1981 = vmatpush1.msra.mxu0 0.0
      %1982 = vmatprep.subr.mxu0 0.0
      %1983 = vmatpush1.msra.mxu0 0.0
      %1984 = vmatprep.subr.mxu0 0.0
      %1985 = vmatpush1.msra.mxu0 0.0
      %1986 = vmatprep.subr.mxu0 0.0
      %1987 = vmatpush1.msra.mxu0 0.0
      %1988 = vmatprep.subr.mxu0 0.0
      %1989 = vmatpush1.msra.mxu0 0.0
      %1990 = vmatprep.mubr.f32.mxu0 0.0
      %1991 = vmatmul.mubr.f32.gmra.mrb[0].mxu0 %v1827
      %v1992 = vpop.f32.mrb[0].mxu0
      %v1993 = vadd.f32 %v234, %v1992
      %v1994 = vpop.f32.mrb[0].mxu0
      %1995 = vmatprep.mubr.f32.mxu0 0.0
      %1996 = vmatmul.mubr.f32.gmra.mrb[0].mxu0 %v1830
      %v1997 = vpop.f32.mrb[0].mxu0
      %v1998 = vadd.f32 %v234, %v1997
      %v1999 = vpop.f32.mrb[0].mxu0
      %2000 = vmatprep.mubr.f32.mxu0 0.0
      %2001 = vmatmul.mubr.f32.gmra.mrb[0].mxu0 %v1833
      %v2002 = vpop.f32.mrb[0].mxu0
      %v2003 = vadd.f32 %v234, %v2002
      %v2004 = vpop.f32.mrb[0].mxu0
      %2005 = vmatprep.mubr.f32.mxu0 0.0
      %2006 = vmatmul.mubr.f32.gmra.mrb[0].mxu0 %v1836
      %v2007 = vpop.f32.mrb[0].mxu0
      %v2008 = vadd.f32 %v234, %v2007
      %v2009 = vpop.f32.mrb[0].mxu0
      %2010 = vmatprep.mubr.f32.mxu0 0.0
      %2011 = vmatmul.mubr.f32.gmra.mrb[0].mxu0 %v1839
      %v2012 = vpop.f32.mrb[0].mxu0
      %v2013 = vadd.f32 %v234, %v2012
      %v2014 = vpop.f32.mrb[0].mxu0
      %2015 = vmatprep.mubr.f32.mxu0 0.0
      %2016 = vmatmul.mubr.f32.gmra.mrb[0].mxu0 %v1842
      %v2017 = vpop.f32.mrb[0].mxu0
      %v2018 = vadd.f32 %v234, %v2017
      %v2019 = vpop.f32.mrb[0].mxu0
      %2020 = vmatprep.mubr.f32.mxu0 0.0
      %2021 = vmatmul.mubr.f32.gmra.mrb[0].mxu0 %v1845
      %v2022 = vpop.f32.mrb[0].mxu0
      %v2023 = vadd.f32 %v234, %v2022
      %v2024 = vpop.f32.mrb[0].mxu0
      %2025 = vmatprep.mubr.f32.mxu0 0.0
      %2026 = vmatmul.mubr.f32.gmra.mrb[0].mxu0 %v1848
      %v2027 = vpop.f32.mrb[0].mxu0
      %v2028 = vadd.f32 %v234, %v2027
      %v2029 = vpop.f32.mrb[0].mxu0
      %2030 = vmatprep.mubr.f32.mxu0 0.0
      %2031 = vmatmul.mubr.f32.gmra.mrb[0].mxu0 %v1851
      %v2032 = vpop.f32.mrb[0].mxu0
      %v2033 = vadd.f32 %v234, %v2032
      %v2034 = vpop.f32.mrb[0].mxu0
      %2035 = vmatprep.mubr.f32.mxu0 0.0
      %2036 = vmatmul.mubr.f32.gmra.mrb[0].mxu0 %v1854
      %v2037 = vpop.f32.mrb[0].mxu0
      %v2038 = vadd.f32 %v234, %v2037
      %v2039 = vpop.f32.mrb[0].mxu0
      %2040 = vmatprep.mubr.f32.mxu0 0.0
      %2041 = vmatmul.mubr.f32.gmra.mrb[0].mxu0 %v1857
      %v2042 = vpop.f32.mrb[0].mxu0
      %v2043 = vadd.f32 %v234, %v2042
      %v2044 = vpop.f32.mrb[0].mxu0
      %2045 = vmatprep.mubr.f32.mxu0 0.0
      %2046 = vmatmul.mubr.f32.gmra.mrb[0].mxu0 %v1860
      %v2047 = vpop.f32.mrb[0].mxu0
      %v2048 = vadd.f32 %v234, %v2047
      %v2049 = vpop.f32.mrb[0].mxu0
      %2050 = vmatprep.mubr.f32.mxu0 0.0
      %2051 = vmatmul.mubr.f32.gmra.mrb[0].mxu0 %v1863
      %v2052 = vpop.f32.mrb[0].mxu0
      %v2053 = vadd.f32 %v234, %v2052
      %v2054 = vpop.f32.mrb[0].mxu0
      %2055 = vmatprep.mubr.f32.mxu0 0.0
      %2056 = vmatmul.mubr.f32.gmra.mrb[0].mxu0 %v1866
      %v2057 = vpop.f32.mrb[0].mxu0
      %v2058 = vadd.f32 %v234, %v2057
      %v2059 = vpop.f32.mrb[0].mxu0
      %2060 = vmatprep.mubr.f32.mxu0 0.0
      %2061 = vmatmul.mubr.f32.gmra.mrb[0].mxu0 %v1869
      %v2062 = vpop.f32.mrb[0].mxu0
      %v2063 = vadd.f32 %v234, %v2062
      %v2064 = vpop.f32.mrb[0].mxu0
      %2065 = vmatprep.mubr.f32.mxu0 0.0
      %2066 = vmatmul.mubr.f32.gmra.mrb[0].mxu0 %v1872
      %v2067 = vpop.f32.mrb[0].mxu0
      %v2068 = vadd.f32 %v234, %v2067
      %v2069 = vpop.f32.mrb[0].mxu0
      %2070 = vmatprep.mubr.f32.mxu0 0.0
      %2071 = vmatmul.mubr.f32.gmra.mrb[0].mxu0 %v1875
      %v2072 = vpop.f32.mrb[0].mxu0
      %v2073 = vadd.f32 %v234, %v2072
      %v2074 = vpop.f32.mrb[0].mxu0
      %2075 = vmatprep.mubr.f32.mxu0 0.0
      %2076 = vmatmul.mubr.f32.gmra.mrb[0].mxu0 %v1878
      %v2077 = vpop.f32.mrb[0].mxu0
      %v2078 = vadd.f32 %v234, %v2077
      %v2079 = vpop.f32.mrb[0].mxu0
      %2080 = vmatprep.mubr.f32.mxu0 0.0
      %2081 = vmatmul.mubr.f32.gmra.mrb[0].mxu0 %v1881
      %v2082 = vpop.f32.mrb[0].mxu0
      %v2083 = vadd.f32 %v234, %v2082
      %v2084 = vpop.f32.mrb[0].mxu0
      %2085 = vmatprep.mubr.f32.mxu0 0.0
      %2086 = vmatmul.mubr.f32.gmra.mrb[0].mxu0 %v1884
      %v2087 = vpop.f32.mrb[0].mxu0
      %v2088 = vadd.f32 %v234, %v2087
      %v2089 = vpop.f32.mrb[0].mxu0
      %2090 = vmatprep.mubr.f32.mxu0 0.0
      %2091 = vmatmul.mubr.f32.gmra.mrb[0].mxu0 %v1887
      %v2092 = vpop.f32.mrb[0].mxu0
      %v2093 = vadd.f32 %v234, %v2092
      %v2094 = vpop.f32.mrb[0].mxu0
      %2095 = vmatprep.mubr.f32.mxu0 0.0
      %2096 = vmatmul.mubr.f32.gmra.mrb[0].mxu0 %v1890
      %v2097 = vpop.f32.mrb[0].mxu0
      %v2098 = vadd.f32 %v234, %v2097
      %v2099 = vpop.f32.mrb[0].mxu0
      %2100 = vmatprep.mubr.f32.mxu0 0.0
      %2101 = vmatmul.mubr.f32.gmra.mrb[0].mxu0 %v1893
      %v2102 = vpop.f32.mrb[0].mxu0
      %v2103 = vadd.f32 %v234, %v2102
      %v2104 = vpop.f32.mrb[0].mxu0
      %2105 = vmatprep.mubr.f32.mxu0 0.0
      %2106 = vmatmul.mubr.f32.gmra.mrb[0].mxu0 %v1896
      %v2107 = vpop.f32.mrb[0].mxu0
      %v2108 = vadd.f32 %v234, %v2107
      %v2109 = vpop.f32.mrb[0].mxu0
      %2110 = vmatprep.mubr.f32.mxu0 0.0
      %2111 = vmatmul.mubr.f32.gmra.mrb[0].mxu0 %v1899
      %v2112 = vpop.f32.mrb[0].mxu0
      %v2113 = vadd.f32 %v234, %v2112
      %v2114 = vpop.f32.mrb[0].mxu0
      %2115 = vmatprep.mubr.f32.mxu0 0.0
      %2116 = vmatmul.mubr.f32.gmra.mrb[0].mxu0 %v1902
      %v2117 = vpop.f32.mrb[0].mxu0
      %v2118 = vadd.f32 %v234, %v2117
      %v2119 = vpop.f32.mrb[0].mxu0
      %2120 = vmatprep.mubr.f32.mxu0 0.0
      %2121 = vmatmul.mubr.f32.gmra.mrb[0].mxu0 %v1905
      %v2122 = vpop.f32.mrb[0].mxu0
      %v2123 = vadd.f32 %v234, %v2122
      %v2124 = vpop.f32.mrb[0].mxu0
      %2125 = vmatprep.mubr.f32.mxu0 0.0
      %2126 = vmatmul.mubr.f32.gmra.mrb[0].mxu0 %v1908
      %v2127 = vpop.f32.mrb[0].mxu0
      %v2128 = vadd.f32 %v234, %v2127
      %v2129 = vpop.f32.mrb[0].mxu0
      %2130 = vmatprep.mubr.f32.mxu0 0.0
      %2131 = vmatmul.mubr.f32.gmra.mrb[0].mxu0 %v1911
      %v2132 = vpop.f32.mrb[0].mxu0
      %v2133 = vadd.f32 %v234, %v2132
      %v2134 = vpop.f32.mrb[0].mxu0
      %2135 = vmatprep.mubr.f32.mxu0 0.0
      %2136 = vmatmul.mubr.f32.gmra.mrb[0].mxu0 %v1914
      %v2137 = vpop.f32.mrb[0].mxu0
      %v2138 = vadd.f32 %v234, %v2137
      %v2139 = vpop.f32.mrb[0].mxu0
      %2140 = vmatprep.mubr.f32.mxu0 0.0
      %2141 = vmatmul.mubr.f32.gmra.mrb[0].mxu0 %v1917
      %v2142 = vpop.f32.mrb[0].mxu0
      %v2143 = vadd.f32 %v234, %v2142
      %v2144 = vpop.f32.mrb[0].mxu0
      %2145 = vmatprep.mubr.f32.mxu0 0.0
      %2146 = vmatmul.mubr.f32.gmra.mrb[0].mxu0 %v1920
      %v2147 = vpop.f32.mrb[0].mxu0
      %v2148 = vadd.f32 %v234, %v2147
      %v2149 = vpop.f32.mrb[0].mxu0
      %2150 = vdwg.mxu0
      %v2151 = vmax.f32 %v1993, 0.0
      %v2152 = vmax.f32 %v1998, 0.0
      %v2153 = vmax.f32 %v2003, 0.0
      %v2154 = vmax.f32 %v2008, 0.0
      %v2155 = vmax.f32 %v2013, 0.0
      %v2156 = vmax.f32 %v2018, 0.0
      %v2157 = vmax.f32 %v2023, 0.0
      %v2158 = vmax.f32 %v2028, 0.0
      %v2159 = vmax.f32 %v2033, 0.0
      %v2160 = vmax.f32 %v2038, 0.0
      %v2161 = vmax.f32 %v2043, 0.0
      %v2162 = vmax.f32 %v2048, 0.0
      %v2163 = vmax.f32 %v2053, 0.0
      %v2164 = vmax.f32 %v2058, 0.0
      %v2165 = vmax.f32 %v2063, 0.0
      %v2166 = vmax.f32 %v2068, 0.0
      %v2167 = vmax.f32 %v2073, 0.0
      %v2168 = vmax.f32 %v2078, 0.0
      %v2169 = vmax.f32 %v2083, 0.0
      %v2170 = vmax.f32 %v2088, 0.0
      %v2171 = vmax.f32 %v2093, 0.0
      %v2172 = vmax.f32 %v2098, 0.0
      %v2173 = vmax.f32 %v2103, 0.0
      %v2174 = vmax.f32 %v2108, 0.0
      %v2175 = vmax.f32 %v2113, 0.0
      %v2176 = vmax.f32 %v2118, 0.0
      %v2177 = vmax.f32 %v2123, 0.0
      %v2178 = vmax.f32 %v2128, 0.0
      %v2179 = vmax.f32 %v2133, 0.0
      %v2180 = vmax.f32 %v2138, 0.0
      %v2181 = vmax.f32 %v2143, 0.0
      %v2182 = vmax.f32 %v2148, 0.0
      %vm2215 = vcmask 1040384
      %v2216 = vrot.slane %v2151, 7
      %v2217 = vrot.slane %v2152, 7
      %v2218 = vsel %vm2215, %v2216, %v2217
      %v2219 = vrot.slane %v2153, 7
      %v2220 = vrot.slane %v2154, 7
      %v2221 = vsel %vm2215, %v2219, %v2220
      %v2222 = vrot.slane %v2155, 7
      %v2223 = vrot.slane %v2156, 7
      %v2224 = vsel %vm2215, %v2222, %v2223
      %v2225 = vrot.slane %v2157, 7
      %v2226 = vrot.slane %v2158, 7
      %v2227 = vsel %vm2215, %v2225, %v2226
      %v2228 = vrot.slane %v2159, 7
      %v2229 = vrot.slane %v2160, 7
      %v2230 = vsel %vm2215, %v2228, %v2229
      %v2231 = vrot.slane %v2161, 7
      %v2232 = vrot.slane %v2162, 7
      %v2233 = vsel %vm2215, %v2231, %v2232
      %v2234 = vrot.slane %v2163, 7
      %v2235 = vrot.slane %v2164, 7
      %v2236 = vsel %vm2215, %v2234, %v2235
      %v2237 = vrot.slane %v2165, 7
      %v2238 = vrot.slane %v2166, 7
      %v2239 = vsel %vm2215, %v2237, %v2238
      %v2240 = vrot.slane %v2167, 7
      %v2241 = vrot.slane %v2168, 7
      %v2242 = vsel %vm2215, %v2240, %v2241
      %v2243 = vrot.slane %v2169, 7
      %v2244 = vrot.slane %v2170, 7
      %v2245 = vsel %vm2215, %v2243, %v2244
      %v2246 = vrot.slane %v2171, 7
      %v2247 = vrot.slane %v2172, 7
      %v2248 = vsel %vm2215, %v2246, %v2247
      %v2249 = vrot.slane %v2173, 7
      %v2250 = vrot.slane %v2174, 7
      %v2251 = vsel %vm2215, %v2249, %v2250
      %v2252 = vrot.slane %v2175, 7
      %v2253 = vrot.slane %v2176, 7
      %v2254 = vsel %vm2215, %v2252, %v2253
      %v2255 = vrot.slane %v2177, 7
      %v2256 = vrot.slane %v2178, 7
      %v2257 = vsel %vm2215, %v2255, %v2256
      %v2258 = vrot.slane %v2179, 7
      %v2259 = vrot.slane %v2180, 7
      %v2260 = vsel %vm2215, %v2258, %v2259
      %v2261 = vrot.slane %v2181, 7
      %v2262 = vrot.slane %v2182, 7
      %v2263 = vsel %vm2215, %v2261, %v2262
      %v2312 = vsel %vm2215, 0.0, %v2216
      %v2313 = vsel %vm2215, 0.0, %v2219
      %v2314 = vsel %vm2215, 0.0, %v2222
      %v2315 = vsel %vm2215, 0.0, %v2225
      %v2316 = vsel %vm2215, 0.0, %v2228
      %v2317 = vsel %vm2215, 0.0, %v2231
      %v2318 = vsel %vm2215, 0.0, %v2234
      %v2319 = vsel %vm2215, 0.0, %v2237
      %v2320 = vsel %vm2215, 0.0, %v2240
      %v2321 = vsel %vm2215, 0.0, %v2243
      %v2322 = vsel %vm2215, 0.0, %v2246
      %v2323 = vsel %vm2215, 0.0, %v2249
      %v2324 = vsel %vm2215, 0.0, %v2252
      %v2325 = vsel %vm2215, 0.0, %v2255
      %v2326 = vsel %vm2215, 0.0, %v2258
      %v2327 = vsel %vm2215, 0.0, %v2261
      %v2328 = vsel %vm2215, %v2217, 0.0
      %v2329 = vsel %vm2215, %v2220, 0.0
      %v2330 = vsel %vm2215, %v2223, 0.0
      %v2331 = vsel %vm2215, %v2226, 0.0
      %v2332 = vsel %vm2215, %v2229, 0.0
      %v2333 = vsel %vm2215, %v2232, 0.0
      %v2334 = vsel %vm2215, %v2235, 0.0
      %v2335 = vsel %vm2215, %v2238, 0.0
      %v2336 = vsel %vm2215, %v2241, 0.0
      %v2337 = vsel %vm2215, %v2244, 0.0
      %v2338 = vsel %vm2215, %v2247, 0.0
      %v2339 = vsel %vm2215, %v2250, 0.0
      %v2340 = vsel %vm2215, %v2253, 0.0
      %v2341 = vsel %vm2215, %v2256, 0.0
      %v2342 = vsel %vm2215, %v2259, 0.0
      %v2343 = vsel %vm2215, %v2262, 0.0
      %s2344 = scalar_lea.vmem %s221, %s340
      %2345 = vst [vmem:[%s2344] sm:$0xff] %v2312
      %2346 = vst [vmem:[%s2344 + $0x8] sm:$0xff] %v2218
      %2347 = vst [vmem:[%s2344 + $0x10] sm:$0x3] %v2328
      %2348 = vst [vmem:[%s2344 + $0x18] sm:$0xff] %v2313
      %2349 = vst [vmem:[%s2344 + $0x20] sm:$0xff] %v2221
      %2350 = vst [vmem:[%s2344 + $0x28] sm:$0x3] %v2329
      %2351 = vst [vmem:[%s2344 + $0x30] sm:$0xff] %v2314
      %2352 = vst [vmem:[%s2344 + $0x38] sm:$0xff] %v2224
      %2353 = vst [vmem:[%s2344 + $0x40] sm:$0x3] %v2330
      %2354 = vst [vmem:[%s2344 + $0x48] sm:$0xff] %v2315
      %2355 = vst [vmem:[%s2344 + $0x50] sm:$0xff] %v2227
      %2356 = vst [vmem:[%s2344 + $0x58] sm:$0x3] %v2331
      %2357 = vst [vmem:[%s2344 + $0x60] sm:$0xff] %v2316
      %2358 = vst [vmem:[%s2344 + $0x68] sm:$0xff] %v2230
      %2359 = vst [vmem:[%s2344 + $0x70] sm:$0x3] %v2332
      %2360 = vst [vmem:[%s2344 + $0x78] sm:$0xff] %v2317
      %2361 = vst [vmem:[%s2344 + $0x80] sm:$0xff] %v2233
      %2362 = vst [vmem:[%s2344 + $0x88] sm:$0x3] %v2333
      %2363 = vst [vmem:[%s2344 + $0x90] sm:$0xff] %v2318
      %2364 = vst [vmem:[%s2344 + $0x98] sm:$0xff] %v2236
      %2365 = vst [vmem:[%s2344 + $0xa0] sm:$0x3] %v2334
      %2366 = vst [vmem:[%s2344 + $0xa8] sm:$0xff] %v2319
      %2367 = vst [vmem:[%s2344 + $0xb0] sm:$0xff] %v2239
      %2368 = vst [vmem:[%s2344 + $0xb8] sm:$0x3] %v2335
      %2369 = vst [vmem:[%s2344 + $0xc0] sm:$0xff] %v2320
      %2370 = vst [vmem:[%s2344 + $0xc8] sm:$0xff] %v2242
      %2371 = vst [vmem:[%s2344 + $0xd0] sm:$0x3] %v2336
      %2372 = vst [vmem:[%s2344 + $0xd8] sm:$0xff] %v2321
      %2373 = vst [vmem:[%s2344 + $0xe0] sm:$0xff] %v2245
      %2374 = vst [vmem:[%s2344 + $0xe8] sm:$0x3] %v2337
      %2375 = vst [vmem:[%s2344 + $0xf0] sm:$0xff] %v2322
      %2376 = vst [vmem:[%s2344 + $0xf8] sm:$0xff] %v2248
      %2377 = vst [vmem:[%s2344 + $0x100] sm:$0x3] %v2338
      %2378 = vst [vmem:[%s2344 + $0x108] sm:$0xff] %v2323
      %2379 = vst [vmem:[%s2344 + $0x110] sm:$0xff] %v2251
      %2380 = vst [vmem:[%s2344 + $0x118] sm:$0x3] %v2339
      %2381 = vst [vmem:[%s2344 + $0x120] sm:$0xff] %v2324
      %2382 = vst [vmem:[%s2344 + $0x128] sm:$0xff] %v2254
      %2383 = vst [vmem:[%s2344 + $0x130] sm:$0x3] %v2340
      %2384 = vst [vmem:[%s2344 + $0x138] sm:$0xff] %v2325
      %2385 = vst [vmem:[%s2344 + $0x140] sm:$0xff] %v2257
      %2386 = vst [vmem:[%s2344 + $0x148] sm:$0x3] %v2341
      %2387 = vst [vmem:[%s2344 + $0x150] sm:$0xff] %v2326
      %2388 = vst [vmem:[%s2344 + $0x158] sm:$0xff] %v2260
      %2389 = vst [vmem:[%s2344 + $0x160] sm:$0x3] %v2342
      %2390 = vst [vmem:[%s2344 + $0x168] sm:$0xff] %v2327
      %2391 = vst [vmem:[%s2344 + $0x170] sm:$0xff] %v2263
      %2392 = vst [vmem:[%s2344 + $0x178] sm:$0x3] %v2343
      %p2393 = scmp.lt.s32.totalorder %s19, 1
      %s2394 = scalar_select %p2393, %s19, 1
      %p2395 = scmp.lt.s32.totalorder %s18, 0
      %s2396 = scalar_select %p2395, %s18, 0
      %s2397 = smul.addr %s2394, 54
      %s2398 = sadd.s32 %s2396, %s2397
      %s2399 = smul.addr %s2398, 8
      %s2400 = scalar_lea.vmem %s3, %s2399
      // Predicated region
      $region33: #{resblock_forward.2} parent=31 // pred_check
        %p2401 = pneg %p124
      $region34: #{resblock_forward.2} parent=31 // pred_check_branch
        %2403 = sbr.rel (%p2401) target = $region36
      $region35: #{resblock_forward.2} parent=31 // pred_region
        _
      $region36: #{resblock_forward.2} parent=31 // pred_fallthru
        _
    $region32: #{resblock_forward.2} parent=5 // pred_fallthru
      _
    %p2404 = scmp.le.s32.totalorder 2, %s9
    // Predicated region
    $region37: #{resblock_forward.2} parent=5 // pred_check
      %p2405 = pneg %p2404
    $region38: #{resblock_forward.2} parent=5 // pred_check_branch
      %2407 = sbr.rel (%p2405) target = $region40
    $region39: #{resblock_forward.2} parent=5 // pred_region
      %s2408 = ssub.s32 %s9, 2
      // Predicated region
      $region41: #{resblock_forward.2} parent=39 // pred_check
        %p2409 = pneg %p130
      $region42: #{resblock_forward.2} parent=39 // pred_check_branch
        %2411 = sbr.rel (%p2409) target = $region44
      $region43: #{resblock_forward.2} parent=39 // pred_region
        %p2412 = scmp.lt.s32.totalorder %s21, 1
        %s2413 = scalar_select %p2412, %s21, 1
        %p2414 = scmp.lt.s32.totalorder %s20, 0
        %s2415 = scalar_select %p2414, %s20, 0
        %s2416 = smul.addr %s2413, 54
        %s2417 = sadd.s32 %s2415, %s2416
        %s2418 = smul.addr %s2417, 8
        %s2419 = scalar_lea.vmem %s3, %s2418
      $region44: #{resblock_forward.2} parent=39 // pred_fallthru
        _
    $region40: #{resblock_forward.2} parent=5 // pred_fallthru
      _
  $region6: #{resblock_forward.2} parent=0 // loop_footer
    %s13 = sadd.s32 1, %s9
  $region7: #{resblock_forward.2} parent=0 // loop_footer_branch
    %8 = sbr.rel target = $region3
  $region8: #{resblock_forward.2} parent=0 // loop_exit
    _

// kernel: resblock_forward.3
$region0: #{resblock_forward.3}
  #allocation0 [shape = 'u32[]', space=smem, size = 0x4, offset = 0x4, fixed_abs, tag = 'smem constant byte address 0x4 - core index']
  #allocation1 [shape = 'u32[144,128]{1,0:T(1,128)}', space=vmem, size = 0x12000, scoped, tag = 'internal scratch']
  %s0 = inlined_call_operand.vmem [shape: f32[2,18,18,128], index: 0, kind: input, shape index: {}]
  %s1 = inlined_call_operand.vmem [shape: f32[1152,128], index: 1, kind: input, shape index: {}]
  %s2 = inlined_call_operand.vmem [shape: f32[1,128], index: 2, kind: input, shape index: {}]
  %s3 = inlined_call_operand.vmem [shape: f32[2,256,4], index: 3, kind: input, shape index: {}]
  %s4 = inlined_call_operand.vmem [shape: f32[4,128], index: 4, kind: input, shape index: {}]
  %s5 = inlined_call_operand.vmem [shape: f32[2,256,128], index: 5, kind: output, shape index: {}]
  %s6 = sld [smem:[#allocation0]]
  $region53: #{resblock_forward.3} parent=0
    _
  %s8 = ssub.s32 1, %s6
  %s9 = scalar_select 0, %s8, %s6
  loop: start=0, step=1, limit=4
  $region2: #{resblock_forward.3} parent=0 // loop_pre_header
    _
  $region3: #{resblock_forward.3} parent=0 // loop_header
    %s11 = sphi 0, %s15
    %p12 = scmp.ge.s32.totalorder %s11, 4
    %s18 = sphi 0, %s30
    %s19 = sphi 0, %s26
    %s20 = sphi 0, %s18
    %s21 = sphi 0, %s19
    %s22 = sphi 0, %s20
    %s23 = sphi 0, %s21
    %s33 = sphi 0, %s35
    %s36 = sphi 0, %s33
    %s37 = sphi 0, %s36
    %s53 = sphi 0, %s37
    %s59 = sphi 0, %s61
    %s62 = sphi 0, %s59
    %s63 = sphi 0, %s62
    %s79 = sphi 0, %s63
    %s85 = sphi 0, %s87
    %s88 = sphi 0, %s85
    %s89 = sphi 0, %s88
    %s105 = sphi 0, %s89
    %s111 = sphi 0, %s113
    %s114 = sphi 0, %s111
    %s115 = sphi 0, %s114
    %s131 = sphi 0, %s115
    %s137 = sphi 0, %s139
    %s140 = sphi 0, %s137
    %s141 = sphi 0, %s140
    %s157 = sphi 0, %s141
    %s165 = sphi 0, %s167
    %s168 = sphi 0, %s165
    %s169 = sphi 0, %s168
    %s185 = sphi 0, %s169
  $region4: #{resblock_forward.3} parent=0 // loop_header_branch
    %14 = sbr.rel (%p12) target = $region8
  $region5: #{resblock_forward.3} parent=0 // loop_body
    %s16 = ssub.s32 %s11, 1
    %s17 = ssub.s32 %s11, 2
    %s24 = sadd.s32 1, %s19
    %p25 = scmp.ge.s32.totalorder %s24, 2
    %s26 = scalar_select %p25, 0, %s24
    %s27 = sadd.s32 1, %s18
    %s28 = scalar_select %p25, %s27, %s18
    %p29 = scmp.ge.s32.totalorder %s28, 1
    %s30 = scalar_select %p29, 0, %s28
    %s31 = ssub.s32 %s19, %s26
    %p32 = scmp.eq.s32.totalorder %s31, 0
    %s34 = sadd.s32 %s33, 1
    %s35 = scalar_select %p32, %s33, %s34
    %p38 = pneg %p32
    %p39 = scmp.eq.s32.totalorder %s11, 1
    %p40 = por %p38, %p39
    %p41 = scmp.ne.s32.totalorder %s33, %s36
    %p42 = scmp.eq.s32.totalorder %s11, 0
    %p43 = por %p41, %p42
    %p44 = scmp.ne.s32.totalorder %s33, %s36
    %p45 = scmp.eq.s32.totalorder %s16, 1
    %p46 = por %p44, %p45
    %p47 = scmp.ne.s32.totalorder %s36, %s37
    %p48 = scmp.eq.s32.totalorder %s16, 0
    %p49 = por %p47, %p48
    %p50 = scmp.ne.s32.totalorder %s36, %s37
    %p51 = scmp.eq.s32.totalorder %s17, 1
    %p52 = por %p50, %p51
    %p54 = scmp.ne.s32.totalorder %s37, %s53
    %p55 = scmp.eq.s32.totalorder %s17, 0
    %p56 = por %p54, %p55
    %s57 = ssub.s32 %s18, %s30
    %p58 = scmp.eq.s32.totalorder %s57, 0
    %s60 = sadd.s32 %s59, 1
    %s61 = scalar_select %p58, %s59, %s60
    %p64 = pneg %p58
    %p65 = scmp.eq.s32.totalorder %s11, 1
    %p66 = por %p64, %p65
    %p67 = scmp.ne.s32.totalorder %s59, %s62
    %p68 = scmp.eq.s32.totalorder %s11, 0
    %p69 = por %p67, %p68
    %p70 = scmp.ne.s32.totalorder %s59, %s62
    %p71 = scmp.eq.s32.totalorder %s16, 1
    %p72 = por %p70, %p71
    %p73 = scmp.ne.s32.totalorder %s62, %s63
    %p74 = scmp.eq.s32.totalorder %s16, 0
    %p75 = por %p73, %p74
    %p76 = scmp.ne.s32.totalorder %s62, %s63
    %p77 = scmp.eq.s32.totalorder %s17, 1
    %p78 = por %p76, %p77
    %p80 = scmp.ne.s32.totalorder %s63, %s79
    %p81 = scmp.eq.s32.totalorder %s17, 0
    %p82 = por %p80, %p81
    %s83 = ssub.s32 %s18, %s30
    %p84 = scmp.eq.s32.totalorder %s83, 0
    %s86 = sadd.s32 %s85, 1
    %s87 = scalar_select %p84, %s85, %s86
    %p90 = pneg %p84
    %p91 = scmp.eq.s32.totalorder %s11, 1
    %p92 = por %p90, %p91
    %p93 = scmp.ne.s32.totalorder %s85, %s88
    %p94 = scmp.eq.s32.totalorder %s11, 0
    %p95 = por %p93, %p94
    %p96 = scmp.ne.s32.totalorder %s85, %s88
    %p97 = scmp.eq.s32.totalorder %s16, 1
    %p98 = por %p96, %p97
    %p99 = scmp.ne.s32.totalorder %s88, %s89
    %p100 = scmp.eq.s32.totalorder %s16, 0
    %p101 = por %p99, %p100
    %p102 = scmp.ne.s32.totalorder %s88, %s89
    %p103 = scmp.eq.s32.totalorder %s17, 1
    %p104 = por %p102, %p103
    %p106 = scmp.ne.s32.totalorder %s89, %s105
    %p107 = scmp.eq.s32.totalorder %s17, 0
    %p108 = por %p106, %p107
    %s109 = ssub.s32 %s19, %s26
    %p110 = scmp.eq.s32.totalorder %s109, 0
    %s112 = sadd.s32 %s111, 1
    %s113 = scalar_select %p110, %s111, %s112
    %p116 = pneg %p110
    %p117 = scmp.eq.s32.totalorder %s11, 1
    %p118 = por %p116, %p117
    %p119 = scmp.ne.s32.totalorder %s111, %s114
    %p120 = scmp.eq.s32.totalorder %s11, 0
    %p121 = por %p119, %p120
    %p122 = scmp.ne.s32.totalorder %s111, %s114
    %p123 = scmp.eq.s32.totalorder %s16, 1
    %p124 = por %p122, %p123
    %p125 = scmp.ne.s32.totalorder %s114, %s115
    %p126 = scmp.eq.s32.totalorder %s16, 0
    %p127 = por %p125, %p126
    %p128 = scmp.ne.s32.totalorder %s114, %s115
    %p129 = scmp.eq.s32.totalorder %s17, 1
    %p130 = por %p128, %p129
    %p132 = scmp.ne.s32.totalorder %s115, %s131
    %p133 = scmp.eq.s32.totalorder %s17, 0
    %p134 = por %p132, %p133
    %s135 = ssub.s32 %s18, %s30
    %p136 = scmp.eq.s32.totalorder %s135, 0
    %s138 = sadd.s32 %s137, 1
    %s139 = scalar_select %p136, %s137, %s138
    %p142 = pneg %p136
    %p143 = scmp.eq.s32.totalorder %s11, 1
    %p144 = por %p142, %p143
    %p145 = scmp.ne.s32.totalorder %s137, %s140
    %p146 = scmp.eq.s32.totalorder %s11, 0
    %p147 = por %p145, %p146
    %p148 = scmp.ne.s32.totalorder %s137, %s140
    %p149 = scmp.eq.s32.totalorder %s16, 1
    %p150 = por %p148, %p149
    %p151 = scmp.ne.s32.totalorder %s140, %s141
    %p152 = scmp.eq.s32.totalorder %s16, 0
    %p153 = por %p151, %p152
    %p154 = scmp.ne.s32.totalorder %s140, %s141
    %p155 = scmp.eq.s32.totalorder %s17, 1
    %p156 = por %p154, %p155
    %p158 = scmp.ne.s32.totalorder %s141, %s157
    %p159 = scmp.eq.s32.totalorder %s17, 0
    %p160 = por %p158, %p159
    %s161 = ssub.s32 %s19, %s26
    %s162 = ssub.s32 %s18, %s30
    %s163 = sor.u32 %s161, %s162
    %p164 = scmp.eq.s32.totalorder %s163, 0
    %s166 = sadd.s32 %s165, 1
    %s167 = scalar_select %p164, %s165, %s166
    %p170 = pneg %p164
    %p171 = scmp.eq.s32.totalorder %s11, 1
    %p172 = por %p170, %p171
    %p173 = scmp.ne.s32.totalorder %s165, %s168
    %p174 = scmp.eq.s32.totalorder %s11, 0
    %p175 = por %p173, %p174
    %p176 = scmp.ne.s32.totalorder %s165, %s168
    %p177 = scmp.eq.s32.totalorder %s16, 1
    %p178 = por %p176, %p177
    %p179 = scmp.ne.s32.totalorder %s168, %s169
    %p180 = scmp.eq.s32.totalorder %s16, 0
    %p181 = por %p179, %p180
    %p182 = scmp.ne.s32.totalorder %s168, %s169
    %p183 = scmp.eq.s32.totalorder %s17, 1
    %p184 = por %p182, %p183
    %p186 = scmp.ne.s32.totalorder %s169, %s185
    %p187 = scmp.eq.s32.totalorder %s17, 0
    %p188 = por %p186, %p187
    %p189 = scmp.le.s32.totalorder 1, %s11
    %p190 = scmp.lt.s32.totalorder %s11, 3
    %p191 = pnand %p189, %p190
    %p192 = pneg %p191
    // Predicated region
    $region9: #{resblock_forward.3} parent=5 // pred_check
      _
    $region10: #{resblock_forward.3} parent=5 // pred_check_branch
      %194 = sbr.rel (%p191) target = $region12
    $region11: #{resblock_forward.3} parent=5 // pred_region
      %s195 = ssub.s32 %s11, 1
      // Predicated region
      $region13: #{resblock_forward.3} parent=11 // pred_check
        %p196 = pneg %p75
      $region14: #{resblock_forward.3} parent=11 // pred_check_branch
        %198 = sbr.rel (%p196) target = $region16
      $region15: #{resblock_forward.3} parent=11 // pred_region
        %p199 = scmp.lt.s32.totalorder %s20, 0
        %s200 = scalar_select %p199, %s20, 0
        %s201 = smul.addr %s200, 8
        %s202 = scalar_lea.vmem %s1, %s201
      $region16: #{resblock_forward.3} parent=11 // pred_fallthru
        _
      // Predicated region
      $region17: #{resblock_forward.3} parent=11 // pred_check
        %p203 = pneg %p101
      $region18: #{resblock_forward.3} parent=11 // pred_check_branch
        %205 = sbr.rel (%p203) target = $region20
      $region19: #{resblock_forward.3} parent=11 // pred_region
        %p206 = scmp.lt.s32.totalorder %s20, 0
        %s207 = scalar_select %p206, %s20, 0
        %s208 = scalar_lea.vmem %s2, %s207
      $region20: #{resblock_forward.3} parent=11 // pred_fallthru
        _
      // Predicated region
      $region21: #{resblock_forward.3} parent=11 // pred_check
        %p209 = pneg %p153
      $region22: #{resblock_forward.3} parent=11 // pred_check_branch
        %211 = sbr.rel (%p209) target = $region24
      $region23: #{resblock_forward.3} parent=11 // pred_region
        %p212 = scmp.lt.s32.totalorder %s20, 0
        %s213 = scalar_select %p212, %s20, 0
        %s214 = smul.addr %s213, 4
        %s215 = scalar_lea.vmem %s4, %s214
      $region24: #{resblock_forward.3} parent=11 // pred_fallthru
        _
    $region12: #{resblock_forward.3} parent=5 // pred_fallthru
      _
    %p216 = scmp.lt.s32.totalorder %s11, 2
    // Predicated region
    $region25: #{resblock_forward.3} parent=5 // pred_check
      %p217 = pneg %p216
    $region26: #{resblock_forward.3} parent=5 // pred_check_branch
      %219 = sbr.rel (%p217) target = $region28
    $region27: #{resblock_forward.3} parent=5 // pred_region
      // Predicated region
      $region29: #{resblock_forward.3} parent=27 // pred_check
        %p220 = pneg %p43
      $region30: #{resblock_forward.3} parent=27 // pred_check_branch
        %222 = sbr.rel (%p220) target = $region32
      $region31: #{resblock_forward.3} parent=27 // pred_region
        %p223 = scmp.lt.s32.totalorder %s19, 1
        %s224 = scalar_select %p223, %s19, 1
        %s225 = smul.addr %s224, 54
        %s226 = smul.addr %s225, 8
        %s227 = scalar_lea.vmem %s0, %s226
      $region32: #{resblock_forward.3} parent=27 // pred_fallthru
        _
      // Predicated region
      $region33: #{resblock_forward.3} parent=27 // pred_check
        %p228 = pneg %p121
      $region34: #{resblock_forward.3} parent=27 // pred_check_branch
        %230 = sbr.rel (%p228) target = $region36
      $region35: #{resblock_forward.3} parent=27 // pred_region
        %p231 = scmp.lt.s32.totalorder %s19, 1
        %s232 = scalar_select %p231, %s19, 1
        %s233 = smul.addr %s232, 32
        %s234 = smul.addr %s233, 8
        %s235 = scalar_lea.vmem %s3, %s234
      $region36: #{resblock_forward.3} parent=27 // pred_fallthru
        _
    $region28: #{resblock_forward.3} parent=5 // pred_fallthru
      _
    %p236 = scmp.le.s32.totalorder 1, %s11
    %p237 = scmp.lt.s32.totalorder %s11, 3
    %p238 = pnand %p236, %p237
    %p239 = pneg %p238
    // Predicated region
    $region37: #{resblock_forward.3} parent=5 // pred_check
      _
    $region38: #{resblock_forward.3} parent=5 // pred_check_branch
      %241 = sbr.rel (%p238) target = $region40
    $region39: #{resblock_forward.3} parent=5 // pred_region
      %s242 = ssub.s32 %s11, 1
      %p243 = scmp.lt.s32.totalorder %s21, 1
      %s244 = scalar_select %p243, %s21, 1
      %s245 = smul.addr %s244, 54
      %s246 = smul.addr %s245, 8
      %s247 = scalar_lea.vmem %s0, %s246
      %p248 = pneg %p49
      %p249 = pneg %p46
      %p250 = scmp.lt.s32.totalorder %s20, 0
      %s251 = scalar_select %p250, %s20, 0
      %s252 = smul.addr %s251, 8
      %s253 = scalar_lea.vmem %s1, %s252
      %p254 = pneg %p75
      %p255 = pneg %p72
      %p256 = scmp.lt.s32.totalorder %s20, 0
      %s257 = scalar_select %p256, %s20, 0
      %s258 = scalar_lea.vmem %s2, %s257
      %p259 = pneg %p101
      %p260 = pneg %p98
      %p261 = scmp.lt.s32.totalorder %s21, 1
      %s262 = scalar_select %p261, %s21, 1
      %s263 = smul.addr %s262, 32
      %s264 = smul.addr %s263, 8
      %s265 = scalar_lea.vmem %s3, %s264
      %p266 = pneg %p127
      %p267 = pneg %p124
      %p268 = scmp.lt.s32.totalorder %s20, 0
      %s269 = scalar_select %p268, %s20, 0
      %s270 = smul.addr %s269, 4
      %s271 = scalar_lea.vmem %s4, %s270
      %p272 = pneg %p153
      %p273 = pneg %p150
      %p274 = pneg %p181
      %p275 = pneg %p178
      %p276 = scmp.lt.s32.totalorder %s21, 1
      %s277 = scalar_select %p276, %s21, 1
      %p278 = scmp.lt.s32.totalorder %s20, 0
      %s279 = scalar_select %p278, %s20, 0
      %s280 = smul.addr %s277, 32
      %s281 = sadd.s32 %s279, %s280
      %s282 = smul.addr %s281, 8
      %s283 = scalar_lea.vmem %s5, %s282
      %p284 = scmp.lt.s32.totalorder %s21, 1
      %s285 = scalar_select %p284, %s21, 1
      %s286 = smul.addr %s285, 54
      %s287 = smul.addr %s286, 8
      %s288 = scalar_lea.vmem %s0, %s287
      %p289 = scmp.lt.s32.totalorder %s20, 0
      %s290 = scalar_select %p289, %s20, 0
      %s291 = smul.addr %s290, 8
      %s292 = scalar_lea.vmem %s1, %s291
      %p293 = scmp.lt.s32.totalorder %s20, 0
      %s294 = scalar_select %p293, %s20, 0
      %s295 = scalar_lea.vmem %s2, %s294
      %p296 = scmp.lt.s32.totalorder %s21, 1
      %s297 = scalar_select %p296, %s21, 1
      %s298 = smul.addr %s297, 32
      %s299 = smul.addr %s298, 8
      %s300 = scalar_lea.vmem %s3, %s299
      %p301 = scmp.lt.s32.totalorder %s20, 0
      %s302 = scalar_select %p301, %s20, 0
      %s303 = smul.addr %s302, 4
      %s304 = scalar_lea.vmem %s4, %s303
      %p305 = scmp.lt.s32.totalorder %s21, 1
      %s306 = scalar_select %p305, %s21, 1
      %p307 = scmp.lt.s32.totalorder %s20, 0
      %s308 = scalar_select %p307, %s20, 0
      %s309 = smul.addr %s306, 32
      %s310 = sadd.s32 %s308, %s309
      %s311 = smul.addr %s310, 8
      %s312 = scalar_lea.vmem %s5, %s311
      %v313 = vld [vmem:[%s295] sm:$0x1]
      %v315 = vlaneseq
      %v316 = vshrl.u32 %v315, 7
      %v317 = vsub.s32 0, %v316
      %v318 = vrot.slane %v313, %v317
      %v320 = vld [vmem:[%s304] sm:$0xf]
      %s321 = smul.u32 0, 16
      %s322 = smul.u32 0, 24
      %s323 = scalar_lea.vmem %s288, %s322
      %v324 = vld [vmem:[%s323] sm:$0xff]
      %v325 = vld [vmem:[%s323 + $0x8] sm:$0xff]
      %v326 = vld [vmem:[%s323 + $0x18] sm:$0xff]
      %v327 = vld [vmem:[%s323 + $0x20] sm:$0xff]
      %v328 = vld [vmem:[%s323 + $0x30] sm:$0xff]
      %v329 = vld [vmem:[%s323 + $0x38] sm:$0xff]
      %v330 = vld [vmem:[%s323 + $0x48] sm:$0xff]
      %v331 = vld [vmem:[%s323 + $0x50] sm:$0xff]
      %v332 = vld [vmem:[%s323 + $0x60] sm:$0xff]
      %v333 = vld [vmem:[%s323 + $0x68] sm:$0xff]
      %v334 = vld [vmem:[%s323 + $0x78] sm:$0xff]
      %v335 = vld [vmem:[%s323 + $0x80] sm:$0xff]
      %v336 = vld [vmem:[%s323 + $0x90] sm:$0xff]
      %v337 = vld [vmem:[%s323 + $0x98] sm:$0xff]
      %v338 = vld [vmem:[%s323 + $0xa8] sm:$0xff]
      %v339 = vld [vmem:[%s323 + $0xb0] sm:$0xff]
      %v340 = vld [vmem:[%s323 + $0xc0] sm:$0xff]
      %v341 = vld [vmem:[%s323 + $0xc8] sm:$0xff]
      %v342 = vld [vmem:[%s323 + $0xd8] sm:$0xff]
      %v343 = vld [vmem:[%s323 + $0xe0] sm:$0xff]
      %v344 = vld [vmem:[%s323 + $0xf0] sm:$0xff]
      %v345 = vld [vmem:[%s323 + $0xf8] sm:$0xff]
      %v346 = vld [vmem:[%s323 + $0x108] sm:$0xff]
      %v347 = vld [vmem:[%s323 + $0x110] sm:$0xff]
      %v348 = vld [vmem:[%s323 + $0x120] sm:$0xff]
      %v349 = vld [vmem:[%s323 + $0x128] sm:$0xff]
      %v350 = vld [vmem:[%s323 + $0x138] sm:$0xff]
      %v351 = vld [vmem:[%s323 + $0x140] sm:$0xff]
      %v352 = vld [vmem:[%s323 + $0x150] sm:$0xff]
      %v353 = vld [vmem:[%s323 + $0x158] sm:$0xff]
      %v354 = vld [vmem:[%s323 + $0x168] sm:$0xff]
      %v355 = vld [vmem:[%s323 + $0x170] sm:$0xff]
      %v356 = vld [vmem:[%s292] sm:$0xff]
      %v357 = vld [vmem:[%s292 + $0x8] sm:$0xff]
      %v358 = vld [vmem:[%s292 + $0x10] sm:$0xff]
      %v359 = vld [vmem:[%s292 + $0x18] sm:$0xff]
      %v360 = vld [vmem:[%s292 + $0x20] sm:$0xff]
      %v361 = vld [vmem:[%s292 + $0x28] sm:$0xff]
      %v362 = vld [vmem:[%s292 + $0x30] sm:$0xff]
      %v363 = vld [vmem:[%s292 + $0x38] sm:$0xff]
      %v364 = vld [vmem:[%s292 + $0x40] sm:$0xff]
      %v365 = vld [vmem:[%s292 + $0x48] sm:$0xff]
      %v366 = vld [vmem:[%s292 + $0x50] sm:$0xff]
      %v367 = vld [vmem:[%s292 + $0x58] sm:$0xff]
      %v368 = vld [vmem:[%s292 + $0x60] sm:$0xff]
      %v369 = vld [vmem:[%s292 + $0x68] sm:$0xff]
      %v370 = vld [vmem:[%s292 + $0x70] sm:$0xff]
      %v371 = vld [vmem:[%s292 + $0x78] sm:$0xff]
      %v372 = vld [vmem:[%s323 + $0x1] sm:$0xff]
      %v373 = vld [vmem:[%s323 + $0x9] sm:$0xff]
      %v374 = vld [vmem:[%s323 + $0x19] sm:$0xff]
      %v375 = vld [vmem:[%s323 + $0x21] sm:$0xff]
      %v376 = vld [vmem:[%s323 + $0x31] sm:$0xff]
      %v377 = vld [vmem:[%s323 + $0x39] sm:$0xff]
      %v378 = vld [vmem:[%s323 + $0x49] sm:$0xff]
      %v379 = vld [vmem:[%s323 + $0x51] sm:$0xff]
      %v380 = vld [vmem:[%s323 + $0x61] sm:$0xff]
      %v381 = vld [vmem:[%s323 + $0x69] sm:$0xff]
      %v382 = vld [vmem:[%s323 + $0x79] sm:$0xff]
      %v383 = vld [vmem:[%s323 + $0x81] sm:$0xff]
      %v384 = vld [vmem:[%s323 + $0x91] sm:$0xff]
      %v385 = vld [vmem:[%s323 + $0x99] sm:$0xff]
      %v386 = vld [vmem:[%s323 + $0xa9] sm:$0xff]
      %v387 = vld [vmem:[%s323 + $0xb1] sm:$0xff]
      %v388 = vld [vmem:[%s323 + $0xc1] sm:$0xff]
      %v389 = vld [vmem:[%s323 + $0xc9] sm:$0xff]
      %v390 = vld [vmem:[%s323 + $0xd9] sm:$0xff]
      %v391 = vld [vmem:[%s323 + $0xe1] sm:$0xff]
      %v392 = vld [vmem:[%s323 + $0xf1] sm:$0xff]
      %v393 = vld [vmem:[%s323 + $0xf9] sm:$0xff]
      %v394 = vld [vmem:[%s323 + $0x109] sm:$0xff]
      %v395 = vld [vmem:[%s323 + $0x111] sm:$0xff]
      %v396 = vld [vmem:[%s323 + $0x121] sm:$0xff]
      %v397 = vld [vmem:[%s323 + $0x129] sm:$0xff]
      %v398 = vld [vmem:[%s323 + $0x139] sm:$0xff]
      %v399 = vld [vmem:[%s323 + $0x141] sm:$0xff]
      %v400 = vld [vmem:[%s323 + $0x151] sm:$0xff]
      %v401 = vld [vmem:[%s323 + $0x159] sm:$0xff]
      %v402 = vld [vmem:[%s323 + $0x169] sm:$0xff]
      %v403 = vld [vmem:[%s323 + $0x171] sm:$0xff]
      %v404 = vld [vmem:[%s292 + $0x80] sm:$0xff]
      %v405 = vld [vmem:[%s292 + $0x88] sm:$0xff]
      %v406 = vld [vmem:[%s292 + $0x90] sm:$0xff]
      %v407 = vld [vmem:[%s292 + $0x98] sm:$0xff]
      %v408 = vld [vmem:[%s292 + $0xa0] sm:$0xff]
      %v409 = vld [vmem:[%s292 + $0xa8] sm:$0xff]
      %v410 = vld [vmem:[%s292 + $0xb0] sm:$0xff]
      %v411 = vld [vmem:[%s292 + $0xb8] sm:$0xff]
      %v412 = vld [vmem:[%s292 + $0xc0] sm:$0xff]
      %v413 = vld [vmem:[%s292 + $0xc8] sm:$0xff]
      %v414 = vld [vmem:[%s292 + $0xd0] sm:$0xff]
      %v415 = vld [vmem:[%s292 + $0xd8] sm:$0xff]
      %v416 = vld [vmem:[%s292 + $0xe0] sm:$0xff]
      %v417 = vld [vmem:[%s292 + $0xe8] sm:$0xff]
      %v418 = vld [vmem:[%s292 + $0xf0] sm:$0xff]
      %v419 = vld [vmem:[%s292 + $0xf8] sm:$0xff]
      %420 = vmatprep.subr.mxu0 0.0
      %421 = vmatpush1.msra.mxu0 %v404
      %422 = vmatprep.subr.mxu0 0.0
      %423 = vmatpush1.msra.mxu0 %v405
      %424 = vmatprep.subr.mxu0 0.0
      %425 = vmatpush1.msra.mxu0 %v406
      %426 = vmatprep.subr.mxu0 0.0
      %427 = vmatpush1.msra.mxu0 %v407
      %428 = vmatprep.subr.mxu0 0.0
      %429 = vmatpush1.msra.mxu0 %v408
      %430 = vmatprep.subr.mxu0 0.0
      %431 = vmatpush1.msra.mxu0 %v409
      %432 = vmatprep.subr.mxu0 0.0
      %433 = vmatpush1.msra.mxu0 %v410
      %434 = vmatprep.subr.mxu0 0.0
      %435 = vmatpush1.msra.mxu0 %v411
      %436 = vmatprep.subr.mxu0 0.0
      %437 = vmatpush1.msra.mxu0 %v412
      %438 = vmatprep.subr.mxu0 0.0
      %439 = vmatpush1.msra.mxu0 %v413
      %440 = vmatprep.subr.mxu0 0.0
      %441 = vmatpush1.msra.mxu0 %v414
      %442 = vmatprep.subr.mxu0 0.0
      %443 = vmatpush1.msra.mxu0 %v415
      %444 = vmatprep.subr.mxu0 0.0
      %445 = vmatpush1.msra.mxu0 %v416
      %446 = vmatprep.subr.mxu0 0.0
      %447 = vmatpush1.msra.mxu0 %v417
      %448 = vmatprep.subr.mxu0 0.0
      %449 = vmatpush1.msra.mxu0 %v418
      %450 = vmatprep.subr.mxu0 0.0
      %451 = vmatpush1.msra.mxu0 %v419
      %452 = vmatprep.subr.mxu0 0.0
      %453 = vmatpush1.msra.mxu0 0.0
      %454 = vmatprep.subr.mxu0 0.0
      %455 = vmatpush1.msra.mxu0 0.0
      %456 = vmatprep.subr.mxu0 0.0
      %457 = vmatpush1.msra.mxu0 0.0
      %458 = vmatprep.subr.mxu0 0.0
      %459 = vmatpush1.msra.mxu0 0.0
      %460 = vmatprep.subr.mxu0 0.0
      %461 = vmatpush1.msra.mxu0 0.0
      %462 = vmatprep.subr.mxu0 0.0
      %463 = vmatpush1.msra.mxu0 0.0
      %464 = vmatprep.subr.mxu0 0.0
      %465 = vmatpush1.msra.mxu0 0.0
      %466 = vmatprep.subr.mxu0 0.0
      %467 = vmatpush1.msra.mxu0 0.0
      %468 = vmatprep.subr.mxu0 0.0
      %469 = vmatpush1.msra.mxu0 0.0
      %470 = vmatprep.subr.mxu0 0.0
      %471 = vmatpush1.msra.mxu0 0.0
      %472 = vmatprep.subr.mxu0 0.0
      %473 = vmatpush1.msra.mxu0 0.0
      %474 = vmatprep.subr.mxu0 0.0
      %475 = vmatpush1.msra.mxu0 0.0
      %476 = vmatprep.subr.mxu0 0.0
      %477 = vmatpush1.msra.mxu0 0.0
      %478 = vmatprep.subr.mxu0 0.0
      %479 = vmatpush1.msra.mxu0 0.0
      %480 = vmatprep.subr.mxu0 0.0
      %481 = vmatpush1.msra.mxu0 0.0
      %482 = vmatprep.subr.mxu0 0.0
      %483 = vmatpush1.msra.mxu0 0.0
      %484 = vmatprep.mubr.f32.mxu0 0.0
      %485 = vmatmul.mubr.f32.gmra.mrb[0].mxu0 %v372
      %v486 = vpop.f32.mrb[0].mxu0
      %v487 = vadd.f32 0.0, %v486
      %v488 = vpop.f32.mrb[0].mxu0
      %489 = vmatprep.mubr.f32.mxu0 0.0
      %490 = vmatmul.mubr.f32.gmra.mrb[0].mxu0 %v373
      %v491 = vpop.f32.mrb[0].mxu0
      %v492 = vadd.f32 0.0, %v491
      %v493 = vpop.f32.mrb[0].mxu0
      %494 = vmatprep.mubr.f32.mxu0 0.0
      %495 = vmatmul.mubr.f32.gmra.mrb[0].mxu0 %v374
      %v496 = vpop.f32.mrb[0].mxu0
      %v497 = vadd.f32 0.0, %v496
      %v498 = vpop.f32.mrb[0].mxu0
      %499 = vmatprep.mubr.f32.mxu0 0.0
      %500 = vmatmul.mubr.f32.gmra.mrb[0].mxu0 %v375
      %v501 = vpop.f32.mrb[0].mxu0
      %v502 = vadd.f32 0.0, %v501
      %v503 = vpop.f32.mrb[0].mxu0
      %504 = vmatprep.mubr.f32.mxu0 0.0
      %505 = vmatmul.mubr.f32.gmra.mrb[0].mxu0 %v376
      %v506 = vpop.f32.mrb[0].mxu0
      %v507 = vadd.f32 0.0, %v506
      %v508 = vpop.f32.mrb[0].mxu0
      %509 = vmatprep.mubr.f32.mxu0 0.0
      %510 = vmatmul.mubr.f32.gmra.mrb[0].mxu0 %v377
      %v511 = vpop.f32.mrb[0].mxu0
      %v512 = vadd.f32 0.0, %v511
      %v513 = vpop.f32.mrb[0].mxu0
      %514 = vmatprep.mubr.f32.mxu0 0.0
      %515 = vmatmul.mubr.f32.gmra.mrb[0].mxu0 %v378
      %v516 = vpop.f32.mrb[0].mxu0
      %v517 = vadd.f32 0.0, %v516
      %v518 = vpop.f32.mrb[0].mxu0
      %519 = vmatprep.mubr.f32.mxu0 0.0
      %520 = vmatmul.mubr.f32.gmra.mrb[0].mxu0 %v379
      %v521 = vpop.f32.mrb[0].mxu0
      %v522 = vadd.f32 0.0, %v521
      %v523 = vpop.f32.mrb[0].mxu0
      %524 = vmatprep.mubr.f32.mxu0 0.0
      %525 = vmatmul.mubr.f32.gmra.mrb[0].mxu0 %v380
      %v526 = vpop.f32.mrb[0].mxu0
      %v527 = vadd.f32 0.0, %v526
      %v528 = vpop.f32.mrb[0].mxu0
      %529 = vmatprep.mubr.f32.mxu0 0.0
      %530 = vmatmul.mubr.f32.gmra.mrb[0].mxu0 %v381
      %v531 = vpop.f32.mrb[0].mxu0
      %v532 = vadd.f32 0.0, %v531
      %v533 = vpop.f32.mrb[0].mxu0
      %534 = vmatprep.mubr.f32.mxu0 0.0
      %535 = vmatmul.mubr.f32.gmra.mrb[0].mxu0 %v382
      %v536 = vpop.f32.mrb[0].mxu0
      %v537 = vadd.f32 0.0, %v536
      %v538 = vpop.f32.mrb[0].mxu0
      %539 = vmatprep.mubr.f32.mxu0 0.0
      %540 = vmatmul.mubr.f32.gmra.mrb[0].mxu0 %v383
      %v541 = vpop.f32.mrb[0].mxu0
      %v542 = vadd.f32 0.0, %v541
      %v543 = vpop.f32.mrb[0].mxu0
      %544 = vmatprep.mubr.f32.mxu0 0.0
      %545 = vmatmul.mubr.f32.gmra.mrb[0].mxu0 %v384
      %v546 = vpop.f32.mrb[0].mxu0
      %v547 = vadd.f32 0.0, %v546
      %v548 = vpop.f32.mrb[0].mxu0
      %549 = vmatprep.mubr.f32.mxu0 0.0
      %550 = vmatmul.mubr.f32.gmra.mrb[0].mxu0 %v385
      %v551 = vpop.f32.mrb[0].mxu0
      %v552 = vadd.f32 0.0, %v551
      %v553 = vpop.f32.mrb[0].mxu0
      %554 = vmatprep.mubr.f32.mxu0 0.0
      %555 = vmatmul.mubr.f32.gmra.mrb[0].mxu0 %v386
      %v556 = vpop.f32.mrb[0].mxu0
      %v557 = vadd.f32 0.0, %v556
      %v558 = vpop.f32.mrb[0].mxu0
      %559 = vmatprep.mubr.f32.mxu0 0.0
      %560 = vmatmul.mubr.f32.gmra.mrb[0].mxu0 %v387
      %v561 = vpop.f32.mrb[0].mxu0
      %v562 = vadd.f32 0.0, %v561
      %v563 = vpop.f32.mrb[0].mxu0
      %564 = vmatprep.mubr.f32.mxu0 0.0
      %565 = vmatmul.mubr.f32.gmra.mrb[0].mxu0 %v388
      %v566 = vpop.f32.mrb[0].mxu0
      %v567 = vadd.f32 0.0, %v566
      %v568 = vpop.f32.mrb[0].mxu0
      %569 = vmatprep.mubr.f32.mxu0 0.0
      %570 = vmatmul.mubr.f32.gmra.mrb[0].mxu0 %v389
      %v571 = vpop.f32.mrb[0].mxu0
      %v572 = vadd.f32 0.0, %v571
      %v573 = vpop.f32.mrb[0].mxu0
      %574 = vmatprep.mubr.f32.mxu0 0.0
      %575 = vmatmul.mubr.f32.gmra.mrb[0].mxu0 %v390
      %v576 = vpop.f32.mrb[0].mxu0
      %v577 = vadd.f32 0.0, %v576
      %v578 = vpop.f32.mrb[0].mxu0
      %579 = vmatprep.mubr.f32.mxu0 0.0
      %580 = vmatmul.mubr.f32.gmra.mrb[0].mxu0 %v391
      %v581 = vpop.f32.mrb[0].mxu0
      %v582 = vadd.f32 0.0, %v581
      %v583 = vpop.f32.mrb[0].mxu0
      %584 = vmatprep.mubr.f32.mxu0 0.0
      %585 = vmatmul.mubr.f32.gmra.mrb[0].mxu0 %v392
      %v586 = vpop.f32.mrb[0].mxu0
      %v587 = vadd.f32 0.0, %v586
      %v588 = vpop.f32.mrb[0].mxu0
      %589 = vmatprep.mubr.f32.mxu0 0.0
      %590 = vmatmul.mubr.f32.gmra.mrb[0].mxu0 %v393
      %v591 = vpop.f32.mrb[0].mxu0
      %v592 = vadd.f32 0.0, %v591
      %v593 = vpop.f32.mrb[0].mxu0
      %594 = vmatprep.mubr.f32.mxu0 0.0
      %595 = vmatmul.mubr.f32.gmra.mrb[0].mxu0 %v394
      %v596 = vpop.f32.mrb[0].mxu0
      %v597 = vadd.f32 0.0, %v596
      %v598 = vpop.f32.mrb[0].mxu0
      %599 = vmatprep.mubr.f32.mxu0 0.0
      %600 = vmatmul.mubr.f32.gmra.mrb[0].mxu0 %v395
      %v601 = vpop.f32.mrb[0].mxu0
      %v602 = vadd.f32 0.0, %v601
      %v603 = vpop.f32.mrb[0].mxu0
      %604 = vmatprep.mubr.f32.mxu0 0.0
      %605 = vmatmul.mubr.f32.gmra.mrb[0].mxu0 %v396
      %v606 = vpop.f32.mrb[0].mxu0
      %v607 = vadd.f32 0.0, %v606
      %v608 = vpop.f32.mrb[0].mxu0
      %609 = vmatprep.mubr.f32.mxu0 0.0
      %610 = vmatmul.mubr.f32.gmra.mrb[0].mxu0 %v397
      %v611 = vpop.f32.mrb[0].mxu0
      %v612 = vadd.f32 0.0, %v611
      %v613 = vpop.f32.mrb[0].mxu0
      %614 = vmatprep.mubr.f32.mxu0 0.0
      %615 = vmatmul.mubr.f32.gmra.mrb[0].mxu0 %v398
      %v616 = vpop.f32.mrb[0].mxu0
      %v617 = vadd.f32 0.0, %v616
      %v618 = vpop.f32.mrb[0].mxu0
      %619 = vmatprep.mubr.f32.mxu0 0.0
      %620 = vmatmul.mubr.f32.gmra.mrb[0].mxu0 %v399
      %v621 = vpop.f32.mrb[0].mxu0
      %v622 = vadd.f32 0.0, %v621
      %v623 = vpop.f32.mrb[0].mxu0
      %624 = vmatprep.mubr.f32.mxu0 0.0
      %625 = vmatmul.mubr.f32.gmra.mrb[0].mxu0 %v400
      %v626 = vpop.f32.mrb[0].mxu0
      %v627 = vadd.f32 0.0, %v626
      %v628 = vpop.f32.mrb[0].mxu0
      %629 = vmatprep.mubr.f32.mxu0 0.0
      %630 = vmatmul.mubr.f32.gmra.mrb[0].mxu0 %v401
      %v631 = vpop.f32.mrb[0].mxu0
      %v632 = vadd.f32 0.0, %v631
      %v633 = vpop.f32.mrb[0].mxu0
      %634 = vmatprep.mubr.f32.mxu0 0.0
      %635 = vmatmul.mubr.f32.gmra.mrb[0].mxu0 %v402
      %v636 = vpop.f32.mrb[0].mxu0
      %v637 = vadd.f32 0.0, %v636
      %v638 = vpop.f32.mrb[0].mxu0
      %639 = vmatprep.mubr.f32.mxu0 0.0
      %640 = vmatmul.mubr.f32.gmra.mrb[0].mxu0 %v403
      %v641 = vpop.f32.mrb[0].mxu0
      %v642 = vadd.f32 0.0, %v641
      %v643 = vpop.f32.mrb[0].mxu0
      %644 = vdwg.mxu0
      %645 = vmatprep.subr.mxu0 0.0
      %646 = vmatpush1.msra.mxu0 %v356
      %647 = vmatprep.subr.mxu0 0.0
      %648 = vmatpush1.msra.mxu0 %v357
      %649 = vmatprep.subr.mxu0 0.0
      %650 = vmatpush1.msra.mxu0 %v358
      %651 = vmatprep.subr.mxu0 0.0
      %652 = vmatpush1.msra.mxu0 %v359
      %653 = vmatprep.subr.mxu0 0.0
      %654 = vmatpush1.msra.mxu0 %v360
      %655 = vmatprep.subr.mxu0 0.0
      %656 = vmatpush1.msra.mxu0 %v361
      %657 = vmatprep.subr.mxu0 0.0
      %658 = vmatpush1.msra.mxu0 %v362
      %659 = vmatprep.subr.mxu0 0.0
      %660 = vmatpush1.msra.mxu0 %v363
      %661 = vmatprep.subr.mxu0 0.0
      %662 = vmatpush1.msra.mxu0 %v364
      %663 = vmatprep.subr.mxu0 0.0
      %664 = vmatpush1.msra.mxu0 %v365
      %665 = vmatprep.subr.mxu0 0.0
      %666 = vmatpush1.msra.mxu0 %v366
      %667 = vmatprep.subr.mxu0 0.0
      %668 = vmatpush1.msra.mxu0 %v367
      %669 = vmatprep.subr.mxu0 0.0
      %670 = vmatpush1.msra.mxu0 %v368
      %671 = vmatprep.subr.mxu0 0.0
      %672 = vmatpush1.msra.mxu0 %v369
      %673 = vmatprep.subr.mxu0 0.0
      %674 = vmatpush1.msra.mxu0 %v370
      %675 = vmatprep.subr.mxu0 0.0
      %676 = vmatpush1.msra.mxu0 %v371
      %677 = vmatprep.subr.mxu0 0.0
      %678 = vmatpush1.msra.mxu0 0.0
      %679 = vmatprep.subr.mxu0 0.0
      %680 = vmatpush1.msra.mxu0 0.0
      %681 = vmatprep.subr.mxu0 0.0
      %682 = vmatpush1.msra.mxu0 0.0
      %683 = vmatprep.subr.mxu0 0.0
      %684 = vmatpush1.msra.mxu0 0.0
      %685 = vmatprep.subr.mxu0 0.0
      %686 = vmatpush1.msra.mxu0 0.0
      %687 = vmatprep.subr.mxu0 0.0
      %688 = vmatpush1.msra.mxu0 0.0
      %689 = vmatprep.subr.mxu0 0.0
      %690 = vmatpush1.msra.mxu0 0.0
      %691 = vmatprep.subr.mxu0 0.0
      %692 = vmatpush1.msra.mxu0 0.0
      %693 = vmatprep.subr.mxu0 0.0
      %694 = vmatpush1.msra.mxu0 0.0
      %695 = vmatprep.subr.mxu0 0.0
      %696 = vmatpush1.msra.mxu0 0.0
      %697 = vmatprep.subr.mxu0 0.0
      %698 = vmatpush1.msra.mxu0 0.0
      %699 = vmatprep.subr.mxu0 0.0
      %700 = vmatpush1.msra.mxu0 0.0
      %701 = vmatprep.subr.mxu0 0.0
      %702 = vmatpush1.msra.mxu0 0.0
      %703 = vmatprep.subr.mxu0 0.0
      %704 = vmatpush1.msra.mxu0 0.0
      %705 = vmatprep.subr.mxu0 0.0
      %706 = vmatpush1.msra.mxu0 0.0
      %707 = vmatprep.subr.mxu0 0.0
      %708 = vmatpush1.msra.mxu0 0.0
      %709 = vmatprep.mubr.f32.mxu0 0.0
      %710 = vmatmul.mubr.f32.gmra.mrb[0].mxu0 %v324
      %v711 = vpop.f32.mrb[0].mxu0
      %v712 = vadd.f32 %v487, %v711
      %v713 = vpop.f32.mrb[0].mxu0
      %714 = vmatprep.mubr.f32.mxu0 0.0
      %715 = vmatmul.mubr.f32.gmra.mrb[0].mxu0 %v325
      %v716 = vpop.f32.mrb[0].mxu0
      %v717 = vadd.f32 %v492, %v716
      %v718 = vpop.f32.mrb[0].mxu0
      %719 = vmatprep.mubr.f32.mxu0 0.0
      %720 = vmatmul.mubr.f32.gmra.mrb[0].mxu0 %v326
      %v721 = vpop.f32.mrb[0].mxu0
      %v722 = vadd.f32 %v497, %v721
      %v723 = vpop.f32.mrb[0].mxu0
      %724 = vmatprep.mubr.f32.mxu0 0.0
      %725 = vmatmul.mubr.f32.gmra.mrb[0].mxu0 %v327
      %v726 = vpop.f32.mrb[0].mxu0
      %v727 = vadd.f32 %v502, %v726
      %v728 = vpop.f32.mrb[0].mxu0
      %729 = vmatprep.mubr.f32.mxu0 0.0
      %730 = vmatmul.mubr.f32.gmra.mrb[0].mxu0 %v328
      %v731 = vpop.f32.mrb[0].mxu0
      %v732 = vadd.f32 %v507, %v731
      %v733 = vpop.f32.mrb[0].mxu0
      %734 = vmatprep.mubr.f32.mxu0 0.0
      %735 = vmatmul.mubr.f32.gmra.mrb[0].mxu0 %v329
      %v736 = vpop.f32.mrb[0].mxu0
      %v737 = vadd.f32 %v512, %v736
      %v738 = vpop.f32.mrb[0].mxu0
      %739 = vmatprep.mubr.f32.mxu0 0.0
      %740 = vmatmul.mubr.f32.gmra.mrb[0].mxu0 %v330
      %v741 = vpop.f32.mrb[0].mxu0
      %v742 = vadd.f32 %v517, %v741
      %v743 = vpop.f32.mrb[0].mxu0
      %744 = vmatprep.mubr.f32.mxu0 0.0
      %745 = vmatmul.mubr.f32.gmra.mrb[0].mxu0 %v331
      %v746 = vpop.f32.mrb[0].mxu0
      %v747 = vadd.f32 %v522, %v746
      %v748 = vpop.f32.mrb[0].mxu0
      %749 = vmatprep.mubr.f32.mxu0 0.0
      %750 = vmatmul.mubr.f32.gmra.mrb[0].mxu0 %v332
      %v751 = vpop.f32.mrb[0].mxu0
      %v752 = vadd.f32 %v527, %v751
      %v753 = vpop.f32.mrb[0].mxu0
      %754 = vmatprep.mubr.f32.mxu0 0.0
      %755 = vmatmul.mubr.f32.gmra.mrb[0].mxu0 %v333
      %v756 = vpop.f32.mrb[0].mxu0
      %v757 = vadd.f32 %v532, %v756
      %v758 = vpop.f32.mrb[0].mxu0
      %759 = vmatprep.mubr.f32.mxu0 0.0
      %760 = vmatmul.mubr.f32.gmra.mrb[0].mxu0 %v334
      %v761 = vpop.f32.mrb[0].mxu0
      %v762 = vadd.f32 %v537, %v761
      %v763 = vpop.f32.mrb[0].mxu0
      %764 = vmatprep.mubr.f32.mxu0 0.0
      %765 = vmatmul.mubr.f32.gmra.mrb[0].mxu0 %v335
      %v766 = vpop.f32.mrb[0].mxu0
      %v767 = vadd.f32 %v542, %v766
      %v768 = vpop.f32.mrb[0].mxu0
      %769 = vmatprep.mubr.f32.mxu0 0.0
      %770 = vmatmul.mubr.f32.gmra.mrb[0].mxu0 %v336
      %v771 = vpop.f32.mrb[0].mxu0
      %v772 = vadd.f32 %v547, %v771
      %v773 = vpop.f32.mrb[0].mxu0
      %774 = vmatprep.mubr.f32.mxu0 0.0
      %775 = vmatmul.mubr.f32.gmra.mrb[0].mxu0 %v337
      %v776 = vpop.f32.mrb[0].mxu0
      %v777 = vadd.f32 %v552, %v776
      %v778 = vpop.f32.mrb[0].mxu0
      %779 = vmatprep.mubr.f32.mxu0 0.0
      %780 = vmatmul.mubr.f32.gmra.mrb[0].mxu0 %v338
      %v781 = vpop.f32.mrb[0].mxu0
      %v782 = vadd.f32 %v557, %v781
      %v783 = vpop.f32.mrb[0].mxu0
      %784 = vmatprep.mubr.f32.mxu0 0.0
      %785 = vmatmul.mubr.f32.gmra.mrb[0].mxu0 %v339
      %v786 = vpop.f32.mrb[0].mxu0
      %v787 = vadd.f32 %v562, %v786
      %v788 = vpop.f32.mrb[0].mxu0
      %789 = vmatprep.mubr.f32.mxu0 0.0
      %790 = vmatmul.mubr.f32.gmra.mrb[0].mxu0 %v340
      %v791 = vpop.f32.mrb[0].mxu0
      %v792 = vadd.f32 %v567, %v791
      %v793 = vpop.f32.mrb[0].mxu0
      %794 = vmatprep.mubr.f32.mxu0 0.0
      %795 = vmatmul.mubr.f32.gmra.mrb[0].mxu0 %v341
      %v796 = vpop.f32.mrb[0].mxu0
      %v797 = vadd.f32 %v572, %v796
      %v798 = vpop.f32.mrb[0].mxu0
      %799 = vmatprep.mubr.f32.mxu0 0.0
      %800 = vmatmul.mubr.f32.gmra.mrb[0].mxu0 %v342
      %v801 = vpop.f32.mrb[0].mxu0
      %v802 = vadd.f32 %v577, %v801
      %v803 = vpop.f32.mrb[0].mxu0
      %804 = vmatprep.mubr.f32.mxu0 0.0
      %805 = vmatmul.mubr.f32.gmra.mrb[0].mxu0 %v343
      %v806 = vpop.f32.mrb[0].mxu0
      %v807 = vadd.f32 %v582, %v806
      %v808 = vpop.f32.mrb[0].mxu0
      %809 = vmatprep.mubr.f32.mxu0 0.0
      %810 = vmatmul.mubr.f32.gmra.mrb[0].mxu0 %v344
      %v811 = vpop.f32.mrb[0].mxu0
      %v812 = vadd.f32 %v587, %v811
      %v813 = vpop.f32.mrb[0].mxu0
      %814 = vmatprep.mubr.f32.mxu0 0.0
      %815 = vmatmul.mubr.f32.gmra.mrb[0].mxu0 %v345
      %v816 = vpop.f32.mrb[0].mxu0
      %v817 = vadd.f32 %v592, %v816
      %v818 = vpop.f32.mrb[0].mxu0
      %819 = vmatprep.mubr.f32.mxu0 0.0
      %820 = vmatmul.mubr.f32.gmra.mrb[0].mxu0 %v346
      %v821 = vpop.f32.mrb[0].mxu0
      %v822 = vadd.f32 %v597, %v821
      %v823 = vpop.f32.mrb[0].mxu0
      %824 = vmatprep.mubr.f32.mxu0 0.0
      %825 = vmatmul.mubr.f32.gmra.mrb[0].mxu0 %v347
      %v826 = vpop.f32.mrb[0].mxu0
      %v827 = vadd.f32 %v602, %v826
      %v828 = vpop.f32.mrb[0].mxu0
      %829 = vmatprep.mubr.f32.mxu0 0.0
      %830 = vmatmul.mubr.f32.gmra.mrb[0].mxu0 %v348
      %v831 = vpop.f32.mrb[0].mxu0
      %v832 = vadd.f32 %v607, %v831
      %v833 = vpop.f32.mrb[0].mxu0
      %834 = vmatprep.mubr.f32.mxu0 0.0
      %835 = vmatmul.mubr.f32.gmra.mrb[0].mxu0 %v349
      %v836 = vpop.f32.mrb[0].mxu0
      %v837 = vadd.f32 %v612, %v836
      %v838 = vpop.f32.mrb[0].mxu0
      %839 = vmatprep.mubr.f32.mxu0 0.0
      %840 = vmatmul.mubr.f32.gmra.mrb[0].mxu0 %v350
      %v841 = vpop.f32.mrb[0].mxu0
      %v842 = vadd.f32 %v617, %v841
      %v843 = vpop.f32.mrb[0].mxu0
      %844 = vmatprep.mubr.f32.mxu0 0.0
      %845 = vmatmul.mubr.f32.gmra.mrb[0].mxu0 %v351
      %v846 = vpop.f32.mrb[0].mxu0
      %v847 = vadd.f32 %v622, %v846
      %v848 = vpop.f32.mrb[0].mxu0
      %849 = vmatprep.mubr.f32.mxu0 0.0
      %850 = vmatmul.mubr.f32.gmra.mrb[0].mxu0 %v352
      %v851 = vpop.f32.mrb[0].mxu0
      %v852 = vadd.f32 %v627, %v851
      %v853 = vpop.f32.mrb[0].mxu0
      %854 = vmatprep.mubr.f32.mxu0 0.0
      %855 = vmatmul.mubr.f32.gmra.mrb[0].mxu0 %v353
      %v856 = vpop.f32.mrb[0].mxu0
      %v857 = vadd.f32 %v632, %v856
      %v858 = vpop.f32.mrb[0].mxu0
      %859 = vmatprep.mubr.f32.mxu0 0.0
      %860 = vmatmul.mubr.f32.gmra.mrb[0].mxu0 %v354
      %v861 = vpop.f32.mrb[0].mxu0
      %v862 = vadd.f32 %v637, %v861
      %v863 = vpop.f32.mrb[0].mxu0
      %864 = vmatprep.mubr.f32.mxu0 0.0
      %865 = vmatmul.mubr.f32.gmra.mrb[0].mxu0 %v355
      %v866 = vpop.f32.mrb[0].mxu0
      %v867 = vadd.f32 %v642, %v866
      %v868 = vpop.f32.mrb[0].mxu0
      %869 = vdwg.mxu0
      %v870 = vld [vmem:[%s323 + $0x2] sm:$0xff]
      %v871 = vld [vmem:[%s323 + $0xa] sm:$0xff]
      %v872 = vld [vmem:[%s323 + $0x1a] sm:$0xff]
      %v873 = vld [vmem:[%s323 + $0x22] sm:$0xff]
      %v874 = vld [vmem:[%s323 + $0x32] sm:$0xff]
      %v875 = vld [vmem:[%s323 + $0x3a] sm:$0xff]
      %v876 = vld [vmem:[%s323 + $0x4a] sm:$0xff]
      %v877 = vld [vmem:[%s323 + $0x52] sm:$0xff]
      %v878 = vld [vmem:[%s323 + $0x62] sm:$0xff]
      %v879 = vld [vmem:[%s323 + $0x6a] sm:$0xff]
      %v880 = vld [vmem:[%s323 + $0x7a] sm:$0xff]
      %v881 = vld [vmem:[%s323 + $0x82] sm:$0xff]
      %v882 = vld [vmem:[%s323 + $0x92] sm:$0xff]
      %v883 = vld [vmem:[%s323 + $0x9a] sm:$0xff]
      %v884 = vld [vmem:[%s323 + $0xaa] sm:$0xff]
      %v885 = vld [vmem:[%s323 + $0xb2] sm:$0xff]
      %v886 = vld [vmem:[%s323 + $0xc2] sm:$0xff]
      %v887 = vld [vmem:[%s323 + $0xca] sm:$0xff]
      %v888 = vld [vmem:[%s323 + $0xda] sm:$0xff]
      %v889 = vld [vmem:[%s323 + $0xe2] sm:$0xff]
      %v890 = vld [vmem:[%s323 + $0xf2] sm:$0xff]
      %v891 = vld [vmem:[%s323 + $0xfa] sm:$0xff]
      %v892 = vld [vmem:[%s323 + $0x10a] sm:$0xff]
      %v893 = vld [vmem:[%s323 + $0x112] sm:$0xff]
      %v894 = vld [vmem:[%s323 + $0x122] sm:$0xff]
      %v895 = vld [vmem:[%s323 + $0x12a] sm:$0xff]
      %v896 = vld [vmem:[%s323 + $0x13a] sm:$0xff]
      %v897 = vld [vmem:[%s323 + $0x142] sm:$0xff]
      %v898 = vld [vmem:[%s323 + $0x152] sm:$0xff]
      %v899 = vld [vmem:[%s323 + $0x15a] sm:$0xff]
      %v900 = vld [vmem:[%s323 + $0x16a] sm:$0xff]
      %v901 = vld [vmem:[%s323 + $0x172] sm:$0xff]
      %v902 = vld [vmem:[%s292 + $0x100] sm:$0xff]
      %v903 = vld [vmem:[%s292 + $0x108] sm:$0xff]
      %v904 = vld [vmem:[%s292 + $0x110] sm:$0xff]
      %v905 = vld [vmem:[%s292 + $0x118] sm:$0xff]
      %v906 = vld [vmem:[%s292 + $0x120] sm:$0xff]
      %v907 = vld [vmem:[%s292 + $0x128] sm:$0xff]
      %v908 = vld [vmem:[%s292 + $0x130] sm:$0xff]
      %v909 = vld [vmem:[%s292 + $0x138] sm:$0xff]
      %v910 = vld [vmem:[%s292 + $0x140] sm:$0xff]
      %v911 = vld [vmem:[%s292 + $0x148] sm:$0xff]
      %v912 = vld [vmem:[%s292 + $0x150] sm:$0xff]
      %v913 = vld [vmem:[%s292 + $0x158] sm:$0xff]
      %v914 = vld [vmem:[%s292 + $0x160] sm:$0xff]
      %v915 = vld [vmem:[%s292 + $0x168] sm:$0xff]
      %v916 = vld [vmem:[%s292 + $0x170] sm:$0xff]
      %v917 = vld [vmem:[%s292 + $0x178] sm:$0xff]
      %918 = vmatprep.subr.mxu0 0.0
      %919 = vmatpush1.msra.mxu0 %v902
      %920 = vmatprep.subr.mxu0 0.0
      %921 = vmatpush1.msra.mxu0 %v903
      %922 = vmatprep.subr.mxu0 0.0
      %923 = vmatpush1.msra.mxu0 %v904
      %924 = vmatprep.subr.mxu0 0.0
      %925 = vmatpush1.msra.mxu0 %v905
      %926 = vmatprep.subr.mxu0 0.0
      %927 = vmatpush1.msra.mxu0 %v906
      %928 = vmatprep.subr.mxu0 0.0
      %929 = vmatpush1.msra.mxu0 %v907
      %930 = vmatprep.subr.mxu0 0.0
      %931 = vmatpush1.msra.mxu0 %v908
      %932 = vmatprep.subr.mxu0 0.0
      %933 = vmatpush1.msra.mxu0 %v909
      %934 = vmatprep.subr.mxu0 0.0
      %935 = vmatpush1.msra.mxu0 %v910
      %936 = vmatprep.subr.mxu0 0.0
      %937 = vmatpush1.msra.mxu0 %v911
      %938 = vmatprep.subr.mxu0 0.0
      %939 = vmatpush1.msra.mxu0 %v912
      %940 = vmatprep.subr.mxu0 0.0
      %941 = vmatpush1.msra.mxu0 %v913
      %942 = vmatprep.subr.mxu0 0.0
      %943 = vmatpush1.msra.mxu0 %v914
      %944 = vmatprep.subr.mxu0 0.0
      %945 = vmatpush1.msra.mxu0 %v915
      %946 = vmatprep.subr.mxu0 0.0
      %947 = vmatpush1.msra.mxu0 %v916
      %948 = vmatprep.subr.mxu0 0.0
      %949 = vmatpush1.msra.mxu0 %v917
      %950 = vmatprep.subr.mxu0 0.0
      %951 = vmatpush1.msra.mxu0 0.0
      %952 = vmatprep.subr.mxu0 0.0
      %953 = vmatpush1.msra.mxu0 0.0
      %954 = vmatprep.subr.mxu0 0.0
      %955 = vmatpush1.msra.mxu0 0.0
      %956 = vmatprep.subr.mxu0 0.0
      %957 = vmatpush1.msra.mxu0 0.0
      %958 = vmatprep.subr.mxu0 0.0
      %959 = vmatpush1.msra.mxu0 0.0
      %960 = vmatprep.subr.mxu0 0.0
      %961 = vmatpush1.msra.mxu0 0.0
      %962 = vmatprep.subr.mxu0 0.0
      %963 = vmatpush1.msra.mxu0 0.0
      %964 = vmatprep.subr.mxu0 0.0
      %965 = vmatpush1.msra.mxu0 0.0
      %966 = vmatprep.subr.mxu0 0.0
      %967 = vmatpush1.msra.mxu0 0.0
      %968 = vmatprep.subr.mxu0 0.0
      %969 = vmatpush1.msra.mxu0 0.0
      %970 = vmatprep.subr.mxu0 0.0
      %971 = vmatpush1.msra.mxu0 0.0
      %972 = vmatprep.subr.mxu0 0.0
      %973 = vmatpush1.msra.mxu0 0.0
      %974 = vmatprep.subr.mxu0 0.0
      %975 = vmatpush1.msra.mxu0 0.0
      %976 = vmatprep.subr.mxu0 0.0
      %977 = vmatpush1.msra.mxu0 0.0
      %978 = vmatprep.subr.mxu0 0.0
      %979 = vmatpush1.msra.mxu0 0.0
      %980 = vmatprep.subr.mxu0 0.0
      %981 = vmatpush1.msra.mxu0 0.0
      %982 = vmatprep.mubr.f32.mxu0 0.0
      %983 = vmatmul.mubr.f32.gmra.mrb[0].mxu0 %v870
      %v984 = vpop.f32.mrb[0].mxu0
      %v985 = vadd.f32 0.0, %v984
      %v986 = vpop.f32.mrb[0].mxu0
      %987 = vmatprep.mubr.f32.mxu0 0.0
      %988 = vmatmul.mubr.f32.gmra.mrb[0].mxu0 %v871
      %v989 = vpop.f32.mrb[0].mxu0
      %v990 = vadd.f32 0.0, %v989
      %v991 = vpop.f32.mrb[0].mxu0
      %992 = vmatprep.mubr.f32.mxu0 0.0
      %993 = vmatmul.mubr.f32.gmra.mrb[0].mxu0 %v872
      %v994 = vpop.f32.mrb[0].mxu0
      %v995 = vadd.f32 0.0, %v994
      %v996 = vpop.f32.mrb[0].mxu0
      %997 = vmatprep.mubr.f32.mxu0 0.0
      %998 = vmatmul.mubr.f32.gmra.mrb[0].mxu0 %v873
      %v999 = vpop.f32.mrb[0].mxu0
      %v1000 = vadd.f32 0.0, %v999
      %v1001 = vpop.f32.mrb[0].mxu0
      %1002 = vmatprep.mubr.f32.mxu0 0.0
      %1003 = vmatmul.mubr.f32.gmra.mrb[0].mxu0 %v874
      %v1004 = vpop.f32.mrb[0].mxu0
      %v1005 = vadd.f32 0.0, %v1004
      %v1006 = vpop.f32.mrb[0].mxu0
      %1007 = vmatprep.mubr.f32.mxu0 0.0
      %1008 = vmatmul.mubr.f32.gmra.mrb[0].mxu0 %v875
      %v1009 = vpop.f32.mrb[0].mxu0
      %v1010 = vadd.f32 0.0, %v1009
      %v1011 = vpop.f32.mrb[0].mxu0
      %1012 = vmatprep.mubr.f32.mxu0 0.0
      %1013 = vmatmul.mubr.f32.gmra.mrb[0].mxu0 %v876
      %v1014 = vpop.f32.mrb[0].mxu0
      %v1015 = vadd.f32 0.0, %v1014
      %v1016 = vpop.f32.mrb[0].mxu0
      %1017 = vmatprep.mubr.f32.mxu0 0.0
      %1018 = vmatmul.mubr.f32.gmra.mrb[0].mxu0 %v877
      %v1019 = vpop.f32.mrb[0].mxu0
      %v1020 = vadd.f32 0.0, %v1019
      %v1021 = vpop.f32.mrb[0].mxu0
      %1022 = vmatprep.mubr.f32.mxu0 0.0
      %1023 = vmatmul.mubr.f32.gmra.mrb[0].mxu0 %v878
      %v1024 = vpop.f32.mrb[0].mxu0
      %v1025 = vadd.f32 0.0, %v1024
      %v1026 = vpop.f32.mrb[0].mxu0
      %1027 = vmatprep.mubr.f32.mxu0 0.0
      %1028 = vmatmul.mubr.f32.gmra.mrb[0].mxu0 %v879
      %v1029 = vpop.f32.mrb[0].mxu0
      %v1030 = vadd.f32 0.0, %v1029
      %v1031 = vpop.f32.mrb[0].mxu0
      %1032 = vmatprep.mubr.f32.mxu0 0.0
      %1033 = vmatmul.mubr.f32.gmra.mrb[0].mxu0 %v880
      %v1034 = vpop.f32.mrb[0].mxu0
      %v1035 = vadd.f32 0.0, %v1034
      %v1036 = vpop.f32.mrb[0].mxu0
      %1037 = vmatprep.mubr.f32.mxu0 0.0
      %1038 = vmatmul.mubr.f32.gmra.mrb[0].mxu0 %v881
      %v1039 = vpop.f32.mrb[0].mxu0
      %v1040 = vadd.f32 0.0, %v1039
      %v1041 = vpop.f32.mrb[0].mxu0
      %1042 = vmatprep.mubr.f32.mxu0 0.0
      %1043 = vmatmul.mubr.f32.gmra.mrb[0].mxu0 %v882
      %v1044 = vpop.f32.mrb[0].mxu0
      %v1045 = vadd.f32 0.0, %v1044
      %v1046 = vpop.f32.mrb[0].mxu0
      %1047 = vmatprep.mubr.f32.mxu0 0.0
      %1048 = vmatmul.mubr.f32.gmra.mrb[0].mxu0 %v883
      %v1049 = vpop.f32.mrb[0].mxu0
      %v1050 = vadd.f32 0.0, %v1049
      %v1051 = vpop.f32.mrb[0].mxu0
      %1052 = vmatprep.mubr.f32.mxu0 0.0
      %1053 = vmatmul.mubr.f32.gmra.mrb[0].mxu0 %v884
      %v1054 = vpop.f32.mrb[0].mxu0
      %v1055 = vadd.f32 0.0, %v1054
      %v1056 = vpop.f32.mrb[0].mxu0
      %1057 = vmatprep.mubr.f32.mxu0 0.0
      %1058 = vmatmul.mubr.f32.gmra.mrb[0].mxu0 %v885
      %v1059 = vpop.f32.mrb[0].mxu0
      %v1060 = vadd.f32 0.0, %v1059
      %v1061 = vpop.f32.mrb[0].mxu0
      %1062 = vmatprep.mubr.f32.mxu0 0.0
      %1063 = vmatmul.mubr.f32.gmra.mrb[0].mxu0 %v886
      %v1064 = vpop.f32.mrb[0].mxu0
      %v1065 = vadd.f32 0.0, %v1064
      %v1066 = vpop.f32.mrb[0].mxu0
      %1067 = vmatprep.mubr.f32.mxu0 0.0
      %1068 = vmatmul.mubr.f32.gmra.mrb[0].mxu0 %v887
      %v1069 = vpop.f32.mrb[0].mxu0
      %v1070 = vadd.f32 0.0, %v1069
      %v1071 = vpop.f32.mrb[0].mxu0
      %1072 = vmatprep.mubr.f32.mxu0 0.0
      %1073 = vmatmul.mubr.f32.gmra.mrb[0].mxu0 %v888
      %v1074 = vpop.f32.mrb[0].mxu0
      %v1075 = vadd.f32 0.0, %v1074
      %v1076 = vpop.f32.mrb[0].mxu0
      %1077 = vmatprep.mubr.f32.mxu0 0.0
      %1078 = vmatmul.mubr.f32.gmra.mrb[0].mxu0 %v889
      %v1079 = vpop.f32.mrb[0].mxu0
      %v1080 = vadd.f32 0.0, %v1079
      %v1081 = vpop.f32.mrb[0].mxu0
      %1082 = vmatprep.mubr.f32.mxu0 0.0
      %1083 = vmatmul.mubr.f32.gmra.mrb[0].mxu0 %v890
      %v1084 = vpop.f32.mrb[0].mxu0
      %v1085 = vadd.f32 0.0, %v1084
      %v1086 = vpop.f32.mrb[0].mxu0
      %1087 = vmatprep.mubr.f32.mxu0 0.0
      %1088 = vmatmul.mubr.f32.gmra.mrb[0].mxu0 %v891
      %v1089 = vpop.f32.mrb[0].mxu0
      %v1090 = vadd.f32 0.0, %v1089
      %v1091 = vpop.f32.mrb[0].mxu0
      %1092 = vmatprep.mubr.f32.mxu0 0.0
      %1093 = vmatmul.mubr.f32.gmra.mrb[0].mxu0 %v892
      %v1094 = vpop.f32.mrb[0].mxu0
      %v1095 = vadd.f32 0.0, %v1094
      %v1096 = vpop.f32.mrb[0].mxu0
      %1097 = vmatprep.mubr.f32.mxu0 0.0
      %1098 = vmatmul.mubr.f32.gmra.mrb[0].mxu0 %v893
      %v1099 = vpop.f32.mrb[0].mxu0
      %v1100 = vadd.f32 0.0, %v1099
      %v1101 = vpop.f32.mrb[0].mxu0
      %1102 = vmatprep.mubr.f32.mxu0 0.0
      %1103 = vmatmul.mubr.f32.gmra.mrb[0].mxu0 %v894
      %v1104 = vpop.f32.mrb[0].mxu0
      %v1105 = vadd.f32 0.0, %v1104
      %v1106 = vpop.f32.mrb[0].mxu0
      %1107 = vmatprep.mubr.f32.mxu0 0.0
      %1108 = vmatmul.mubr.f32.gmra.mrb[0].mxu0 %v895
      %v1109 = vpop.f32.mrb[0].mxu0
      %v1110 = vadd.f32 0.0, %v1109
      %v1111 = vpop.f32.mrb[0].mxu0
      %1112 = vmatprep.mubr.f32.mxu0 0.0
      %1113 = vmatmul.mubr.f32.gmra.mrb[0].mxu0 %v896
      %v1114 = vpop.f32.mrb[0].mxu0
      %v1115 = vadd.f32 0.0, %v1114
      %v1116 = vpop.f32.mrb[0].mxu0
      %1117 = vmatprep.mubr.f32.mxu0 0.0
      %1118 = vmatmul.mubr.f32.gmra.mrb[0].mxu0 %v897
      %v1119 = vpop.f32.mrb[0].mxu0
      %v1120 = vadd.f32 0.0, %v1119
      %v1121 = vpop.f32.mrb[0].mxu0
      %1122 = vmatprep.mubr.f32.mxu0 0.0
      %1123 = vmatmul.mubr.f32.gmra.mrb[0].mxu0 %v898
      %v1124 = vpop.f32.mrb[0].mxu0
      %v1125 = vadd.f32 0.0, %v1124
      %v1126 = vpop.f32.mrb[0].mxu0
      %1127 = vmatprep.mubr.f32.mxu0 0.0
      %1128 = vmatmul.mubr.f32.gmra.mrb[0].mxu0 %v899
      %v1129 = vpop.f32.mrb[0].mxu0
      %v1130 = vadd.f32 0.0, %v1129
      %v1131 = vpop.f32.mrb[0].mxu0
      %1132 = vmatprep.mubr.f32.mxu0 0.0
      %1133 = vmatmul.mubr.f32.gmra.mrb[0].mxu0 %v900
      %v1134 = vpop.f32.mrb[0].mxu0
      %v1135 = vadd.f32 0.0, %v1134
      %v1136 = vpop.f32.mrb[0].mxu0
      %1137 = vmatprep.mubr.f32.mxu0 0.0
      %1138 = vmatmul.mubr.f32.gmra.mrb[0].mxu0 %v901
      %v1139 = vpop.f32.mrb[0].mxu0
      %v1140 = vadd.f32 0.0, %v1139
      %v1141 = vpop.f32.mrb[0].mxu0
      %1142 = vdwg.mxu0
      %v1143 = vadd.f32 %v712, %v985
      %v1144 = vadd.f32 %v717, %v990
      %v1145 = vadd.f32 %v722, %v995
      %v1146 = vadd.f32 %v727, %v1000
      %v1147 = vadd.f32 %v732, %v1005
      %v1148 = vadd.f32 %v737, %v1010
      %v1149 = vadd.f32 %v742, %v1015
      %v1150 = vadd.f32 %v747, %v1020
      %v1151 = vadd.f32 %v752, %v1025
      %v1152 = vadd.f32 %v757, %v1030
      %v1153 = vadd.f32 %v762, %v1035
      %v1154 = vadd.f32 %v767, %v1040
      %v1155 = vadd.f32 %v772, %v1045
      %v1156 = vadd.f32 %v777, %v1050
      %v1157 = vadd.f32 %v782, %v1055
      %v1158 = vadd.f32 %v787, %v1060
      %v1159 = vadd.f32 %v792, %v1065
      %v1160 = vadd.f32 %v797, %v1070
      %v1161 = vadd.f32 %v802, %v1075
      %v1162 = vadd.f32 %v807, %v1080
      %v1163 = vadd.f32 %v812, %v1085
      %v1164 = vadd.f32 %v817, %v1090
      %v1165 = vadd.f32 %v822, %v1095
      %v1166 = vadd.f32 %v827, %v1100
      %v1167 = vadd.f32 %v832, %v1105
      %v1168 = vadd.f32 %v837, %v1110
      %v1169 = vadd.f32 %v842, %v1115
      %v1170 = vadd.f32 %v847, %v1120
      %v1171 = vadd.f32 %v852, %v1125
      %v1172 = vadd.f32 %v857, %v1130
      %v1173 = vadd.f32 %v862, %v1135
      %v1174 = vadd.f32 %v867, %v1140
      %s1175 = sadd.s32 0, 1
      %s1176 = smul.u32 %s1175, 24
      %s1177 = scalar_lea.vmem %s288, %s1176
      %v1178 = vld [vmem:[%s1177] sm:$0xff]
      %v1179 = vld [vmem:[%s1177 + $0x8] sm:$0xff]
      %v1180 = vld [vmem:[%s1177 + $0x18] sm:$0xff]
      %v1181 = vld [vmem:[%s1177 + $0x20] sm:$0xff]
      %v1182 = vld [vmem:[%s1177 + $0x30] sm:$0xff]
      %v1183 = vld [vmem:[%s1177 + $0x38] sm:$0xff]
      %v1184 = vld [vmem:[%s1177 + $0x48] sm:$0xff]
      %v1185 = vld [vmem:[%s1177 + $0x50] sm:$0xff]
      %v1186 = vld [vmem:[%s1177 + $0x60] sm:$0xff]
      %v1187 = vld [vmem:[%s1177 + $0x68] sm:$0xff]
      %v1188 = vld [vmem:[%s1177 + $0x78] sm:$0xff]
      %v1189 = vld [vmem:[%s1177 + $0x80] sm:$0xff]
      %v1190 = vld [vmem:[%s1177 + $0x90] sm:$0xff]
      %v1191 = vld [vmem:[%s1177 + $0x98] sm:$0xff]
      %v1192 = vld [vmem:[%s1177 + $0xa8] sm:$0xff]
      %v1193 = vld [vmem:[%s1177 + $0xb0] sm:$0xff]
      %v1194 = vld [vmem:[%s1177 + $0xc0] sm:$0xff]
      %v1195 = vld [vmem:[%s1177 + $0xc8] sm:$0xff]
      %v1196 = vld [vmem:[%s1177 + $0xd8] sm:$0xff]
      %v1197 = vld [vmem:[%s1177 + $0xe0] sm:$0xff]
      %v1198 = vld [vmem:[%s1177 + $0xf0] sm:$0xff]
      %v1199 = vld [vmem:[%s1177 + $0xf8] sm:$0xff]
      %v1200 = vld [vmem:[%s1177 + $0x108] sm:$0xff]
      %v1201 = vld [vmem:[%s1177 + $0x110] sm:$0xff]
      %v1202 = vld [vmem:[%s1177 + $0x120] sm:$0xff]
      %v1203 = vld [vmem:[%s1177 + $0x128] sm:$0xff]
      %v1204 = vld [vmem:[%s1177 + $0x138] sm:$0xff]
      %v1205 = vld [vmem:[%s1177 + $0x140] sm:$0xff]
      %v1206 = vld [vmem:[%s1177 + $0x150] sm:$0xff]
      %v1207 = vld [vmem:[%s1177 + $0x158] sm:$0xff]
      %v1208 = vld [vmem:[%s1177 + $0x168] sm:$0xff]
      %v1209 = vld [vmem:[%s1177 + $0x170] sm:$0xff]
      %v1210 = vld [vmem:[%s292 + $0x180] sm:$0xff]
      %v1211 = vld [vmem:[%s292 + $0x188] sm:$0xff]
      %v1212 = vld [vmem:[%s292 + $0x190] sm:$0xff]
      %v1213 = vld [vmem:[%s292 + $0x198] sm:$0xff]
      %v1214 = vld [vmem:[%s292 + $0x1a0] sm:$0xff]
      %v1215 = vld [vmem:[%s292 + $0x1a8] sm:$0xff]
      %v1216 = vld [vmem:[%s292 + $0x1b0] sm:$0xff]
      %v1217 = vld [vmem:[%s292 + $0x1b8] sm:$0xff]
      %v1218 = vld [vmem:[%s292 + $0x1c0] sm:$0xff]
      %v1219 = vld [vmem:[%s292 + $0x1c8] sm:$0xff]
      %v1220 = vld [vmem:[%s292 + $0x1d0] sm:$0xff]
      %v1221 = vld [vmem:[%s292 + $0x1d8] sm:$0xff]
      %v1222 = vld [vmem:[%s292 + $0x1e0] sm:$0xff]
      %v1223 = vld [vmem:[%s292 + $0x1e8] sm:$0xff]
      %v1224 = vld [vmem:[%s292 + $0x1f0] sm:$0xff]
      %v1225 = vld [vmem:[%s292 + $0x1f8] sm:$0xff]
      %1226 = vmatprep.subr.mxu0 0.0
      %1227 = vmatpush1.msra.mxu0 %v1210
      %1228 = vmatprep.subr.mxu0 0.0
      %1229 = vmatpush1.msra.mxu0 %v1211
      %1230 = vmatprep.subr.mxu0 0.0
      %1231 = vmatpush1.msra.mxu0 %v1212
      %1232 = vmatprep.subr.mxu0 0.0
      %1233 = vmatpush1.msra.mxu0 %v1213
      %1234 = vmatprep.subr.mxu0 0.0
      %1235 = vmatpush1.msra.mxu0 %v1214
      %1236 = vmatprep.subr.mxu0 0.0
      %1237 = vmatpush1.msra.mxu0 %v1215
      %1238 = vmatprep.subr.mxu0 0.0
      %1239 = vmatpush1.msra.mxu0 %v1216
      %1240 = vmatprep.subr.mxu0 0.0
      %1241 = vmatpush1.msra.mxu0 %v1217
      %1242 = vmatprep.subr.mxu0 0.0
      %1243 = vmatpush1.msra.mxu0 %v1218
      %1244 = vmatprep.subr.mxu0 0.0
      %1245 = vmatpush1.msra.mxu0 %v1219
      %1246 = vmatprep.subr.mxu0 0.0
      %1247 = vmatpush1.msra.mxu0 %v1220
      %1248 = vmatprep.subr.mxu0 0.0
      %1249 = vmatpush1.msra.mxu0 %v1221
      %1250 = vmatprep.subr.mxu0 0.0
      %1251 = vmatpush1.msra.mxu0 %v1222
      %1252 = vmatprep.subr.mxu0 0.0
      %1253 = vmatpush1.msra.mxu0 %v1223
      %1254 = vmatprep.subr.mxu0 0.0
      %1255 = vmatpush1.msra.mxu0 %v1224
      %1256 = vmatprep.subr.mxu0 0.0
      %1257 = vmatpush1.msra.mxu0 %v1225
      %1258 = vmatprep.subr.mxu0 0.0
      %1259 = vmatpush1.msra.mxu0 0.0
      %1260 = vmatprep.subr.mxu0 0.0
      %1261 = vmatpush1.msra.mxu0 0.0
      %1262 = vmatprep.subr.mxu0 0.0
      %1263 = vmatpush1.msra.mxu0 0.0
      %1264 = vmatprep.subr.mxu0 0.0
      %1265 = vmatpush1.msra.mxu0 0.0
      %1266 = vmatprep.subr.mxu0 0.0
      %1267 = vmatpush1.msra.mxu0 0.0
      %1268 = vmatprep.subr.mxu0 0.0
      %1269 = vmatpush1.msra.mxu0 0.0
      %1270 = vmatprep.subr.mxu0 0.0
      %1271 = vmatpush1.msra.mxu0 0.0
      %1272 = vmatprep.subr.mxu0 0.0
      %1273 = vmatpush1.msra.mxu0 0.0
      %1274 = vmatprep.subr.mxu0 0.0
      %1275 = vmatpush1.msra.mxu0 0.0
      %1276 = vmatprep.subr.mxu0 0.0
      %1277 = vmatpush1.msra.mxu0 0.0
      %1278 = vmatprep.subr.mxu0 0.0
      %1279 = vmatpush1.msra.mxu0 0.0
      %1280 = vmatprep.subr.mxu0 0.0
      %1281 = vmatpush1.msra.mxu0 0.0
      %1282 = vmatprep.subr.mxu0 0.0
      %1283 = vmatpush1.msra.mxu0 0.0
      %1284 = vmatprep.subr.mxu0 0.0
      %1285 = vmatpush1.msra.mxu0 0.0
      %1286 = vmatprep.subr.mxu0 0.0
      %1287 = vmatpush1.msra.mxu0 0.0
      %1288 = vmatprep.subr.mxu0 0.0
      %1289 = vmatpush1.msra.mxu0 0.0
      %1290 = vmatprep.mubr.f32.mxu0 0.0
      %1291 = vmatmul.mubr.f32.gmra.mrb[0].mxu0 %v1178
      %v1292 = vpop.f32.mrb[0].mxu0
      %v1293 = vadd.f32 0.0, %v1292
      %v1294 = vpop.f32.mrb[0].mxu0
      %1295 = vmatprep.mubr.f32.mxu0 0.0
      %1296 = vmatmul.mubr.f32.gmra.mrb[0].mxu0 %v1179
      %v1297 = vpop.f32.mrb[0].mxu0
      %v1298 = vadd.f32 0.0, %v1297
      %v1299 = vpop.f32.mrb[0].mxu0
      %1300 = vmatprep.mubr.f32.mxu0 0.0
      %1301 = vmatmul.mubr.f32.gmra.mrb[0].mxu0 %v1180
      %v1302 = vpop.f32.mrb[0].mxu0
      %v1303 = vadd.f32 0.0, %v1302
      %v1304 = vpop.f32.mrb[0].mxu0
      %1305 = vmatprep.mubr.f32.mxu0 0.0
      %1306 = vmatmul.mubr.f32.gmra.mrb[0].mxu0 %v1181
      %v1307 = vpop.f32.mrb[0].mxu0
      %v1308 = vadd.f32 0.0, %v1307
      %v1309 = vpop.f32.mrb[0].mxu0
      %1310 = vmatprep.mubr.f32.mxu0 0.0
      %1311 = vmatmul.mubr.f32.gmra.mrb[0].mxu0 %v1182
      %v1312 = vpop.f32.mrb[0].mxu0
      %v1313 = vadd.f32 0.0, %v1312
      %v1314 = vpop.f32.mrb[0].mxu0
      %1315 = vmatprep.mubr.f32.mxu0 0.0
      %1316 = vmatmul.mubr.f32.gmra.mrb[0].mxu0 %v1183
      %v1317 = vpop.f32.mrb[0].mxu0
      %v1318 = vadd.f32 0.0, %v1317
      %v1319 = vpop.f32.mrb[0].mxu0
      %1320 = vmatprep.mubr.f32.mxu0 0.0
      %1321 = vmatmul.mubr.f32.gmra.mrb[0].mxu0 %v1184
      %v1322 = vpop.f32.mrb[0].mxu0
      %v1323 = vadd.f32 0.0, %v1322
      %v1324 = vpop.f32.mrb[0].mxu0
      %1325 = vmatprep.mubr.f32.mxu0 0.0
      %1326 = vmatmul.mubr.f32.gmra.mrb[0].mxu0 %v1185
      %v1327 = vpop.f32.mrb[0].mxu0
      %v1328 = vadd.f32 0.0, %v1327
      %v1329 = vpop.f32.mrb[0].mxu0
      %1330 = vmatprep.mubr.f32.mxu0 0.0
      %1331 = vmatmul.mubr.f32.gmra.mrb[0].mxu0 %v1186
      %v1332 = vpop.f32.mrb[0].mxu0
      %v1333 = vadd.f32 0.0, %v1332
      %v1334 = vpop.f32.mrb[0].mxu0
      %1335 = vmatprep.mubr.f32.mxu0 0.0
      %1336 = vmatmul.mubr.f32.gmra.mrb[0].mxu0 %v1187
      %v1337 = vpop.f32.mrb[0].mxu0
      %v1338 = vadd.f32 0.0, %v1337
      %v1339 = vpop.f32.mrb[0].mxu0
      %1340 = vmatprep.mubr.f32.mxu0 0.0
      %1341 = vmatmul.mubr.f32.gmra.mrb[0].mxu0 %v1188
      %v1342 = vpop.f32.mrb[0].mxu0
      %v1343 = vadd.f32 0.0, %v1342
      %v1344 = vpop.f32.mrb[0].mxu0
      %1345 = vmatprep.mubr.f32.mxu0 0.0
      %1346 = vmatmul.mubr.f32.gmra.mrb[0].mxu0 %v1189
      %v1347 = vpop.f32.mrb[0].mxu0
      %v1348 = vadd.f32 0.0, %v1347
      %v1349 = vpop.f32.mrb[0].mxu0
      %1350 = vmatprep.mubr.f32.mxu0 0.0
      %1351 = vmatmul.mubr.f32.gmra.mrb[0].mxu0 %v1190
      %v1352 = vpop.f32.mrb[0].mxu0
      %v1353 = vadd.f32 0.0, %v1352
      %v1354 = vpop.f32.mrb[0].mxu0
      %1355 = vmatprep.mubr.f32.mxu0 0.0
      %1356 = vmatmul.mubr.f32.gmra.mrb[0].mxu0 %v1191
      %v1357 = vpop.f32.mrb[0].mxu0
      %v1358 = vadd.f32 0.0, %v1357
      %v1359 = vpop.f32.mrb[0].mxu0
      %1360 = vmatprep.mubr.f32.mxu0 0.0
      %1361 = vmatmul.mubr.f32.gmra.mrb[0].mxu0 %v1192
      %v1362 = vpop.f32.mrb[0].mxu0
      %v1363 = vadd.f32 0.0, %v1362
      %v1364 = vpop.f32.mrb[0].mxu0
      %1365 = vmatprep.mubr.f32.mxu0 0.0
      %1366 = vmatmul.mubr.f32.gmra.mrb[0].mxu0 %v1193
      %v1367 = vpop.f32.mrb[0].mxu0
      %v1368 = vadd.f32 0.0, %v1367
      %v1369 = vpop.f32.mrb[0].mxu0
      %1370 = vmatprep.mubr.f32.mxu0 0.0
      %1371 = vmatmul.mubr.f32.gmra.mrb[0].mxu0 %v1194
      %v1372 = vpop.f32.mrb[0].mxu0
      %v1373 = vadd.f32 0.0, %v1372
      %v1374 = vpop.f32.mrb[0].mxu0
      %1375 = vmatprep.mubr.f32.mxu0 0.0
      %1376 = vmatmul.mubr.f32.gmra.mrb[0].mxu0 %v1195
      %v1377 = vpop.f32.mrb[0].mxu0
      %v1378 = vadd.f32 0.0, %v1377
      %v1379 = vpop.f32.mrb[0].mxu0
      %1380 = vmatprep.mubr.f32.mxu0 0.0
      %1381 = vmatmul.mubr.f32.gmra.mrb[0].mxu0 %v1196
      %v1382 = vpop.f32.mrb[0].mxu0
      %v1383 = vadd.f32 0.0, %v1382
      %v1384 = vpop.f32.mrb[0].mxu0
      %1385 = vmatprep.mubr.f32.mxu0 0.0
      %1386 = vmatmul.mubr.f32.gmra.mrb[0].mxu0 %v1197
      %v1387 = vpop.f32.mrb[0].mxu0
      %v1388 = vadd.f32 0.0, %v1387
      %v1389 = vpop.f32.mrb[0].mxu0
      %1390 = vmatprep.mubr.f32.mxu0 0.0
      %1391 = vmatmul.mubr.f32.gmra.mrb[0].mxu0 %v1198
      %v1392 = vpop.f32.mrb[0].mxu0
      %v1393 = vadd.f32 0.0, %v1392
      %v1394 = vpop.f32.mrb[0].mxu0
      %1395 = vmatprep.mubr.f32.mxu0 0.0
      %1396 = vmatmul.mubr.f32.gmra.mrb[0].mxu0 %v1199
      %v1397 = vpop.f32.mrb[0].mxu0
      %v1398 = vadd.f32 0.0, %v1397
      %v1399 = vpop.f32.mrb[0].mxu0
      %1400 = vmatprep.mubr.f32.mxu0 0.0
      %1401 = vmatmul.mubr.f32.gmra.mrb[0].mxu0 %v1200
      %v1402 = vpop.f32.mrb[0].mxu0
      %v1403 = vadd.f32 0.0, %v1402
      %v1404 = vpop.f32.mrb[0].mxu0
      %1405 = vmatprep.mubr.f32.mxu0 0.0
      %1406 = vmatmul.mubr.f32.gmra.mrb[0].mxu0 %v1201
      %v1407 = vpop.f32.mrb[0].mxu0
      %v1408 = vadd.f32 0.0, %v1407
      %v1409 = vpop.f32.mrb[0].mxu0
      %1410 = vmatprep.mubr.f32.mxu0 0.0
      %1411 = vmatmul.mubr.f32.gmra.mrb[0].mxu0 %v1202
      %v1412 = vpop.f32.mrb[0].mxu0
      %v1413 = vadd.f32 0.0, %v1412
      %v1414 = vpop.f32.mrb[0].mxu0
      %1415 = vmatprep.mubr.f32.mxu0 0.0
      %1416 = vmatmul.mubr.f32.gmra.mrb[0].mxu0 %v1203
      %v1417 = vpop.f32.mrb[0].mxu0
      %v1418 = vadd.f32 0.0, %v1417
      %v1419 = vpop.f32.mrb[0].mxu0
      %1420 = vmatprep.mubr.f32.mxu0 0.0
      %1421 = vmatmul.mubr.f32.gmra.mrb[0].mxu0 %v1204
      %v1422 = vpop.f32.mrb[0].mxu0
      %v1423 = vadd.f32 0.0, %v1422
      %v1424 = vpop.f32.mrb[0].mxu0
      %1425 = vmatprep.mubr.f32.mxu0 0.0
      %1426 = vmatmul.mubr.f32.gmra.mrb[0].mxu0 %v1205
      %v1427 = vpop.f32.mrb[0].mxu0
      %v1428 = vadd.f32 0.0, %v1427
      %v1429 = vpop.f32.mrb[0].mxu0
      %1430 = vmatprep.mubr.f32.mxu0 0.0
      %1431 = vmatmul.mubr.f32.gmra.mrb[0].mxu0 %v1206
      %v1432 = vpop.f32.mrb[0].mxu0
      %v1433 = vadd.f32 0.0, %v1432
      %v1434 = vpop.f32.mrb[0].mxu0
      %1435 = vmatprep.mubr.f32.mxu0 0.0
      %1436 = vmatmul.mubr.f32.gmra.mrb[0].mxu0 %v1207
      %v1437 = vpop.f32.mrb[0].mxu0
      %v1438 = vadd.f32 0.0, %v1437
      %v1439 = vpop.f32.mrb[0].mxu0
      %1440 = vmatprep.mubr.f32.mxu0 0.0
      %1441 = vmatmul.mubr.f32.gmra.mrb[0].mxu0 %v1208
      %v1442 = vpop.f32.mrb[0].mxu0
      %v1443 = vadd.f32 0.0, %v1442
      %v1444 = vpop.f32.mrb[0].mxu0
      %1445 = vmatprep.mubr.f32.mxu0 0.0
      %1446 = vmatmul.mubr.f32.gmra.mrb[0].mxu0 %v1209
      %v1447 = vpop.f32.mrb[0].mxu0
      %v1448 = vadd.f32 0.0, %v1447
      %v1449 = vpop.f32.mrb[0].mxu0
      %1450 = vdwg.mxu0
      %v1451 = vadd.f32 %v1143, %v1293
      %v1452 = vadd.f32 %v1144, %v1298
      %v1453 = vadd.f32 %v1145, %v1303
      %v1454 = vadd.f32 %v1146, %v1308
      %v1455 = vadd.f32 %v1147, %v1313
      %v1456 = vadd.f32 %v1148, %v1318
      %v1457 = vadd.f32 %v1149, %v1323
      %v1458 = vadd.f32 %v1150, %v1328
      %v1459 = vadd.f32 %v1151, %v1333
      %v1460 = vadd.f32 %v1152, %v1338
      %v1461 = vadd.f32 %v1153, %v1343
      %v1462 = vadd.f32 %v1154, %v1348
      %v1463 = vadd.f32 %v1155, %v1353
      %v1464 = vadd.f32 %v1156, %v1358
      %v1465 = vadd.f32 %v1157, %v1363
      %v1466 = vadd.f32 %v1158, %v1368
      %v1467 = vadd.f32 %v1159, %v1373
      %v1468 = vadd.f32 %v1160, %v1378
      %v1469 = vadd.f32 %v1161, %v1383
      %v1470 = vadd.f32 %v1162, %v1388
      %v1471 = vadd.f32 %v1163, %v1393
      %v1472 = vadd.f32 %v1164, %v1398
      %v1473 = vadd.f32 %v1165, %v1403
      %v1474 = vadd.f32 %v1166, %v1408
      %v1475 = vadd.f32 %v1167, %v1413
      %v1476 = vadd.f32 %v1168, %v1418
      %v1477 = vadd.f32 %v1169, %v1423
      %v1478 = vadd.f32 %v1170, %v1428
      %v1479 = vadd.f32 %v1171, %v1433
      %v1480 = vadd.f32 %v1172, %v1438
      %v1481 = vadd.f32 %v1173, %v1443
      %v1482 = vadd.f32 %v1174, %v1448
      %v1483 = vld [vmem:[%s1177 + $0x1] sm:$0xff]
      %v1484 = vld [vmem:[%s1177 + $0x9] sm:$0xff]
      %v1485 = vld [vmem:[%s1177 + $0x19] sm:$0xff]
      %v1486 = vld [vmem:[%s1177 + $0x21] sm:$0xff]
      %v1487 = vld [vmem:[%s1177 + $0x31] sm:$0xff]
      %v1488 = vld [vmem:[%s1177 + $0x39] sm:$0xff]
      %v1489 = vld [vmem:[%s1177 + $0x49] sm:$0xff]
      %v1490 = vld [vmem:[%s1177 + $0x51] sm:$0xff]
      %v1491 = vld [vmem:[%s1177 + $0x61] sm:$0xff]
      %v1492 = vld [vmem:[%s1177 + $0x69] sm:$0xff]
      %v1493 = vld [vmem:[%s1177 + $0x79] sm:$0xff]
      %v1494 = vld [vmem:[%s1177 + $0x81] sm:$0xff]
      %v1495 = vld [vmem:[%s1177 + $0x91] sm:$0xff]
      %v1496 = vld [vmem:[%s1177 + $0x99] sm:$0xff]
      %v1497 = vld [vmem:[%s1177 + $0xa9] sm:$0xff]
      %v1498 = vld [vmem:[%s1177 + $0xb1] sm:$0xff]
      %v1499 = vld [vmem:[%s1177 + $0xc1] sm:$0xff]
      %v1500 = vld [vmem:[%s1177 + $0xc9] sm:$0xff]
      %v1501 = vld [vmem:[%s1177 + $0xd9] sm:$0xff]
      %v1502 = vld [vmem:[%s1177 + $0xe1] sm:$0xff]
      %v1503 = vld [vmem:[%s1177 + $0xf1] sm:$0xff]
      %v1504 = vld [vmem:[%s1177 + $0xf9] sm:$0xff]
      %v1505 = vld [vmem:[%s1177 + $0x109] sm:$0xff]
      %v1506 = vld [vmem:[%s1177 + $0x111] sm:$0xff]
      %v1507 = vld [vmem:[%s1177 + $0x121] sm:$0xff]
      %v1508 = vld [vmem:[%s1177 + $0x129] sm:$0xff]
      %v1509 = vld [vmem:[%s1177 + $0x139] sm:$0xff]
      %v1510 = vld [vmem:[%s1177 + $0x141] sm:$0xff]
      %v1511 = vld [vmem:[%s1177 + $0x151] sm:$0xff]
      %v1512 = vld [vmem:[%s1177 + $0x159] sm:$0xff]
      %v1513 = vld [vmem:[%s1177 + $0x169] sm:$0xff]
      %v1514 = vld [vmem:[%s1177 + $0x171] sm:$0xff]
      %v1515 = vld [vmem:[%s292 + $0x200] sm:$0xff]
      %v1516 = vld [vmem:[%s292 + $0x208] sm:$0xff]
      %v1517 = vld [vmem:[%s292 + $0x210] sm:$0xff]
      %v1518 = vld [vmem:[%s292 + $0x218] sm:$0xff]
      %v1519 = vld [vmem:[%s292 + $0x220] sm:$0xff]
      %v1520 = vld [vmem:[%s292 + $0x228] sm:$0xff]
      %v1521 = vld [vmem:[%s292 + $0x230] sm:$0xff]
      %v1522 = vld [vmem:[%s292 + $0x238] sm:$0xff]
      %v1523 = vld [vmem:[%s292 + $0x240] sm:$0xff]
      %v1524 = vld [vmem:[%s292 + $0x248] sm:$0xff]
      %v1525 = vld [vmem:[%s292 + $0x250] sm:$0xff]
      %v1526 = vld [vmem:[%s292 + $0x258] sm:$0xff]
      %v1527 = vld [vmem:[%s292 + $0x260] sm:$0xff]
      %v1528 = vld [vmem:[%s292 + $0x268] sm:$0xff]
      %v1529 = vld [vmem:[%s292 + $0x270] sm:$0xff]
      %v1530 = vld [vmem:[%s292 + $0x278] sm:$0xff]
      %1531 = vmatprep.subr.mxu0 0.0
      %1532 = vmatpush1.msra.mxu0 %v1515
      %1533 = vmatprep.subr.mxu0 0.0
      %1534 = vmatpush1.msra.mxu0 %v1516
      %1535 = vmatprep.subr.mxu0 0.0
      %1536 = vmatpush1.msra.mxu0 %v1517
      %1537 = vmatprep.subr.mxu0 0.0
      %1538 = vmatpush1.msra.mxu0 %v1518
      %1539 = vmatprep.subr.mxu0 0.0
      %1540 = vmatpush1.msra.mxu0 %v1519
      %1541 = vmatprep.subr.mxu0 0.0
      %1542 = vmatpush1.msra.mxu0 %v1520
      %1543 = vmatprep.subr.mxu0 0.0
      %1544 = vmatpush1.msra.mxu0 %v1521
      %1545 = vmatprep.subr.mxu0 0.0
      %1546 = vmatpush1.msra.mxu0 %v1522
      %1547 = vmatprep.subr.mxu0 0.0
      %1548 = vmatpush1.msra.mxu0 %v1523
      %1549 = vmatprep.subr.mxu0 0.0
      %1550 = vmatpush1.msra.mxu0 %v1524
      %1551 = vmatprep.subr.mxu0 0.0
      %1552 = vmatpush1.msra.mxu0 %v1525
      %1553 = vmatprep.subr.mxu0 0.0
      %1554 = vmatpush1.msra.mxu0 %v1526
      %1555 = vmatprep.subr.mxu0 0.0
      %1556 = vmatpush1.msra.mxu0 %v1527
      %1557 = vmatprep.subr.mxu0 0.0
      %1558 = vmatpush1.msra.mxu0 %v1528
      %1559 = vmatprep.subr.mxu0 0.0
      %1560 = vmatpush1.msra.mxu0 %v1529
      %1561 = vmatprep.subr.mxu0 0.0
      %1562 = vmatpush1.msra.mxu0 %v1530
      %1563 = vmatprep.subr.mxu0 0.0
      %1564 = vmatpush1.msra.mxu0 0.0
      %1565 = vmatprep.subr.mxu0 0.0
      %1566 = vmatpush1.msra.mxu0 0.0
      %1567 = vmatprep.subr.mxu0 0.0
      %1568 = vmatpush1.msra.mxu0 0.0
      %1569 = vmatprep.subr.mxu0 0.0
      %1570 = vmatpush1.msra.mxu0 0.0
      %1571 = vmatprep.subr.mxu0 0.0
      %1572 = vmatpush1.msra.mxu0 0.0
      %1573 = vmatprep.subr.mxu0 0.0
      %1574 = vmatpush1.msra.mxu0 0.0
      %1575 = vmatprep.subr.mxu0 0.0
      %1576 = vmatpush1.msra.mxu0 0.0
      %1577 = vmatprep.subr.mxu0 0.0
      %1578 = vmatpush1.msra.mxu0 0.0
      %1579 = vmatprep.subr.mxu0 0.0
      %1580 = vmatpush1.msra.mxu0 0.0
      %1581 = vmatprep.subr.mxu0 0.0
      %1582 = vmatpush1.msra.mxu0 0.0
      %1583 = vmatprep.subr.mxu0 0.0
      %1584 = vmatpush1.msra.mxu0 0.0
      %1585 = vmatprep.subr.mxu0 0.0
      %1586 = vmatpush1.msra.mxu0 0.0
      %1587 = vmatprep.subr.mxu0 0.0
      %1588 = vmatpush1.msra.mxu0 0.0
      %1589 = vmatprep.subr.mxu0 0.0
      %1590 = vmatpush1.msra.mxu0 0.0
      %1591 = vmatprep.subr.mxu0 0.0
      %1592 = vmatpush1.msra.mxu0 0.0
      %1593 = vmatprep.subr.mxu0 0.0
      %1594 = vmatpush1.msra.mxu0 0.0
      %1595 = vmatprep.mubr.f32.mxu0 0.0
      %1596 = vmatmul.mubr.f32.gmra.mrb[0].mxu0 %v1483
      %v1597 = vpop.f32.mrb[0].mxu0
      %v1598 = vadd.f32 0.0, %v1597
      %v1599 = vpop.f32.mrb[0].mxu0
      %1600 = vmatprep.mubr.f32.mxu0 0.0
      %1601 = vmatmul.mubr.f32.gmra.mrb[0].mxu0 %v1484
      %v1602 = vpop.f32.mrb[0].mxu0
      %v1603 = vadd.f32 0.0, %v1602
      %v1604 = vpop.f32.mrb[0].mxu0
      %1605 = vmatprep.mubr.f32.mxu0 0.0
      %1606 = vmatmul.mubr.f32.gmra.mrb[0].mxu0 %v1485
      %v1607 = vpop.f32.mrb[0].mxu0
      %v1608 = vadd.f32 0.0, %v1607
      %v1609 = vpop.f32.mrb[0].mxu0
      %1610 = vmatprep.mubr.f32.mxu0 0.0
      %1611 = vmatmul.mubr.f32.gmra.mrb[0].mxu0 %v1486
      %v1612 = vpop.f32.mrb[0].mxu0
      %v1613 = vadd.f32 0.0, %v1612
      %v1614 = vpop.f32.mrb[0].mxu0
      %1615 = vmatprep.mubr.f32.mxu0 0.0
      %1616 = vmatmul.mubr.f32.gmra.mrb[0].mxu0 %v1487
      %v1617 = vpop.f32.mrb[0].mxu0
      %v1618 = vadd.f32 0.0, %v1617
      %v1619 = vpop.f32.mrb[0].mxu0
      %1620 = vmatprep.mubr.f32.mxu0 0.0
      %1621 = vmatmul.mubr.f32.gmra.mrb[0].mxu0 %v1488
      %v1622 = vpop.f32.mrb[0].mxu0
      %v1623 = vadd.f32 0.0, %v1622
      %v1624 = vpop.f32.mrb[0].mxu0
      %1625 = vmatprep.mubr.f32.mxu0 0.0
      %1626 = vmatmul.mubr.f32.gmra.mrb[0].mxu0 %v1489
      %v1627 = vpop.f32.mrb[0].mxu0
      %v1628 = vadd.f32 0.0, %v1627
      %v1629 = vpop.f32.mrb[0].mxu0
      %1630 = vmatprep.mubr.f32.mxu0 0.0
      %1631 = vmatmul.mubr.f32.gmra.mrb[0].mxu0 %v1490
      %v1632 = vpop.f32.mrb[0].mxu0
      %v1633 = vadd.f32 0.0, %v1632
      %v1634 = vpop.f32.mrb[0].mxu0
      %1635 = vmatprep.mubr.f32.mxu0 0.0
      %1636 = vmatmul.mubr.f32.gmra.mrb[0].mxu0 %v1491
      %v1637 = vpop.f32.mrb[0].mxu0
      %v1638 = vadd.f32 0.0, %v1637
      %v1639 = vpop.f32.mrb[0].mxu0
      %1640 = vmatprep.mubr.f32.mxu0 0.0
      %1641 = vmatmul.mubr.f32.gmra.mrb[0].mxu0 %v1492
      %v1642 = vpop.f32.mrb[0].mxu0
      %v1643 = vadd.f32 0.0, %v1642
      %v1644 = vpop.f32.mrb[0].mxu0
      %1645 = vmatprep.mubr.f32.mxu0 0.0
      %1646 = vmatmul.mubr.f32.gmra.mrb[0].mxu0 %v1493
      %v1647 = vpop.f32.mrb[0].mxu0
      %v1648 = vadd.f32 0.0, %v1647
      %v1649 = vpop.f32.mrb[0].mxu0
      %1650 = vmatprep.mubr.f32.mxu0 0.0
      %1651 = vmatmul.mubr.f32.gmra.mrb[0].mxu0 %v1494
      %v1652 = vpop.f32.mrb[0].mxu0
      %v1653 = vadd.f32 0.0, %v1652
      %v1654 = vpop.f32.mrb[0].mxu0
      %1655 = vmatprep.mubr.f32.mxu0 0.0
      %1656 = vmatmul.mubr.f32.gmra.mrb[0].mxu0 %v1495
      %v1657 = vpop.f32.mrb[0].mxu0
      %v1658 = vadd.f32 0.0, %v1657
      %v1659 = vpop.f32.mrb[0].mxu0
      %1660 = vmatprep.mubr.f32.mxu0 0.0
      %1661 = vmatmul.mubr.f32.gmra.mrb[0].mxu0 %v1496
      %v1662 = vpop.f32.mrb[0].mxu0
      %v1663 = vadd.f32 0.0, %v1662
      %v1664 = vpop.f32.mrb[0].mxu0
      %1665 = vmatprep.mubr.f32.mxu0 0.0
      %1666 = vmatmul.mubr.f32.gmra.mrb[0].mxu0 %v1497
      %v1667 = vpop.f32.mrb[0].mxu0
      %v1668 = vadd.f32 0.0, %v1667
      %v1669 = vpop.f32.mrb[0].mxu0
      %1670 = vmatprep.mubr.f32.mxu0 0.0
      %1671 = vmatmul.mubr.f32.gmra.mrb[0].mxu0 %v1498
      %v1672 = vpop.f32.mrb[0].mxu0
      %v1673 = vadd.f32 0.0, %v1672
      %v1674 = vpop.f32.mrb[0].mxu0
      %1675 = vmatprep.mubr.f32.mxu0 0.0
      %1676 = vmatmul.mubr.f32.gmra.mrb[0].mxu0 %v1499
      %v1677 = vpop.f32.mrb[0].mxu0
      %v1678 = vadd.f32 0.0, %v1677
      %v1679 = vpop.f32.mrb[0].mxu0
      %1680 = vmatprep.mubr.f32.mxu0 0.0
      %1681 = vmatmul.mubr.f32.gmra.mrb[0].mxu0 %v1500
      %v1682 = vpop.f32.mrb[0].mxu0
      %v1683 = vadd.f32 0.0, %v1682
      %v1684 = vpop.f32.mrb[0].mxu0
      %1685 = vmatprep.mubr.f32.mxu0 0.0
      %1686 = vmatmul.mubr.f32.gmra.mrb[0].mxu0 %v1501
      %v1687 = vpop.f32.mrb[0].mxu0
      %v1688 = vadd.f32 0.0, %v1687
      %v1689 = vpop.f32.mrb[0].mxu0
      %1690 = vmatprep.mubr.f32.mxu0 0.0
      %1691 = vmatmul.mubr.f32.gmra.mrb[0].mxu0 %v1502
      %v1692 = vpop.f32.mrb[0].mxu0
      %v1693 = vadd.f32 0.0, %v1692
      %v1694 = vpop.f32.mrb[0].mxu0
      %1695 = vmatprep.mubr.f32.mxu0 0.0
      %1696 = vmatmul.mubr.f32.gmra.mrb[0].mxu0 %v1503
      %v1697 = vpop.f32.mrb[0].mxu0
      %v1698 = vadd.f32 0.0, %v1697
      %v1699 = vpop.f32.mrb[0].mxu0
      %1700 = vmatprep.mubr.f32.mxu0 0.0
      %1701 = vmatmul.mubr.f32.gmra.mrb[0].mxu0 %v1504
      %v1702 = vpop.f32.mrb[0].mxu0
      %v1703 = vadd.f32 0.0, %v1702
      %v1704 = vpop.f32.mrb[0].mxu0
      %1705 = vmatprep.mubr.f32.mxu0 0.0
      %1706 = vmatmul.mubr.f32.gmra.mrb[0].mxu0 %v1505
      %v1707 = vpop.f32.mrb[0].mxu0
      %v1708 = vadd.f32 0.0, %v1707
      %v1709 = vpop.f32.mrb[0].mxu0
      %1710 = vmatprep.mubr.f32.mxu0 0.0
      %1711 = vmatmul.mubr.f32.gmra.mrb[0].mxu0 %v1506
      %v1712 = vpop.f32.mrb[0].mxu0
      %v1713 = vadd.f32 0.0, %v1712
      %v1714 = vpop.f32.mrb[0].mxu0
      %1715 = vmatprep.mubr.f32.mxu0 0.0
      %1716 = vmatmul.mubr.f32.gmra.mrb[0].mxu0 %v1507
      %v1717 = vpop.f32.mrb[0].mxu0
      %v1718 = vadd.f32 0.0, %v1717
      %v1719 = vpop.f32.mrb[0].mxu0
      %1720 = vmatprep.mubr.f32.mxu0 0.0
      %1721 = vmatmul.mubr.f32.gmra.mrb[0].mxu0 %v1508
      %v1722 = vpop.f32.mrb[0].mxu0
      %v1723 = vadd.f32 0.0, %v1722
      %v1724 = vpop.f32.mrb[0].mxu0
      %1725 = vmatprep.mubr.f32.mxu0 0.0
      %1726 = vmatmul.mubr.f32.gmra.mrb[0].mxu0 %v1509
      %v1727 = vpop.f32.mrb[0].mxu0
      %v1728 = vadd.f32 0.0, %v1727
      %v1729 = vpop.f32.mrb[0].mxu0
      %1730 = vmatprep.mubr.f32.mxu0 0.0
      %1731 = vmatmul.mubr.f32.gmra.mrb[0].mxu0 %v1510
      %v1732 = vpop.f32.mrb[0].mxu0
      %v1733 = vadd.f32 0.0, %v1732
      %v1734 = vpop.f32.mrb[0].mxu0
      %1735 = vmatprep.mubr.f32.mxu0 0.0
      %1736 = vmatmul.mubr.f32.gmra.mrb[0].mxu0 %v1511
      %v1737 = vpop.f32.mrb[0].mxu0
      %v1738 = vadd.f32 0.0, %v1737
      %v1739 = vpop.f32.mrb[0].mxu0
      %1740 = vmatprep.mubr.f32.mxu0 0.0
      %1741 = vmatmul.mubr.f32.gmra.mrb[0].mxu0 %v1512
      %v1742 = vpop.f32.mrb[0].mxu0
      %v1743 = vadd.f32 0.0, %v1742
      %v1744 = vpop.f32.mrb[0].mxu0
      %1745 = vmatprep.mubr.f32.mxu0 0.0
      %1746 = vmatmul.mubr.f32.gmra.mrb[0].mxu0 %v1513
      %v1747 = vpop.f32.mrb[0].mxu0
      %v1748 = vadd.f32 0.0, %v1747
      %v1749 = vpop.f32.mrb[0].mxu0
      %1750 = vmatprep.mubr.f32.mxu0 0.0
      %1751 = vmatmul.mubr.f32.gmra.mrb[0].mxu0 %v1514
      %v1752 = vpop.f32.mrb[0].mxu0
      %v1753 = vadd.f32 0.0, %v1752
      %v1754 = vpop.f32.mrb[0].mxu0
      %1755 = vdwg.mxu0
      %v1756 = vadd.f32 %v1451, %v1598
      %v1757 = vadd.f32 %v1452, %v1603
      %v1758 = vadd.f32 %v1453, %v1608
      %v1759 = vadd.f32 %v1454, %v1613
      %v1760 = vadd.f32 %v1455, %v1618
      %v1761 = vadd.f32 %v1456, %v1623
      %v1762 = vadd.f32 %v1457, %v1628
      %v1763 = vadd.f32 %v1458, %v1633
      %v1764 = vadd.f32 %v1459, %v1638
      %v1765 = vadd.f32 %v1460, %v1643
      %v1766 = vadd.f32 %v1461, %v1648
      %v1767 = vadd.f32 %v1462, %v1653
      %v1768 = vadd.f32 %v1463, %v1658
      %v1769 = vadd.f32 %v1464, %v1663
      %v1770 = vadd.f32 %v1465, %v1668
      %v1771 = vadd.f32 %v1466, %v1673
      %v1772 = vadd.f32 %v1467, %v1678
      %v1773 = vadd.f32 %v1468, %v1683
      %v1774 = vadd.f32 %v1469, %v1688
      %v1775 = vadd.f32 %v1470, %v1693
      %v1776 = vadd.f32 %v1471, %v1698
      %v1777 = vadd.f32 %v1472, %v1703
      %v1778 = vadd.f32 %v1473, %v1708
      %v1779 = vadd.f32 %v1474, %v1713
      %v1780 = vadd.f32 %v1475, %v1718
      %v1781 = vadd.f32 %v1476, %v1723
      %v1782 = vadd.f32 %v1477, %v1728
      %v1783 = vadd.f32 %v1478, %v1733
      %v1784 = vadd.f32 %v1479, %v1738
      %v1785 = vadd.f32 %v1480, %v1743
      %v1786 = vadd.f32 %v1481, %v1748
      %v1787 = vadd.f32 %v1482, %v1753
      %v1788 = vld [vmem:[%s1177 + $0x2] sm:$0xff]
      %v1789 = vld [vmem:[%s1177 + $0xa] sm:$0xff]
      %v1790 = vld [vmem:[%s1177 + $0x1a] sm:$0xff]
      %v1791 = vld [vmem:[%s1177 + $0x22] sm:$0xff]
      %v1792 = vld [vmem:[%s1177 + $0x32] sm:$0xff]
      %v1793 = vld [vmem:[%s1177 + $0x3a] sm:$0xff]
      %v1794 = vld [vmem:[%s1177 + $0x4a] sm:$0xff]
      %v1795 = vld [vmem:[%s1177 + $0x52] sm:$0xff]
      %v1796 = vld [vmem:[%s1177 + $0x62] sm:$0xff]
      %v1797 = vld [vmem:[%s1177 + $0x6a] sm:$0xff]
      %v1798 = vld [vmem:[%s1177 + $0x7a] sm:$0xff]
      %v1799 = vld [vmem:[%s1177 + $0x82] sm:$0xff]
      %v1800 = vld [vmem:[%s1177 + $0x92] sm:$0xff]
      %v1801 = vld [vmem:[%s1177 + $0x9a] sm:$0xff]
      %v1802 = vld [vmem:[%s1177 + $0xaa] sm:$0xff]
      %v1803 = vld [vmem:[%s1177 + $0xb2] sm:$0xff]
      %v1804 = vld [vmem:[%s1177 + $0xc2] sm:$0xff]
      %v1805 = vld [vmem:[%s1177 + $0xca] sm:$0xff]
      %v1806 = vld [vmem:[%s1177 + $0xda] sm:$0xff]
      %v1807 = vld [vmem:[%s1177 + $0xe2] sm:$0xff]
      %v1808 = vld [vmem:[%s1177 + $0xf2] sm:$0xff]
      %v1809 = vld [vmem:[%s1177 + $0xfa] sm:$0xff]
      %v1810 = vld [vmem:[%s1177 + $0x10a] sm:$0xff]
      %v1811 = vld [vmem:[%s1177 + $0x112] sm:$0xff]
      %v1812 = vld [vmem:[%s1177 + $0x122] sm:$0xff]
      %v1813 = vld [vmem:[%s1177 + $0x12a] sm:$0xff]
      %v1814 = vld [vmem:[%s1177 + $0x13a] sm:$0xff]
      %v1815 = vld [vmem:[%s1177 + $0x142] sm:$0xff]
      %v1816 = vld [vmem:[%s1177 + $0x152] sm:$0xff]
      %v1817 = vld [vmem:[%s1177 + $0x15a] sm:$0xff]
      %v1818 = vld [vmem:[%s1177 + $0x16a] sm:$0xff]
      %v1819 = vld [vmem:[%s1177 + $0x172] sm:$0xff]
      %v1820 = vld [vmem:[%s292 + $0x280] sm:$0xff]
      %v1821 = vld [vmem:[%s292 + $0x288] sm:$0xff]
      %v1822 = vld [vmem:[%s292 + $0x290] sm:$0xff]
      %v1823 = vld [vmem:[%s292 + $0x298] sm:$0xff]
      %v1824 = vld [vmem:[%s292 + $0x2a0] sm:$0xff]
      %v1825 = vld [vmem:[%s292 + $0x2a8] sm:$0xff]
      %v1826 = vld [vmem:[%s292 + $0x2b0] sm:$0xff]
      %v1827 = vld [vmem:[%s292 + $0x2b8] sm:$0xff]
      %v1828 = vld [vmem:[%s292 + $0x2c0] sm:$0xff]
      %v1829 = vld [vmem:[%s292 + $0x2c8] sm:$0xff]
      %v1830 = vld [vmem:[%s292 + $0x2d0] sm:$0xff]
      %v1831 = vld [vmem:[%s292 + $0x2d8] sm:$0xff]
      %v1832 = vld [vmem:[%s292 + $0x2e0] sm:$0xff]
      %v1833 = vld [vmem:[%s292 + $0x2e8] sm:$0xff]
      %v1834 = vld [vmem:[%s292 + $0x2f0] sm:$0xff]
      %v1835 = vld [vmem:[%s292 + $0x2f8] sm:$0xff]
      %1836 = vmatprep.subr.mxu0 0.0
      %1837 = vmatpush1.msra.mxu0 %v1820
      %1838 = vmatprep.subr.mxu0 0.0
      %1839 = vmatpush1.msra.mxu0 %v1821
      %1840 = vmatprep.subr.mxu0 0.0
      %1841 = vmatpush1.msra.mxu0 %v1822
      %1842 = vmatprep.subr.mxu0 0.0
      %1843 = vmatpush1.msra.mxu0 %v1823
      %1844 = vmatprep.subr.mxu0 0.0
      %1845 = vmatpush1.msra.mxu0 %v1824
      %1846 = vmatprep.subr.mxu0 0.0
      %1847 = vmatpush1.msra.mxu0 %v1825
      %1848 = vmatprep.subr.mxu0 0.0
      %1849 = vmatpush1.msra.mxu0 %v1826
      %1850 = vmatprep.subr.mxu0 0.0
      %1851 = vmatpush1.msra.mxu0 %v1827
      %1852 = vmatprep.subr.mxu0 0.0
      %1853 = vmatpush1.msra.mxu0 %v1828
      %1854 = vmatprep.subr.mxu0 0.0
      %1855 = vmatpush1.msra.mxu0 %v1829
      %1856 = vmatprep.subr.mxu0 0.0
      %1857 = vmatpush1.msra.mxu0 %v1830
      %1858 = vmatprep.subr.mxu0 0.0
      %1859 = vmatpush1.msra.mxu0 %v1831
      %1860 = vmatprep.subr.mxu0 0.0
      %1861 = vmatpush1.msra.mxu0 %v1832
      %1862 = vmatprep.subr.mxu0 0.0
      %1863 = vmatpush1.msra.mxu0 %v1833
      %1864 = vmatprep.subr.mxu0 0.0
      %1865 = vmatpush1.msra.mxu0 %v1834
      %1866 = vmatprep.subr.mxu0 0.0
      %1867 = vmatpush1.msra.mxu0 %v1835
      %1868 = vmatprep.subr.mxu0 0.0
      %1869 = vmatpush1.msra.mxu0 0.0
      %1870 = vmatprep.subr.mxu0 0.0
      %1871 = vmatpush1.msra.mxu0 0.0
      %1872 = vmatprep.subr.mxu0 0.0
      %1873 = vmatpush1.msra.mxu0 0.0
      %1874 = vmatprep.subr.mxu0 0.0
      %1875 = vmatpush1.msra.mxu0 0.0
      %1876 = vmatprep.subr.mxu0 0.0
      %1877 = vmatpush1.msra.mxu0 0.0
      %1878 = vmatprep.subr.mxu0 0.0
      %1879 = vmatpush1.msra.mxu0 0.0
      %1880 = vmatprep.subr.mxu0 0.0
      %1881 = vmatpush1.msra.mxu0 0.0
      %1882 = vmatprep.subr.mxu0 0.0
      %1883 = vmatpush1.msra.mxu0 0.0
      %1884 = vmatprep.subr.mxu0 0.0
      %1885 = vmatpush1.msra.mxu0 0.0
      %1886 = vmatprep.subr.mxu0 0.0
      %1887 = vmatpush1.msra.mxu0 0.0
      %1888 = vmatprep.subr.mxu0 0.0
      %1889 = vmatpush1.msra.mxu0 0.0
      %1890 = vmatprep.subr.mxu0 0.0
      %1891 = vmatpush1.msra.mxu0 0.0
      %1892 = vmatprep.subr.mxu0 0.0
      %1893 = vmatpush1.msra.mxu0 0.0
      %1894 = vmatprep.subr.mxu0 0.0
      %1895 = vmatpush1.msra.mxu0 0.0
      %1896 = vmatprep.subr.mxu0 0.0
      %1897 = vmatpush1.msra.mxu0 0.0
      %1898 = vmatprep.subr.mxu0 0.0
      %1899 = vmatpush1.msra.mxu0 0.0
      %1900 = vmatprep.mubr.f32.mxu0 0.0
      %1901 = vmatmul.mubr.f32.gmra.mrb[0].mxu0 %v1788
      %v1902 = vpop.f32.mrb[0].mxu0
      %v1903 = vadd.f32 0.0, %v1902
      %v1904 = vpop.f32.mrb[0].mxu0
      %1905 = vmatprep.mubr.f32.mxu0 0.0
      %1906 = vmatmul.mubr.f32.gmra.mrb[0].mxu0 %v1789
      %v1907 = vpop.f32.mrb[0].mxu0
      %v1908 = vadd.f32 0.0, %v1907
      %v1909 = vpop.f32.mrb[0].mxu0
      %1910 = vmatprep.mubr.f32.mxu0 0.0
      %1911 = vmatmul.mubr.f32.gmra.mrb[0].mxu0 %v1790
      %v1912 = vpop.f32.mrb[0].mxu0
      %v1913 = vadd.f32 0.0, %v1912
      %v1914 = vpop.f32.mrb[0].mxu0
      %1915 = vmatprep.mubr.f32.mxu0 0.0
      %1916 = vmatmul.mubr.f32.gmra.mrb[0].mxu0 %v1791
      %v1917 = vpop.f32.mrb[0].mxu0
      %v1918 = vadd.f32 0.0, %v1917
      %v1919 = vpop.f32.mrb[0].mxu0
      %1920 = vmatprep.mubr.f32.mxu0 0.0
      %1921 = vmatmul.mubr.f32.gmra.mrb[0].mxu0 %v1792
      %v1922 = vpop.f32.mrb[0].mxu0
      %v1923 = vadd.f32 0.0, %v1922
      %v1924 = vpop.f32.mrb[0].mxu0
      %1925 = vmatprep.mubr.f32.mxu0 0.0
      %1926 = vmatmul.mubr.f32.gmra.mrb[0].mxu0 %v1793
      %v1927 = vpop.f32.mrb[0].mxu0
      %v1928 = vadd.f32 0.0, %v1927
      %v1929 = vpop.f32.mrb[0].mxu0
      %1930 = vmatprep.mubr.f32.mxu0 0.0
      %1931 = vmatmul.mubr.f32.gmra.mrb[0].mxu0 %v1794
      %v1932 = vpop.f32.mrb[0].mxu0
      %v1933 = vadd.f32 0.0, %v1932
      %v1934 = vpop.f32.mrb[0].mxu0
      %1935 = vmatprep.mubr.f32.mxu0 0.0
      %1936 = vmatmul.mubr.f32.gmra.mrb[0].mxu0 %v1795
      %v1937 = vpop.f32.mrb[0].mxu0
      %v1938 = vadd.f32 0.0, %v1937
      %v1939 = vpop.f32.mrb[0].mxu0
      %1940 = vmatprep.mubr.f32.mxu0 0.0
      %1941 = vmatmul.mubr.f32.gmra.mrb[0].mxu0 %v1796
      %v1942 = vpop.f32.mrb[0].mxu0
      %v1943 = vadd.f32 0.0, %v1942
      %v1944 = vpop.f32.mrb[0].mxu0
      %1945 = vmatprep.mubr.f32.mxu0 0.0
      %1946 = vmatmul.mubr.f32.gmra.mrb[0].mxu0 %v1797
      %v1947 = vpop.f32.mrb[0].mxu0
      %v1948 = vadd.f32 0.0, %v1947
      %v1949 = vpop.f32.mrb[0].mxu0
      %1950 = vmatprep.mubr.f32.mxu0 0.0
      %1951 = vmatmul.mubr.f32.gmra.mrb[0].mxu0 %v1798
      %v1952 = vpop.f32.mrb[0].mxu0
      %v1953 = vadd.f32 0.0, %v1952
      %v1954 = vpop.f32.mrb[0].mxu0
      %1955 = vmatprep.mubr.f32.mxu0 0.0
      %1956 = vmatmul.mubr.f32.gmra.mrb[0].mxu0 %v1799
      %v1957 = vpop.f32.mrb[0].mxu0
      %v1958 = vadd.f32 0.0, %v1957
      %v1959 = vpop.f32.mrb[0].mxu0
      %1960 = vmatprep.mubr.f32.mxu0 0.0
      %1961 = vmatmul.mubr.f32.gmra.mrb[0].mxu0 %v1800
      %v1962 = vpop.f32.mrb[0].mxu0
      %v1963 = vadd.f32 0.0, %v1962
      %v1964 = vpop.f32.mrb[0].mxu0
      %1965 = vmatprep.mubr.f32.mxu0 0.0
      %1966 = vmatmul.mubr.f32.gmra.mrb[0].mxu0 %v1801
      %v1967 = vpop.f32.mrb[0].mxu0
      %v1968 = vadd.f32 0.0, %v1967
      %v1969 = vpop.f32.mrb[0].mxu0
      %1970 = vmatprep.mubr.f32.mxu0 0.0
      %1971 = vmatmul.mubr.f32.gmra.mrb[0].mxu0 %v1802
      %v1972 = vpop.f32.mrb[0].mxu0
      %v1973 = vadd.f32 0.0, %v1972
      %v1974 = vpop.f32.mrb[0].mxu0
      %1975 = vmatprep.mubr.f32.mxu0 0.0
      %1976 = vmatmul.mubr.f32.gmra.mrb[0].mxu0 %v1803
      %v1977 = vpop.f32.mrb[0].mxu0
      %v1978 = vadd.f32 0.0, %v1977
      %v1979 = vpop.f32.mrb[0].mxu0
      %1980 = vmatprep.mubr.f32.mxu0 0.0
      %1981 = vmatmul.mubr.f32.gmra.mrb[0].mxu0 %v1804
      %v1982 = vpop.f32.mrb[0].mxu0
      %v1983 = vadd.f32 0.0, %v1982
      %v1984 = vpop.f32.mrb[0].mxu0
      %1985 = vmatprep.mubr.f32.mxu0 0.0
      %1986 = vmatmul.mubr.f32.gmra.mrb[0].mxu0 %v1805
      %v1987 = vpop.f32.mrb[0].mxu0
      %v1988 = vadd.f32 0.0, %v1987
      %v1989 = vpop.f32.mrb[0].mxu0
      %1990 = vmatprep.mubr.f32.mxu0 0.0
      %1991 = vmatmul.mubr.f32.gmra.mrb[0].mxu0 %v1806
      %v1992 = vpop.f32.mrb[0].mxu0
      %v1993 = vadd.f32 0.0, %v1992
      %v1994 = vpop.f32.mrb[0].mxu0
      %1995 = vmatprep.mubr.f32.mxu0 0.0
      %1996 = vmatmul.mubr.f32.gmra.mrb[0].mxu0 %v1807
      %v1997 = vpop.f32.mrb[0].mxu0
      %v1998 = vadd.f32 0.0, %v1997
      %v1999 = vpop.f32.mrb[0].mxu0
      %2000 = vmatprep.mubr.f32.mxu0 0.0
      %2001 = vmatmul.mubr.f32.gmra.mrb[0].mxu0 %v1808
      %v2002 = vpop.f32.mrb[0].mxu0
      %v2003 = vadd.f32 0.0, %v2002
      %v2004 = vpop.f32.mrb[0].mxu0
      %2005 = vmatprep.mubr.f32.mxu0 0.0
      %2006 = vmatmul.mubr.f32.gmra.mrb[0].mxu0 %v1809
      %v2007 = vpop.f32.mrb[0].mxu0
      %v2008 = vadd.f32 0.0, %v2007
      %v2009 = vpop.f32.mrb[0].mxu0
      %2010 = vmatprep.mubr.f32.mxu0 0.0
      %2011 = vmatmul.mubr.f32.gmra.mrb[0].mxu0 %v1810
      %v2012 = vpop.f32.mrb[0].mxu0
      %v2013 = vadd.f32 0.0, %v2012
      %v2014 = vpop.f32.mrb[0].mxu0
      %2015 = vmatprep.mubr.f32.mxu0 0.0
      %2016 = vmatmul.mubr.f32.gmra.mrb[0].mxu0 %v1811
      %v2017 = vpop.f32.mrb[0].mxu0
      %v2018 = vadd.f32 0.0, %v2017
      %v2019 = vpop.f32.mrb[0].mxu0
      %2020 = vmatprep.mubr.f32.mxu0 0.0
      %2021 = vmatmul.mubr.f32.gmra.mrb[0].mxu0 %v1812
      %v2022 = vpop.f32.mrb[0].mxu0
      %v2023 = vadd.f32 0.0, %v2022
      %v2024 = vpop.f32.mrb[0].mxu0
      %2025 = vmatprep.mubr.f32.mxu0 0.0
      %2026 = vmatmul.mubr.f32.gmra.mrb[0].mxu0 %v1813
      %v2027 = vpop.f32.mrb[0].mxu0
      %v2028 = vadd.f32 0.0, %v2027
      %v2029 = vpop.f32.mrb[0].mxu0
      %2030 = vmatprep.mubr.f32.mxu0 0.0
      %2031 = vmatmul.mubr.f32.gmra.mrb[0].mxu0 %v1814
      %v2032 = vpop.f32.mrb[0].mxu0
      %v2033 = vadd.f32 0.0, %v2032
      %v2034 = vpop.f32.mrb[0].mxu0
      %2035 = vmatprep.mubr.f32.mxu0 0.0
      %2036 = vmatmul.mubr.f32.gmra.mrb[0].mxu0 %v1815
      %v2037 = vpop.f32.mrb[0].mxu0
      %v2038 = vadd.f32 0.0, %v2037
      %v2039 = vpop.f32.mrb[0].mxu0
      %2040 = vmatprep.mubr.f32.mxu0 0.0
      %2041 = vmatmul.mubr.f32.gmra.mrb[0].mxu0 %v1816
      %v2042 = vpop.f32.mrb[0].mxu0
      %v2043 = vadd.f32 0.0, %v2042
      %v2044 = vpop.f32.mrb[0].mxu0
      %2045 = vmatprep.mubr.f32.mxu0 0.0
      %2046 = vmatmul.mubr.f32.gmra.mrb[0].mxu0 %v1817
      %v2047 = vpop.f32.mrb[0].mxu0
      %v2048 = vadd.f32 0.0, %v2047
      %v2049 = vpop.f32.mrb[0].mxu0
      %2050 = vmatprep.mubr.f32.mxu0 0.0
      %2051 = vmatmul.mubr.f32.gmra.mrb[0].mxu0 %v1818
      %v2052 = vpop.f32.mrb[0].mxu0
      %v2053 = vadd.f32 0.0, %v2052
      %v2054 = vpop.f32.mrb[0].mxu0
      %2055 = vmatprep.mubr.f32.mxu0 0.0
      %2056 = vmatmul.mubr.f32.gmra.mrb[0].mxu0 %v1819
      %v2057 = vpop.f32.mrb[0].mxu0
      %v2058 = vadd.f32 0.0, %v2057
      %v2059 = vpop.f32.mrb[0].mxu0
      %2060 = vdwg.mxu0
      %v2061 = vadd.f32 %v1756, %v1903
      %v2062 = vadd.f32 %v1757, %v1908
      %v2063 = vadd.f32 %v1758, %v1913
      %v2064 = vadd.f32 %v1759, %v1918
      %v2065 = vadd.f32 %v1760, %v1923
      %v2066 = vadd.f32 %v1761, %v1928
      %v2067 = vadd.f32 %v1762, %v1933
      %v2068 = vadd.f32 %v1763, %v1938
      %v2069 = vadd.f32 %v1764, %v1943
      %v2070 = vadd.f32 %v1765, %v1948
      %v2071 = vadd.f32 %v1766, %v1953
      %v2072 = vadd.f32 %v1767, %v1958
      %v2073 = vadd.f32 %v1768, %v1963
      %v2074 = vadd.f32 %v1769, %v1968
      %v2075 = vadd.f32 %v1770, %v1973
      %v2076 = vadd.f32 %v1771, %v1978
      %v2077 = vadd.f32 %v1772, %v1983
      %v2078 = vadd.f32 %v1773, %v1988
      %v2079 = vadd.f32 %v1774, %v1993
      %v2080 = vadd.f32 %v1775, %v1998
      %v2081 = vadd.f32 %v1776, %v2003
      %v2082 = vadd.f32 %v1777, %v2008
      %v2083 = vadd.f32 %v1778, %v2013
      %v2084 = vadd.f32 %v1779, %v2018
      %v2085 = vadd.f32 %v1780, %v2023
      %v2086 = vadd.f32 %v1781, %v2028
      %v2087 = vadd.f32 %v1782, %v2033
      %v2088 = vadd.f32 %v1783, %v2038
      %v2089 = vadd.f32 %v1784, %v2043
      %v2090 = vadd.f32 %v1785, %v2048
      %v2091 = vadd.f32 %v1786, %v2053
      %v2092 = vadd.f32 %v1787, %v2058
      %s2093 = sadd.s32 0, 2
      %s2094 = smul.u32 %s2093, 24
      %s2095 = scalar_lea.vmem %s288, %s2094
      %v2096 = vld [vmem:[%s2095] sm:$0xff]
      %v2097 = vld [vmem:[%s2095 + $0x8] sm:$0xff]
      %v2098 = vld [vmem:[%s2095 + $0x18] sm:$0xff]
      %v2099 = vld [vmem:[%s2095 + $0x20] sm:$0xff]
      %v2100 = vld [vmem:[%s2095 + $0x30] sm:$0xff]
      %v2101 = vld [vmem:[%s2095 + $0x38] sm:$0xff]
      %v2102 = vld [vmem:[%s2095 + $0x48] sm:$0xff]
      %v2103 = vld [vmem:[%s2095 + $0x50] sm:$0xff]
      %v2104 = vld [vmem:[%s2095 + $0x60] sm:$0xff]
      %v2105 = vld [vmem:[%s2095 + $0x68] sm:$0xff]
      %v2106 = vld [vmem:[%s2095 + $0x78] sm:$0xff]
      %v2107 = vld [vmem:[%s2095 + $0x80] sm:$0xff]
      %v2108 = vld [vmem:[%s2095 + $0x90] sm:$0xff]
      %v2109 = vld [vmem:[%s2095 + $0x98] sm:$0xff]
      %v2110 = vld [vmem:[%s2095 + $0xa8] sm:$0xff]
      %v2111 = vld [vmem:[%s2095 + $0xb0] sm:$0xff]
      %v2112 = vld [vmem:[%s2095 + $0xc0] sm:$0xff]
      %v2113 = vld [vmem:[%s2095 + $0xc8] sm:$0xff]
      %v2114 = vld [vmem:[%s2095 + $0xd8] sm:$0xff]
      %v2115 = vld [vmem:[%s2095 + $0xe0] sm:$0xff]
      %v2116 = vld [vmem:[%s2095 + $0xf0] sm:$0xff]
      %v2117 = vld [vmem:[%s2095 + $0xf8] sm:$0xff]
      %v2118 = vld [vmem:[%s2095 + $0x108] sm:$0xff]
      %v2119 = vld [vmem:[%s2095 + $0x110] sm:$0xff]
      %v2120 = vld [vmem:[%s2095 + $0x120] sm:$0xff]
      %v2121 = vld [vmem:[%s2095 + $0x128] sm:$0xff]
      %v2122 = vld [vmem:[%s2095 + $0x138] sm:$0xff]
      %v2123 = vld [vmem:[%s2095 + $0x140] sm:$0xff]
      %v2124 = vld [vmem:[%s2095 + $0x150] sm:$0xff]
      %v2125 = vld [vmem:[%s2095 + $0x158] sm:$0xff]
      %v2126 = vld [vmem:[%s2095 + $0x168] sm:$0xff]
      %v2127 = vld [vmem:[%s2095 + $0x170] sm:$0xff]
      %v2128 = vld [vmem:[%s292 + $0x300] sm:$0xff]
      %v2129 = vld [vmem:[%s292 + $0x308] sm:$0xff]
      %v2130 = vld [vmem:[%s292 + $0x310] sm:$0xff]
      %v2131 = vld [vmem:[%s292 + $0x318] sm:$0xff]
      %v2132 = vld [vmem:[%s292 + $0x320] sm:$0xff]
      %v2133 = vld [vmem:[%s292 + $0x328] sm:$0xff]
      %v2134 = vld [vmem:[%s292 + $0x330] sm:$0xff]
      %v2135 = vld [vmem:[%s292 + $0x338] sm:$0xff]
      %v2136 = vld [vmem:[%s292 + $0x340] sm:$0xff]
      %v2137 = vld [vmem:[%s292 + $0x348] sm:$0xff]
      %v2138 = vld [vmem:[%s292 + $0x350] sm:$0xff]
      %v2139 = vld [vmem:[%s292 + $0x358] sm:$0xff]
      %v2140 = vld [vmem:[%s292 + $0x360] sm:$0xff]
      %v2141 = vld [vmem:[%s292 + $0x368] sm:$0xff]
      %v2142 = vld [vmem:[%s292 + $0x370] sm:$0xff]
      %v2143 = vld [vmem:[%s292 + $0x378] sm:$0xff]
      %2144 = vmatprep.subr.mxu0 0.0
      %2145 = vmatpush1.msra.mxu0 %v2128
      %2146 = vmatprep.subr.mxu0 0.0
      %2147 = vmatpush1.msra.mxu0 %v2129
      %2148 = vmatprep.subr.mxu0 0.0
      %2149 = vmatpush1.msra.mxu0 %v2130
      %2150 = vmatprep.subr.mxu0 0.0
      %2151 = vmatpush1.msra.mxu0 %v2131
      %2152 = vmatprep.subr.mxu0 0.0
      %2153 = vmatpush1.msra.mxu0 %v2132
      %2154 = vmatprep.subr.mxu0 0.0
      %2155 = vmatpush1.msra.mxu0 %v2133
      %2156 = vmatprep.subr.mxu0 0.0
      %2157 = vmatpush1.msra.mxu0 %v2134
      %2158 = vmatprep.subr.mxu0 0.0
      %2159 = vmatpush1.msra.mxu0 %v2135
      %2160 = vmatprep.subr.mxu0 0.0
      %2161 = vmatpush1.msra.mxu0 %v2136
      %2162 = vmatprep.subr.mxu0 0.0
      %2163 = vmatpush1.msra.mxu0 %v2137
      %2164 = vmatprep.subr.mxu0 0.0
      %2165 = vmatpush1.msra.mxu0 %v2138
      %2166 = vmatprep.subr.mxu0 0.0
      %2167 = vmatpush1.msra.mxu0 %v2139
      %2168 = vmatprep.subr.mxu0 0.0
      %2169 = vmatpush1.msra.mxu0 %v2140
      %2170 = vmatprep.subr.mxu0 0.0
      %2171 = vmatpush1.msra.mxu0 %v2141
      %2172 = vmatprep.subr.mxu0 0.0
      %2173 = vmatpush1.msra.mxu0 %v2142
      %2174 = vmatprep.subr.mxu0 0.0
      %2175 = vmatpush1.msra.mxu0 %v2143
      %2176 = vmatprep.subr.mxu0 0.0
      %2177 = vmatpush1.msra.mxu0 0.0
      %2178 = vmatprep.subr.mxu0 0.0
      %2179 = vmatpush1.msra.mxu0 0.0
      %2180 = vmatprep.subr.mxu0 0.0
      %2181 = vmatpush1.msra.mxu0 0.0
      %2182 = vmatprep.subr.mxu0 0.0
      %2183 = vmatpush1.msra.mxu0 0.0
      %2184 = vmatprep.subr.mxu0 0.0
      %2185 = vmatpush1.msra.mxu0 0.0
      %2186 = vmatprep.subr.mxu0 0.0
      %2187 = vmatpush1.msra.mxu0 0.0
      %2188 = vmatprep.subr.mxu0 0.0
      %2189 = vmatpush1.msra.mxu0 0.0
      %2190 = vmatprep.subr.mxu0 0.0
      %2191 = vmatpush1.msra.mxu0 0.0
      %2192 = vmatprep.subr.mxu0 0.0
      %2193 = vmatpush1.msra.mxu0 0.0
      %2194 = vmatprep.subr.mxu0 0.0
      %2195 = vmatpush1.msra.mxu0 0.0
      %2196 = vmatprep.subr.mxu0 0.0
      %2197 = vmatpush1.msra.mxu0 0.0
      %2198 = vmatprep.subr.mxu0 0.0
      %2199 = vmatpush1.msra.mxu0 0.0
      %2200 = vmatprep.subr.mxu0 0.0
      %2201 = vmatpush1.msra.mxu0 0.0
      %2202 = vmatprep.subr.mxu0 0.0
      %2203 = vmatpush1.msra.mxu0 0.0
      %2204 = vmatprep.subr.mxu0 0.0
      %2205 = vmatpush1.msra.mxu0 0.0
      %2206 = vmatprep.subr.mxu0 0.0
      %2207 = vmatpush1.msra.mxu0 0.0
      %2208 = vmatprep.mubr.f32.mxu0 0.0
      %2209 = vmatmul.mubr.f32.gmra.mrb[0].mxu0 %v2096
      %v2210 = vpop.f32.mrb[0].mxu0
      %v2211 = vadd.f32 0.0, %v2210
      %v2212 = vpop.f32.mrb[0].mxu0
      %2213 = vmatprep.mubr.f32.mxu0 0.0
      %2214 = vmatmul.mubr.f32.gmra.mrb[0].mxu0 %v2097
      %v2215 = vpop.f32.mrb[0].mxu0
      %v2216 = vadd.f32 0.0, %v2215
      %v2217 = vpop.f32.mrb[0].mxu0
      %2218 = vmatprep.mubr.f32.mxu0 0.0
      %2219 = vmatmul.mubr.f32.gmra.mrb[0].mxu0 %v2098
      %v2220 = vpop.f32.mrb[0].mxu0
      %v2221 = vadd.f32 0.0, %v2220
      %v2222 = vpop.f32.mrb[0].mxu0
      %2223 = vmatprep.mubr.f32.mxu0 0.0
      %2224 = vmatmul.mubr.f32.gmra.mrb[0].mxu0 %v2099
      %v2225 = vpop.f32.mrb[0].mxu0
      %v2226 = vadd.f32 0.0, %v2225
      %v2227 = vpop.f32.mrb[0].mxu0
      %2228 = vmatprep.mubr.f32.mxu0 0.0
      %2229 = vmatmul.mubr.f32.gmra.mrb[0].mxu0 %v2100
      %v2230 = vpop.f32.mrb[0].mxu0
      %v2231 = vadd.f32 0.0, %v2230
      %v2232 = vpop.f32.mrb[0].mxu0
      %2233 = vmatprep.mubr.f32.mxu0 0.0
      %2234 = vmatmul.mubr.f32.gmra.mrb[0].mxu0 %v2101
      %v2235 = vpop.f32.mrb[0].mxu0
      %v2236 = vadd.f32 0.0, %v2235
      %v2237 = vpop.f32.mrb[0].mxu0
      %2238 = vmatprep.mubr.f32.mxu0 0.0
      %2239 = vmatmul.mubr.f32.gmra.mrb[0].mxu0 %v2102
      %v2240 = vpop.f32.mrb[0].mxu0
      %v2241 = vadd.f32 0.0, %v2240
      %v2242 = vpop.f32.mrb[0].mxu0
      %2243 = vmatprep.mubr.f32.mxu0 0.0
      %2244 = vmatmul.mubr.f32.gmra.mrb[0].mxu0 %v2103
      %v2245 = vpop.f32.mrb[0].mxu0
      %v2246 = vadd.f32 0.0, %v2245
      %v2247 = vpop.f32.mrb[0].mxu0
      %2248 = vmatprep.mubr.f32.mxu0 0.0
      %2249 = vmatmul.mubr.f32.gmra.mrb[0].mxu0 %v2104
      %v2250 = vpop.f32.mrb[0].mxu0
      %v2251 = vadd.f32 0.0, %v2250
      %v2252 = vpop.f32.mrb[0].mxu0
      %2253 = vmatprep.mubr.f32.mxu0 0.0
      %2254 = vmatmul.mubr.f32.gmra.mrb[0].mxu0 %v2105
      %v2255 = vpop.f32.mrb[0].mxu0
      %v2256 = vadd.f32 0.0, %v2255
      %v2257 = vpop.f32.mrb[0].mxu0
      %2258 = vmatprep.mubr.f32.mxu0 0.0
      %2259 = vmatmul.mubr.f32.gmra.mrb[0].mxu0 %v2106
      %v2260 = vpop.f32.mrb[0].mxu0
      %v2261 = vadd.f32 0.0, %v2260
      %v2262 = vpop.f32.mrb[0].mxu0
      %2263 = vmatprep.mubr.f32.mxu0 0.0
      %2264 = vmatmul.mubr.f32.gmra.mrb[0].mxu0 %v2107
      %v2265 = vpop.f32.mrb[0].mxu0
      %v2266 = vadd.f32 0.0, %v2265
      %v2267 = vpop.f32.mrb[0].mxu0
      %2268 = vmatprep.mubr.f32.mxu0 0.0
      %2269 = vmatmul.mubr.f32.gmra.mrb[0].mxu0 %v2108
      %v2270 = vpop.f32.mrb[0].mxu0
      %v2271 = vadd.f32 0.0, %v2270
      %v2272 = vpop.f32.mrb[0].mxu0
      %2273 = vmatprep.mubr.f32.mxu0 0.0
      %2274 = vmatmul.mubr.f32.gmra.mrb[0].mxu0 %v2109
      %v2275 = vpop.f32.mrb[0].mxu0
      %v2276 = vadd.f32 0.0, %v2275
      %v2277 = vpop.f32.mrb[0].mxu0
      %2278 = vmatprep.mubr.f32.mxu0 0.0
      %2279 = vmatmul.mubr.f32.gmra.mrb[0].mxu0 %v2110
      %v2280 = vpop.f32.mrb[0].mxu0
      %v2281 = vadd.f32 0.0, %v2280
      %v2282 = vpop.f32.mrb[0].mxu0
      %2283 = vmatprep.mubr.f32.mxu0 0.0
      %2284 = vmatmul.mubr.f32.gmra.mrb[0].mxu0 %v2111
      %v2285 = vpop.f32.mrb[0].mxu0
      %v2286 = vadd.f32 0.0, %v2285
      %v2287 = vpop.f32.mrb[0].mxu0
      %2288 = vmatprep.mubr.f32.mxu0 0.0
      %2289 = vmatmul.mubr.f32.gmra.mrb[0].mxu0 %v2112
      %v2290 = vpop.f32.mrb[0].mxu0
      %v2291 = vadd.f32 0.0, %v2290
      %v2292 = vpop.f32.mrb[0].mxu0
      %2293 = vmatprep.mubr.f32.mxu0 0.0
      %2294 = vmatmul.mubr.f32.gmra.mrb[0].mxu0 %v2113
      %v2295 = vpop.f32.mrb[0].mxu0
      %v2296 = vadd.f32 0.0, %v2295
      %v2297 = vpop.f32.mrb[0].mxu0
      %2298 = vmatprep.mubr.f32.mxu0 0.0
      %2299 = vmatmul.mubr.f32.gmra.mrb[0].mxu0 %v2114
      %v2300 = vpop.f32.mrb[0].mxu0
      %v2301 = vadd.f32 0.0, %v2300
      %v2302 = vpop.f32.mrb[0].mxu0
      %2303 = vmatprep.mubr.f32.mxu0 0.0
      %2304 = vmatmul.mubr.f32.gmra.mrb[0].mxu0 %v2115
      %v2305 = vpop.f32.mrb[0].mxu0
      %v2306 = vadd.f32 0.0, %v2305
      %v2307 = vpop.f32.mrb[0].mxu0
      %2308 = vmatprep.mubr.f32.mxu0 0.0
      %2309 = vmatmul.mubr.f32.gmra.mrb[0].mxu0 %v2116
      %v2310 = vpop.f32.mrb[0].mxu0
      %v2311 = vadd.f32 0.0, %v2310
      %v2312 = vpop.f32.mrb[0].mxu0
      %2313 = vmatprep.mubr.f32.mxu0 0.0
      %2314 = vmatmul.mubr.f32.gmra.mrb[0].mxu0 %v2117
      %v2315 = vpop.f32.mrb[0].mxu0
      %v2316 = vadd.f32 0.0, %v2315
      %v2317 = vpop.f32.mrb[0].mxu0
      %2318 = vmatprep.mubr.f32.mxu0 0.0
      %2319 = vmatmul.mubr.f32.gmra.mrb[0].mxu0 %v2118
      %v2320 = vpop.f32.mrb[0].mxu0
      %v2321 = vadd.f32 0.0, %v2320
      %v2322 = vpop.f32.mrb[0].mxu0
      %2323 = vmatprep.mubr.f32.mxu0 0.0
      %2324 = vmatmul.mubr.f32.gmra.mrb[0].mxu0 %v2119
      %v2325 = vpop.f32.mrb[0].mxu0
      %v2326 = vadd.f32 0.0, %v2325
      %v2327 = vpop.f32.mrb[0].mxu0
      %2328 = vmatprep.mubr.f32.mxu0 0.0
      %2329 = vmatmul.mubr.f32.gmra.mrb[0].mxu0 %v2120
      %v2330 = vpop.f32.mrb[0].mxu0
      %v2331 = vadd.f32 0.0, %v2330
      %v2332 = vpop.f32.mrb[0].mxu0
      %2333 = vmatprep.mubr.f32.mxu0 0.0
      %2334 = vmatmul.mubr.f32.gmra.mrb[0].mxu0 %v2121
      %v2335 = vpop.f32.mrb[0].mxu0
      %v2336 = vadd.f32 0.0, %v2335
      %v2337 = vpop.f32.mrb[0].mxu0
      %2338 = vmatprep.mubr.f32.mxu0 0.0
      %2339 = vmatmul.mubr.f32.gmra.mrb[0].mxu0 %v2122
      %v2340 = vpop.f32.mrb[0].mxu0
      %v2341 = vadd.f32 0.0, %v2340
      %v2342 = vpop.f32.mrb[0].mxu0
      %2343 = vmatprep.mubr.f32.mxu0 0.0
      %2344 = vmatmul.mubr.f32.gmra.mrb[0].mxu0 %v2123
      %v2345 = vpop.f32.mrb[0].mxu0
      %v2346 = vadd.f32 0.0, %v2345
      %v2347 = vpop.f32.mrb[0].mxu0
      %2348 = vmatprep.mubr.f32.mxu0 0.0
      %2349 = vmatmul.mubr.f32.gmra.mrb[0].mxu0 %v2124
      %v2350 = vpop.f32.mrb[0].mxu0
      %v2351 = vadd.f32 0.0, %v2350
      %v2352 = vpop.f32.mrb[0].mxu0
      %2353 = vmatprep.mubr.f32.mxu0 0.0
      %2354 = vmatmul.mubr.f32.gmra.mrb[0].mxu0 %v2125
      %v2355 = vpop.f32.mrb[0].mxu0
      %v2356 = vadd.f32 0.0, %v2355
      %v2357 = vpop.f32.mrb[0].mxu0
      %2358 = vmatprep.mubr.f32.mxu0 0.0
      %2359 = vmatmul.mubr.f32.gmra.mrb[0].mxu0 %v2126
      %v2360 = vpop.f32.mrb[0].mxu0
      %v2361 = vadd.f32 0.0, %v2360
      %v2362 = vpop.f32.mrb[0].mxu0
      %2363 = vmatprep.mubr.f32.mxu0 0.0
      %2364 = vmatmul.mubr.f32.gmra.mrb[0].mxu0 %v2127
      %v2365 = vpop.f32.mrb[0].mxu0
      %v2366 = vadd.f32 0.0, %v2365
      %v2367 = vpop.f32.mrb[0].mxu0
      %2368 = vdwg.mxu0
      %v2369 = vadd.f32 %v2061, %v2211
      %v2370 = vadd.f32 %v2062, %v2216
      %v2371 = vadd.f32 %v2063, %v2221
      %v2372 = vadd.f32 %v2064, %v2226
      %v2373 = vadd.f32 %v2065, %v2231
      %v2374 = vadd.f32 %v2066, %v2236
      %v2375 = vadd.f32 %v2067, %v2241
      %v2376 = vadd.f32 %v2068, %v2246
      %v2377 = vadd.f32 %v2069, %v2251
      %v2378 = vadd.f32 %v2070, %v2256
      %v2379 = vadd.f32 %v2071, %v2261
      %v2380 = vadd.f32 %v2072, %v2266
      %v2381 = vadd.f32 %v2073, %v2271
      %v2382 = vadd.f32 %v2074, %v2276
      %v2383 = vadd.f32 %v2075, %v2281
      %v2384 = vadd.f32 %v2076, %v2286
      %v2385 = vadd.f32 %v2077, %v2291
      %v2386 = vadd.f32 %v2078, %v2296
      %v2387 = vadd.f32 %v2079, %v2301
      %v2388 = vadd.f32 %v2080, %v2306
      %v2389 = vadd.f32 %v2081, %v2311
      %v2390 = vadd.f32 %v2082, %v2316
      %v2391 = vadd.f32 %v2083, %v2321
      %v2392 = vadd.f32 %v2084, %v2326
      %v2393 = vadd.f32 %v2085, %v2331
      %v2394 = vadd.f32 %v2086, %v2336
      %v2395 = vadd.f32 %v2087, %v2341
      %v2396 = vadd.f32 %v2088, %v2346
      %v2397 = vadd.f32 %v2089, %v2351
      %v2398 = vadd.f32 %v2090, %v2356
      %v2399 = vadd.f32 %v2091, %v2361
      %v2400 = vadd.f32 %v2092, %v2366
      %v2401 = vld [vmem:[%s2095 + $0x1] sm:$0xff]
      %v2402 = vld [vmem:[%s2095 + $0x9] sm:$0xff]
      %v2403 = vld [vmem:[%s2095 + $0x19] sm:$0xff]
      %v2404 = vld [vmem:[%s2095 + $0x21] sm:$0xff]
      %v2405 = vld [vmem:[%s2095 + $0x31] sm:$0xff]
      %v2406 = vld [vmem:[%s2095 + $0x39] sm:$0xff]
      %v2407 = vld [vmem:[%s2095 + $0x49] sm:$0xff]
      %v2408 = vld [vmem:[%s2095 + $0x51] sm:$0xff]
      %v2409 = vld [vmem:[%s2095 + $0x61] sm:$0xff]
      %v2410 = vld [vmem:[%s2095 + $0x69] sm:$0xff]
      %v2411 = vld [vmem:[%s2095 + $0x79] sm:$0xff]
      %v2412 = vld [vmem:[%s2095 + $0x81] sm:$0xff]
      %v2413 = vld [vmem:[%s2095 + $0x91] sm:$0xff]
      %v2414 = vld [vmem:[%s2095 + $0x99] sm:$0xff]
      %v2415 = vld [vmem:[%s2095 + $0xa9] sm:$0xff]
      %v2416 = vld [vmem:[%s2095 + $0xb1] sm:$0xff]
      %v2417 = vld [vmem:[%s2095 + $0xc1] sm:$0xff]
      %v2418 = vld [vmem:[%s2095 + $0xc9] sm:$0xff]
      %v2419 = vld [vmem:[%s2095 + $0xd9] sm:$0xff]
      %v2420 = vld [vmem:[%s2095 + $0xe1] sm:$0xff]
      %v2421 = vld [vmem:[%s2095 + $0xf1] sm:$0xff]
      %v2422 = vld [vmem:[%s2095 + $0xf9] sm:$0xff]
      %v2423 = vld [vmem:[%s2095 + $0x109] sm:$0xff]
      %v2424 = vld [vmem:[%s2095 + $0x111] sm:$0xff]
      %v2425 = vld [vmem:[%s2095 + $0x121] sm:$0xff]
      %v2426 = vld [vmem:[%s2095 + $0x129] sm:$0xff]
      %v2427 = vld [vmem:[%s2095 + $0x139] sm:$0xff]
      %v2428 = vld [vmem:[%s2095 + $0x141] sm:$0xff]
      %v2429 = vld [vmem:[%s2095 + $0x151] sm:$0xff]
      %v2430 = vld [vmem:[%s2095 + $0x159] sm:$0xff]
      %v2431 = vld [vmem:[%s2095 + $0x169] sm:$0xff]
      %v2432 = vld [vmem:[%s2095 + $0x171] sm:$0xff]
      %v2433 = vld [vmem:[%s292 + $0x380] sm:$0xff]
      %v2434 = vld [vmem:[%s292 + $0x388] sm:$0xff]
      %v2435 = vld [vmem:[%s292 + $0x390] sm:$0xff]
      %v2436 = vld [vmem:[%s292 + $0x398] sm:$0xff]
      %v2437 = vld [vmem:[%s292 + $0x3a0] sm:$0xff]
      %v2438 = vld [vmem:[%s292 + $0x3a8] sm:$0xff]
      %v2439 = vld [vmem:[%s292 + $0x3b0] sm:$0xff]
      %v2440 = vld [vmem:[%s292 + $0x3b8] sm:$0xff]
      %v2441 = vld [vmem:[%s292 + $0x3c0] sm:$0xff]
      %v2442 = vld [vmem:[%s292 + $0x3c8] sm:$0xff]
      %v2443 = vld [vmem:[%s292 + $0x3d0] sm:$0xff]
      %v2444 = vld [vmem:[%s292 + $0x3d8] sm:$0xff]
      %v2445 = vld [vmem:[%s292 + $0x3e0] sm:$0xff]
      %v2446 = vld [vmem:[%s292 + $0x3e8] sm:$0xff]
      %v2447 = vld [vmem:[%s292 + $0x3f0] sm:$0xff]
      %v2448 = vld [vmem:[%s292 + $0x3f8] sm:$0xff]
      %2449 = vmatprep.subr.mxu0 0.0
      %2450 = vmatpush1.msra.mxu0 %v2433
      %2451 = vmatprep.subr.mxu0 0.0
      %2452 = vmatpush1.msra.mxu0 %v2434
      %2453 = vmatprep.subr.mxu0 0.0
      %2454 = vmatpush1.msra.mxu0 %v2435
      %2455 = vmatprep.subr.mxu0 0.0
      %2456 = vmatpush1.msra.mxu0 %v2436
      %2457 = vmatprep.subr.mxu0 0.0
      %2458 = vmatpush1.msra.mxu0 %v2437
      %2459 = vmatprep.subr.mxu0 0.0
      %2460 = vmatpush1.msra.mxu0 %v2438
      %2461 = vmatprep.subr.mxu0 0.0
      %2462 = vmatpush1.msra.mxu0 %v2439
      %2463 = vmatprep.subr.mxu0 0.0
      %2464 = vmatpush1.msra.mxu0 %v2440
      %2465 = vmatprep.subr.mxu0 0.0
      %2466 = vmatpush1.msra.mxu0 %v2441
      %2467 = vmatprep.subr.mxu0 0.0
      %2468 = vmatpush1.msra.mxu0 %v2442
      %2469 = vmatprep.subr.mxu0 0.0
      %2470 = vmatpush1.msra.mxu0 %v2443
      %2471 = vmatprep.subr.mxu0 0.0
      %2472 = vmatpush1.msra.mxu0 %v2444
      %2473 = vmatprep.subr.mxu0 0.0
      %2474 = vmatpush1.msra.mxu0 %v2445
      %2475 = vmatprep.subr.mxu0 0.0
      %2476 = vmatpush1.msra.mxu0 %v2446
      %2477 = vmatprep.subr.mxu0 0.0
      %2478 = vmatpush1.msra.mxu0 %v2447
      %2479 = vmatprep.subr.mxu0 0.0
      %2480 = vmatpush1.msra.mxu0 %v2448
      %2481 = vmatprep.subr.mxu0 0.0
      %2482 = vmatpush1.msra.mxu0 0.0
      %2483 = vmatprep.subr.mxu0 0.0
      %2484 = vmatpush1.msra.mxu0 0.0
      %2485 = vmatprep.subr.mxu0 0.0
      %2486 = vmatpush1.msra.mxu0 0.0
      %2487 = vmatprep.subr.mxu0 0.0
      %2488 = vmatpush1.msra.mxu0 0.0
      %2489 = vmatprep.subr.mxu0 0.0
      %2490 = vmatpush1.msra.mxu0 0.0
      %2491 = vmatprep.subr.mxu0 0.0
      %2492 = vmatpush1.msra.mxu0 0.0
      %2493 = vmatprep.subr.mxu0 0.0
      %2494 = vmatpush1.msra.mxu0 0.0
      %2495 = vmatprep.subr.mxu0 0.0
      %2496 = vmatpush1.msra.mxu0 0.0
      %2497 = vmatprep.subr.mxu0 0.0
      %2498 = vmatpush1.msra.mxu0 0.0
      %2499 = vmatprep.subr.mxu0 0.0
      %2500 = vmatpush1.msra.mxu0 0.0
      %2501 = vmatprep.subr.mxu0 0.0
      %2502 = vmatpush1.msra.mxu0 0.0
      %2503 = vmatprep.subr.mxu0 0.0
      %2504 = vmatpush1.msra.mxu0 0.0
      %2505 = vmatprep.subr.mxu0 0.0
      %2506 = vmatpush1.msra.mxu0 0.0
      %2507 = vmatprep.subr.mxu0 0.0
      %2508 = vmatpush1.msra.mxu0 0.0
      %2509 = vmatprep.subr.mxu0 0.0
      %2510 = vmatpush1.msra.mxu0 0.0
      %2511 = vmatprep.subr.mxu0 0.0
      %2512 = vmatpush1.msra.mxu0 0.0
      %2513 = vmatprep.mubr.f32.mxu0 0.0
      %2514 = vmatmul.mubr.f32.gmra.mrb[0].mxu0 %v2401
      %v2515 = vpop.f32.mrb[0].mxu0
      %v2516 = vadd.f32 0.0, %v2515
      %v2517 = vpop.f32.mrb[0].mxu0
      %2518 = vmatprep.mubr.f32.mxu0 0.0
      %2519 = vmatmul.mubr.f32.gmra.mrb[0].mxu0 %v2402
      %v2520 = vpop.f32.mrb[0].mxu0
      %v2521 = vadd.f32 0.0, %v2520
      %v2522 = vpop.f32.mrb[0].mxu0
      %2523 = vmatprep.mubr.f32.mxu0 0.0
      %2524 = vmatmul.mubr.f32.gmra.mrb[0].mxu0 %v2403
      %v2525 = vpop.f32.mrb[0].mxu0
      %v2526 = vadd.f32 0.0, %v2525
      %v2527 = vpop.f32.mrb[0].mxu0
      %2528 = vmatprep.mubr.f32.mxu0 0.0
      %2529 = vmatmul.mubr.f32.gmra.mrb[0].mxu0 %v2404
      %v2530 = vpop.f32.mrb[0].mxu0
      %v2531 = vadd.f32 0.0, %v2530
      %v2532 = vpop.f32.mrb[0].mxu0
      %2533 = vmatprep.mubr.f32.mxu0 0.0
      %2534 = vmatmul.mubr.f32.gmra.mrb[0].mxu0 %v2405
      %v2535 = vpop.f32.mrb[0].mxu0
      %v2536 = vadd.f32 0.0, %v2535
      %v2537 = vpop.f32.mrb[0].mxu0
      %2538 = vmatprep.mubr.f32.mxu0 0.0
      %2539 = vmatmul.mubr.f32.gmra.mrb[0].mxu0 %v2406
      %v2540 = vpop.f32.mrb[0].mxu0
      %v2541 = vadd.f32 0.0, %v2540
      %v2542 = vpop.f32.mrb[0].mxu0
      %2543 = vmatprep.mubr.f32.mxu0 0.0
      %2544 = vmatmul.mubr.f32.gmra.mrb[0].mxu0 %v2407
      %v2545 = vpop.f32.mrb[0].mxu0
      %v2546 = vadd.f32 0.0, %v2545
      %v2547 = vpop.f32.mrb[0].mxu0
      %2548 = vmatprep.mubr.f32.mxu0 0.0
      %2549 = vmatmul.mubr.f32.gmra.mrb[0].mxu0 %v2408
      %v2550 = vpop.f32.mrb[0].mxu0
      %v2551 = vadd.f32 0.0, %v2550
      %v2552 = vpop.f32.mrb[0].mxu0
      %2553 = vmatprep.mubr.f32.mxu0 0.0
      %2554 = vmatmul.mubr.f32.gmra.mrb[0].mxu0 %v2409
      %v2555 = vpop.f32.mrb[0].mxu0
      %v2556 = vadd.f32 0.0, %v2555
      %v2557 = vpop.f32.mrb[0].mxu0
      %2558 = vmatprep.mubr.f32.mxu0 0.0
      %2559 = vmatmul.mubr.f32.gmra.mrb[0].mxu0 %v2410
      %v2560 = vpop.f32.mrb[0].mxu0
      %v2561 = vadd.f32 0.0, %v2560
      %v2562 = vpop.f32.mrb[0].mxu0
      %2563 = vmatprep.mubr.f32.mxu0 0.0
      %2564 = vmatmul.mubr.f32.gmra.mrb[0].mxu0 %v2411
      %v2565 = vpop.f32.mrb[0].mxu0
      %v2566 = vadd.f32 0.0, %v2565
      %v2567 = vpop.f32.mrb[0].mxu0
      %2568 = vmatprep.mubr.f32.mxu0 0.0
      %2569 = vmatmul.mubr.f32.gmra.mrb[0].mxu0 %v2412
      %v2570 = vpop.f32.mrb[0].mxu0
      %v2571 = vadd.f32 0.0, %v2570
      %v2572 = vpop.f32.mrb[0].mxu0
      %2573 = vmatprep.mubr.f32.mxu0 0.0
      %2574 = vmatmul.mubr.f32.gmra.mrb[0].mxu0 %v2413
      %v2575 = vpop.f32.mrb[0].mxu0
      %v2576 = vadd.f32 0.0, %v2575
      %v2577 = vpop.f32.mrb[0].mxu0
      %2578 = vmatprep.mubr.f32.mxu0 0.0
      %2579 = vmatmul.mubr.f32.gmra.mrb[0].mxu0 %v2414
      %v2580 = vpop.f32.mrb[0].mxu0
      %v2581 = vadd.f32 0.0, %v2580
      %v2582 = vpop.f32.mrb[0].mxu0
      %2583 = vmatprep.mubr.f32.mxu0 0.0
      %2584 = vmatmul.mubr.f32.gmra.mrb[0].mxu0 %v2415
      %v2585 = vpop.f32.mrb[0].mxu0
      %v2586 = vadd.f32 0.0, %v2585
      %v2587 = vpop.f32.mrb[0].mxu0
      %2588 = vmatprep.mubr.f32.mxu0 0.0
      %2589 = vmatmul.mubr.f32.gmra.mrb[0].mxu0 %v2416
      %v2590 = vpop.f32.mrb[0].mxu0
      %v2591 = vadd.f32 0.0, %v2590
      %v2592 = vpop.f32.mrb[0].mxu0
      %2593 = vmatprep.mubr.f32.mxu0 0.0
      %2594 = vmatmul.mubr.f32.gmra.mrb[0].mxu0 %v2417
      %v2595 = vpop.f32.mrb[0].mxu0
      %v2596 = vadd.f32 0.0, %v2595
      %v2597 = vpop.f32.mrb[0].mxu0
      %2598 = vmatprep.mubr.f32.mxu0 0.0
      %2599 = vmatmul.mubr.f32.gmra.mrb[0].mxu0 %v2418
      %v2600 = vpop.f32.mrb[0].mxu0
      %v2601 = vadd.f32 0.0, %v2600
      %v2602 = vpop.f32.mrb[0].mxu0
      %2603 = vmatprep.mubr.f32.mxu0 0.0
      %2604 = vmatmul.mubr.f32.gmra.mrb[0].mxu0 %v2419
      %v2605 = vpop.f32.mrb[0].mxu0
      %v2606 = vadd.f32 0.0, %v2605
      %v2607 = vpop.f32.mrb[0].mxu0
      %2608 = vmatprep.mubr.f32.mxu0 0.0
      %2609 = vmatmul.mubr.f32.gmra.mrb[0].mxu0 %v2420
      %v2610 = vpop.f32.mrb[0].mxu0
      %v2611 = vadd.f32 0.0, %v2610
      %v2612 = vpop.f32.mrb[0].mxu0
      %2613 = vmatprep.mubr.f32.mxu0 0.0
      %2614 = vmatmul.mubr.f32.gmra.mrb[0].mxu0 %v2421
      %v2615 = vpop.f32.mrb[0].mxu0
      %v2616 = vadd.f32 0.0, %v2615
      %v2617 = vpop.f32.mrb[0].mxu0
      %2618 = vmatprep.mubr.f32.mxu0 0.0
      %2619 = vmatmul.mubr.f32.gmra.mrb[0].mxu0 %v2422
      %v2620 = vpop.f32.mrb[0].mxu0
      %v2621 = vadd.f32 0.0, %v2620
      %v2622 = vpop.f32.mrb[0].mxu0
      %2623 = vmatprep.mubr.f32.mxu0 0.0
      %2624 = vmatmul.mubr.f32.gmra.mrb[0].mxu0 %v2423
      %v2625 = vpop.f32.mrb[0].mxu0
      %v2626 = vadd.f32 0.0, %v2625
      %v2627 = vpop.f32.mrb[0].mxu0
      %2628 = vmatprep.mubr.f32.mxu0 0.0
      %2629 = vmatmul.mubr.f32.gmra.mrb[0].mxu0 %v2424
      %v2630 = vpop.f32.mrb[0].mxu0
      %v2631 = vadd.f32 0.0, %v2630
      %v2632 = vpop.f32.mrb[0].mxu0
      %2633 = vmatprep.mubr.f32.mxu0 0.0
      %2634 = vmatmul.mubr.f32.gmra.mrb[0].mxu0 %v2425
      %v2635 = vpop.f32.mrb[0].mxu0
      %v2636 = vadd.f32 0.0, %v2635
      %v2637 = vpop.f32.mrb[0].mxu0
      %2638 = vmatprep.mubr.f32.mxu0 0.0
      %2639 = vmatmul.mubr.f32.gmra.mrb[0].mxu0 %v2426
      %v2640 = vpop.f32.mrb[0].mxu0
      %v2641 = vadd.f32 0.0, %v2640
      %v2642 = vpop.f32.mrb[0].mxu0
      %2643 = vmatprep.mubr.f32.mxu0 0.0
      %2644 = vmatmul.mubr.f32.gmra.mrb[0].mxu0 %v2427
      %v2645 = vpop.f32.mrb[0].mxu0
      %v2646 = vadd.f32 0.0, %v2645
      %v2647 = vpop.f32.mrb[0].mxu0
      %2648 = vmatprep.mubr.f32.mxu0 0.0
      %2649 = vmatmul.mubr.f32.gmra.mrb[0].mxu0 %v2428
      %v2650 = vpop.f32.mrb[0].mxu0
      %v2651 = vadd.f32 0.0, %v2650
      %v2652 = vpop.f32.mrb[0].mxu0
      %2653 = vmatprep.mubr.f32.mxu0 0.0
      %2654 = vmatmul.mubr.f32.gmra.mrb[0].mxu0 %v2429
      %v2655 = vpop.f32.mrb[0].mxu0
      %v2656 = vadd.f32 0.0, %v2655
      %v2657 = vpop.f32.mrb[0].mxu0
      %2658 = vmatprep.mubr.f32.mxu0 0.0
      %2659 = vmatmul.mubr.f32.gmra.mrb[0].mxu0 %v2430
      %v2660 = vpop.f32.mrb[0].mxu0
      %v2661 = vadd.f32 0.0, %v2660
      %v2662 = vpop.f32.mrb[0].mxu0
      %2663 = vmatprep.mubr.f32.mxu0 0.0
      %2664 = vmatmul.mubr.f32.gmra.mrb[0].mxu0 %v2431
      %v2665 = vpop.f32.mrb[0].mxu0
      %v2666 = vadd.f32 0.0, %v2665
      %v2667 = vpop.f32.mrb[0].mxu0
      %2668 = vmatprep.mubr.f32.mxu0 0.0
      %2669 = vmatmul.mubr.f32.gmra.mrb[0].mxu0 %v2432
      %v2670 = vpop.f32.mrb[0].mxu0
      %v2671 = vadd.f32 0.0, %v2670
      %v2672 = vpop.f32.mrb[0].mxu0
      %2673 = vdwg.mxu0
      %v2674 = vadd.f32 %v2369, %v2516
      %v2675 = vadd.f32 %v2370, %v2521
      %v2676 = vadd.f32 %v2371, %v2526
      %v2677 = vadd.f32 %v2372, %v2531
      %v2678 = vadd.f32 %v2373, %v2536
      %v2679 = vadd.f32 %v2374, %v2541
      %v2680 = vadd.f32 %v2375, %v2546
      %v2681 = vadd.f32 %v2376, %v2551
      %v2682 = vadd.f32 %v2377, %v2556
      %v2683 = vadd.f32 %v2378, %v2561
      %v2684 = vadd.f32 %v2379, %v2566
      %v2685 = vadd.f32 %v2380, %v2571
      %v2686 = vadd.f32 %v2381, %v2576
      %v2687 = vadd.f32 %v2382, %v2581
      %v2688 = vadd.f32 %v2383, %v2586
      %v2689 = vadd.f32 %v2384, %v2591
      %v2690 = vadd.f32 %v2385, %v2596
      %v2691 = vadd.f32 %v2386, %v2601
      %v2692 = vadd.f32 %v2387, %v2606
      %v2693 = vadd.f32 %v2388, %v2611
      %v2694 = vadd.f32 %v2389, %v2616
      %v2695 = vadd.f32 %v2390, %v2621
      %v2696 = vadd.f32 %v2391, %v2626
      %v2697 = vadd.f32 %v2392, %v2631
      %v2698 = vadd.f32 %v2393, %v2636
      %v2699 = vadd.f32 %v2394, %v2641
      %v2700 = vadd.f32 %v2395, %v2646
      %v2701 = vadd.f32 %v2396, %v2651
      %v2702 = vadd.f32 %v2397, %v2656
      %v2703 = vadd.f32 %v2398, %v2661
      %v2704 = vadd.f32 %v2399, %v2666
      %v2705 = vadd.f32 %v2400, %v2671
      %v2706 = vld [vmem:[%s2095 + $0x2] sm:$0xff]
      %v2707 = vld [vmem:[%s2095 + $0xa] sm:$0xff]
      %v2708 = vld [vmem:[%s2095 + $0x1a] sm:$0xff]
      %v2709 = vld [vmem:[%s2095 + $0x22] sm:$0xff]
      %v2710 = vld [vmem:[%s2095 + $0x32] sm:$0xff]
      %v2711 = vld [vmem:[%s2095 + $0x3a] sm:$0xff]
      %v2712 = vld [vmem:[%s2095 + $0x4a] sm:$0xff]
      %v2713 = vld [vmem:[%s2095 + $0x52] sm:$0xff]
      %v2714 = vld [vmem:[%s2095 + $0x62] sm:$0xff]
      %v2715 = vld [vmem:[%s2095 + $0x6a] sm:$0xff]
      %v2716 = vld [vmem:[%s2095 + $0x7a] sm:$0xff]
      %v2717 = vld [vmem:[%s2095 + $0x82] sm:$0xff]
      %v2718 = vld [vmem:[%s2095 + $0x92] sm:$0xff]
      %v2719 = vld [vmem:[%s2095 + $0x9a] sm:$0xff]
      %v2720 = vld [vmem:[%s2095 + $0xaa] sm:$0xff]
      %v2721 = vld [vmem:[%s2095 + $0xb2] sm:$0xff]
      %v2722 = vld [vmem:[%s2095 + $0xc2] sm:$0xff]
      %v2723 = vld [vmem:[%s2095 + $0xca] sm:$0xff]
      %v2724 = vld [vmem:[%s2095 + $0xda] sm:$0xff]
      %v2725 = vld [vmem:[%s2095 + $0xe2] sm:$0xff]
      %v2726 = vld [vmem:[%s2095 + $0xf2] sm:$0xff]
      %v2727 = vld [vmem:[%s2095 + $0xfa] sm:$0xff]
      %v2728 = vld [vmem:[%s2095 + $0x10a] sm:$0xff]
      %v2729 = vld [vmem:[%s2095 + $0x112] sm:$0xff]
      %v2730 = vld [vmem:[%s2095 + $0x122] sm:$0xff]
      %v2731 = vld [vmem:[%s2095 + $0x12a] sm:$0xff]
      %v2732 = vld [vmem:[%s2095 + $0x13a] sm:$0xff]
      %v2733 = vld [vmem:[%s2095 + $0x142] sm:$0xff]
      %v2734 = vld [vmem:[%s2095 + $0x152] sm:$0xff]
      %v2735 = vld [vmem:[%s2095 + $0x15a] sm:$0xff]
      %v2736 = vld [vmem:[%s2095 + $0x16a] sm:$0xff]
      %v2737 = vld [vmem:[%s2095 + $0x172] sm:$0xff]
      %v2738 = vld [vmem:[%s292 + $0x400] sm:$0xff]
      %v2739 = vld [vmem:[%s292 + $0x408] sm:$0xff]
      %v2740 = vld [vmem:[%s292 + $0x410] sm:$0xff]
      %v2741 = vld [vmem:[%s292 + $0x418] sm:$0xff]
      %v2742 = vld [vmem:[%s292 + $0x420] sm:$0xff]
      %v2743 = vld [vmem:[%s292 + $0x428] sm:$0xff]
      %v2744 = vld [vmem:[%s292 + $0x430] sm:$0xff]
      %v2745 = vld [vmem:[%s292 + $0x438] sm:$0xff]
      %v2746 = vld [vmem:[%s292 + $0x440] sm:$0xff]
      %v2747 = vld [vmem:[%s292 + $0x448] sm:$0xff]
      %v2748 = vld [vmem:[%s292 + $0x450] sm:$0xff]
      %v2749 = vld [vmem:[%s292 + $0x458] sm:$0xff]
      %v2750 = vld [vmem:[%s292 + $0x460] sm:$0xff]
      %v2751 = vld [vmem:[%s292 + $0x468] sm:$0xff]
      %v2752 = vld [vmem:[%s292 + $0x470] sm:$0xff]
      %v2753 = vld [vmem:[%s292 + $0x478] sm:$0xff]
      %2754 = vmatprep.subr.mxu0 0.0
      %2755 = vmatpush1.msra.mxu0 %v2738
      %2756 = vmatprep.subr.mxu0 0.0
      %2757 = vmatpush1.msra.mxu0 %v2739
      %2758 = vmatprep.subr.mxu0 0.0
      %2759 = vmatpush1.msra.mxu0 %v2740
      %2760 = vmatprep.subr.mxu0 0.0
      %2761 = vmatpush1.msra.mxu0 %v2741
      %2762 = vmatprep.subr.mxu0 0.0
      %2763 = vmatpush1.msra.mxu0 %v2742
      %2764 = vmatprep.subr.mxu0 0.0
      %2765 = vmatpush1.msra.mxu0 %v2743
      %2766 = vmatprep.subr.mxu0 0.0
      %2767 = vmatpush1.msra.mxu0 %v2744
      %2768 = vmatprep.subr.mxu0 0.0
      %2769 = vmatpush1.msra.mxu0 %v2745
      %2770 = vmatprep.subr.mxu0 0.0
      %2771 = vmatpush1.msra.mxu0 %v2746
      %2772 = vmatprep.subr.mxu0 0.0
      %2773 = vmatpush1.msra.mxu0 %v2747
      %2774 = vmatprep.subr.mxu0 0.0
      %2775 = vmatpush1.msra.mxu0 %v2748
      %2776 = vmatprep.subr.mxu0 0.0
      %2777 = vmatpush1.msra.mxu0 %v2749
      %2778 = vmatprep.subr.mxu0 0.0
      %2779 = vmatpush1.msra.mxu0 %v2750
      %2780 = vmatprep.subr.mxu0 0.0
      %2781 = vmatpush1.msra.mxu0 %v2751
      %2782 = vmatprep.subr.mxu0 0.0
      %2783 = vmatpush1.msra.mxu0 %v2752
      %2784 = vmatprep.subr.mxu0 0.0
      %2785 = vmatpush1.msra.mxu0 %v2753
      %2786 = vmatprep.subr.mxu0 0.0
      %2787 = vmatpush1.msra.mxu0 0.0
      %2788 = vmatprep.subr.mxu0 0.0
      %2789 = vmatpush1.msra.mxu0 0.0
      %2790 = vmatprep.subr.mxu0 0.0
      %2791 = vmatpush1.msra.mxu0 0.0
      %2792 = vmatprep.subr.mxu0 0.0
      %2793 = vmatpush1.msra.mxu0 0.0
      %2794 = vmatprep.subr.mxu0 0.0
      %2795 = vmatpush1.msra.mxu0 0.0
      %2796 = vmatprep.subr.mxu0 0.0
      %2797 = vmatpush1.msra.mxu0 0.0
      %2798 = vmatprep.subr.mxu0 0.0
      %2799 = vmatpush1.msra.mxu0 0.0
      %2800 = vmatprep.subr.mxu0 0.0
      %2801 = vmatpush1.msra.mxu0 0.0
      %2802 = vmatprep.subr.mxu0 0.0
      %2803 = vmatpush1.msra.mxu0 0.0
      %2804 = vmatprep.subr.mxu0 0.0
      %2805 = vmatpush1.msra.mxu0 0.0
      %2806 = vmatprep.subr.mxu0 0.0
      %2807 = vmatpush1.msra.mxu0 0.0
      %2808 = vmatprep.subr.mxu0 0.0
      %2809 = vmatpush1.msra.mxu0 0.0
      %2810 = vmatprep.subr.mxu0 0.0
      %2811 = vmatpush1.msra.mxu0 0.0
      %2812 = vmatprep.subr.mxu0 0.0
      %2813 = vmatpush1.msra.mxu0 0.0
      %2814 = vmatprep.subr.mxu0 0.0
      %2815 = vmatpush1.msra.mxu0 0.0
      %2816 = vmatprep.subr.mxu0 0.0
      %2817 = vmatpush1.msra.mxu0 0.0
      %2818 = vmatprep.mubr.f32.mxu0 0.0
      %2819 = vmatmul.mubr.f32.gmra.mrb[0].mxu0 %v2706
      %v2820 = vpop.f32.mrb[0].mxu0
      %v2821 = vadd.f32 0.0, %v2820
      %v2822 = vpop.f32.mrb[0].mxu0
      %2823 = vmatprep.mubr.f32.mxu0 0.0
      %2824 = vmatmul.mubr.f32.gmra.mrb[0].mxu0 %v2707
      %v2825 = vpop.f32.mrb[0].mxu0
      %v2826 = vadd.f32 0.0, %v2825
      %v2827 = vpop.f32.mrb[0].mxu0
      %2828 = vmatprep.mubr.f32.mxu0 0.0
      %2829 = vmatmul.mubr.f32.gmra.mrb[0].mxu0 %v2708
      %v2830 = vpop.f32.mrb[0].mxu0
      %v2831 = vadd.f32 0.0, %v2830
      %v2832 = vpop.f32.mrb[0].mxu0
      %2833 = vmatprep.mubr.f32.mxu0 0.0
      %2834 = vmatmul.mubr.f32.gmra.mrb[0].mxu0 %v2709
      %v2835 = vpop.f32.mrb[0].mxu0
      %v2836 = vadd.f32 0.0, %v2835
      %v2837 = vpop.f32.mrb[0].mxu0
      %2838 = vmatprep.mubr.f32.mxu0 0.0
      %2839 = vmatmul.mubr.f32.gmra.mrb[0].mxu0 %v2710
      %v2840 = vpop.f32.mrb[0].mxu0
      %v2841 = vadd.f32 0.0, %v2840
      %v2842 = vpop.f32.mrb[0].mxu0
      %2843 = vmatprep.mubr.f32.mxu0 0.0
      %2844 = vmatmul.mubr.f32.gmra.mrb[0].mxu0 %v2711
      %v2845 = vpop.f32.mrb[0].mxu0
      %v2846 = vadd.f32 0.0, %v2845
      %v2847 = vpop.f32.mrb[0].mxu0
      %2848 = vmatprep.mubr.f32.mxu0 0.0
      %2849 = vmatmul.mubr.f32.gmra.mrb[0].mxu0 %v2712
      %v2850 = vpop.f32.mrb[0].mxu0
      %v2851 = vadd.f32 0.0, %v2850
      %v2852 = vpop.f32.mrb[0].mxu0
      %2853 = vmatprep.mubr.f32.mxu0 0.0
      %2854 = vmatmul.mubr.f32.gmra.mrb[0].mxu0 %v2713
      %v2855 = vpop.f32.mrb[0].mxu0
      %v2856 = vadd.f32 0.0, %v2855
      %v2857 = vpop.f32.mrb[0].mxu0
      %2858 = vmatprep.mubr.f32.mxu0 0.0
      %2859 = vmatmul.mubr.f32.gmra.mrb[0].mxu0 %v2714
      %v2860 = vpop.f32.mrb[0].mxu0
      %v2861 = vadd.f32 0.0, %v2860
      %v2862 = vpop.f32.mrb[0].mxu0
      %2863 = vmatprep.mubr.f32.mxu0 0.0
      %2864 = vmatmul.mubr.f32.gmra.mrb[0].mxu0 %v2715
      %v2865 = vpop.f32.mrb[0].mxu0
      %v2866 = vadd.f32 0.0, %v2865
      %v2867 = vpop.f32.mrb[0].mxu0
      %2868 = vmatprep.mubr.f32.mxu0 0.0
      %2869 = vmatmul.mubr.f32.gmra.mrb[0].mxu0 %v2716
      %v2870 = vpop.f32.mrb[0].mxu0
      %v2871 = vadd.f32 0.0, %v2870
      %v2872 = vpop.f32.mrb[0].mxu0
      %2873 = vmatprep.mubr.f32.mxu0 0.0
      %2874 = vmatmul.mubr.f32.gmra.mrb[0].mxu0 %v2717
      %v2875 = vpop.f32.mrb[0].mxu0
      %v2876 = vadd.f32 0.0, %v2875
      %v2877 = vpop.f32.mrb[0].mxu0
      %2878 = vmatprep.mubr.f32.mxu0 0.0
      %2879 = vmatmul.mubr.f32.gmra.mrb[0].mxu0 %v2718
      %v2880 = vpop.f32.mrb[0].mxu0
      %v2881 = vadd.f32 0.0, %v2880
      %v2882 = vpop.f32.mrb[0].mxu0
      %2883 = vmatprep.mubr.f32.mxu0 0.0
      %2884 = vmatmul.mubr.f32.gmra.mrb[0].mxu0 %v2719
      %v2885 = vpop.f32.mrb[0].mxu0
      %v2886 = vadd.f32 0.0, %v2885
      %v2887 = vpop.f32.mrb[0].mxu0
      %2888 = vmatprep.mubr.f32.mxu0 0.0
      %2889 = vmatmul.mubr.f32.gmra.mrb[0].mxu0 %v2720
      %v2890 = vpop.f32.mrb[0].mxu0
      %v2891 = vadd.f32 0.0, %v2890
      %v2892 = vpop.f32.mrb[0].mxu0
      %2893 = vmatprep.mubr.f32.mxu0 0.0
      %2894 = vmatmul.mubr.f32.gmra.mrb[0].mxu0 %v2721
      %v2895 = vpop.f32.mrb[0].mxu0
      %v2896 = vadd.f32 0.0, %v2895
      %v2897 = vpop.f32.mrb[0].mxu0
      %2898 = vmatprep.mubr.f32.mxu0 0.0
      %2899 = vmatmul.mubr.f32.gmra.mrb[0].mxu0 %v2722
      %v2900 = vpop.f32.mrb[0].mxu0
      %v2901 = vadd.f32 0.0, %v2900
      %v2902 = vpop.f32.mrb[0].mxu0
      %2903 = vmatprep.mubr.f32.mxu0 0.0
      %2904 = vmatmul.mubr.f32.gmra.mrb[0].mxu0 %v2723
      %v2905 = vpop.f32.mrb[0].mxu0
      %v2906 = vadd.f32 0.0, %v2905
      %v2907 = vpop.f32.mrb[0].mxu0
      %2908 = vmatprep.mubr.f32.mxu0 0.0
      %2909 = vmatmul.mubr.f32.gmra.mrb[0].mxu0 %v2724
      %v2910 = vpop.f32.mrb[0].mxu0
      %v2911 = vadd.f32 0.0, %v2910
      %v2912 = vpop.f32.mrb[0].mxu0
      %2913 = vmatprep.mubr.f32.mxu0 0.0
      %2914 = vmatmul.mubr.f32.gmra.mrb[0].mxu0 %v2725
      %v2915 = vpop.f32.mrb[0].mxu0
      %v2916 = vadd.f32 0.0, %v2915
      %v2917 = vpop.f32.mrb[0].mxu0
      %2918 = vmatprep.mubr.f32.mxu0 0.0
      %2919 = vmatmul.mubr.f32.gmra.mrb[0].mxu0 %v2726
      %v2920 = vpop.f32.mrb[0].mxu0
      %v2921 = vadd.f32 0.0, %v2920
      %v2922 = vpop.f32.mrb[0].mxu0
      %2923 = vmatprep.mubr.f32.mxu0 0.0
      %2924 = vmatmul.mubr.f32.gmra.mrb[0].mxu0 %v2727
      %v2925 = vpop.f32.mrb[0].mxu0
      %v2926 = vadd.f32 0.0, %v2925
      %v2927 = vpop.f32.mrb[0].mxu0
      %2928 = vmatprep.mubr.f32.mxu0 0.0
      %2929 = vmatmul.mubr.f32.gmra.mrb[0].mxu0 %v2728
      %v2930 = vpop.f32.mrb[0].mxu0
      %v2931 = vadd.f32 0.0, %v2930
      %v2932 = vpop.f32.mrb[0].mxu0
      %2933 = vmatprep.mubr.f32.mxu0 0.0
      %2934 = vmatmul.mubr.f32.gmra.mrb[0].mxu0 %v2729
      %v2935 = vpop.f32.mrb[0].mxu0
      %v2936 = vadd.f32 0.0, %v2935
      %v2937 = vpop.f32.mrb[0].mxu0
      %2938 = vmatprep.mubr.f32.mxu0 0.0
      %2939 = vmatmul.mubr.f32.gmra.mrb[0].mxu0 %v2730
      %v2940 = vpop.f32.mrb[0].mxu0
      %v2941 = vadd.f32 0.0, %v2940
      %v2942 = vpop.f32.mrb[0].mxu0
      %2943 = vmatprep.mubr.f32.mxu0 0.0
      %2944 = vmatmul.mubr.f32.gmra.mrb[0].mxu0 %v2731
      %v2945 = vpop.f32.mrb[0].mxu0
      %v2946 = vadd.f32 0.0, %v2945
      %v2947 = vpop.f32.mrb[0].mxu0
      %2948 = vmatprep.mubr.f32.mxu0 0.0
      %2949 = vmatmul.mubr.f32.gmra.mrb[0].mxu0 %v2732
      %v2950 = vpop.f32.mrb[0].mxu0
      %v2951 = vadd.f32 0.0, %v2950
      %v2952 = vpop.f32.mrb[0].mxu0
      %2953 = vmatprep.mubr.f32.mxu0 0.0
      %2954 = vmatmul.mubr.f32.gmra.mrb[0].mxu0 %v2733
      %v2955 = vpop.f32.mrb[0].mxu0
      %v2956 = vadd.f32 0.0, %v2955
      %v2957 = vpop.f32.mrb[0].mxu0
      %2958 = vmatprep.mubr.f32.mxu0 0.0
      %2959 = vmatmul.mubr.f32.gmra.mrb[0].mxu0 %v2734
      %v2960 = vpop.f32.mrb[0].mxu0
      %v2961 = vadd.f32 0.0, %v2960
      %v2962 = vpop.f32.mrb[0].mxu0
      %2963 = vmatprep.mubr.f32.mxu0 0.0
      %2964 = vmatmul.mubr.f32.gmra.mrb[0].mxu0 %v2735
      %v2965 = vpop.f32.mrb[0].mxu0
      %v2966 = vadd.f32 0.0, %v2965
      %v2967 = vpop.f32.mrb[0].mxu0
      %2968 = vmatprep.mubr.f32.mxu0 0.0
      %2969 = vmatmul.mubr.f32.gmra.mrb[0].mxu0 %v2736
      %v2970 = vpop.f32.mrb[0].mxu0
      %v2971 = vadd.f32 0.0, %v2970
      %v2972 = vpop.f32.mrb[0].mxu0
      %2973 = vmatprep.mubr.f32.mxu0 0.0
      %2974 = vmatmul.mubr.f32.gmra.mrb[0].mxu0 %v2737
      %v2975 = vpop.f32.mrb[0].mxu0
      %v2976 = vadd.f32 0.0, %v2975
      %v2977 = vpop.f32.mrb[0].mxu0
      %2978 = vdwg.mxu0
      %v2979 = vadd.f32 %v2674, %v2821
      %v2980 = vadd.f32 %v2675, %v2826
      %v2981 = vadd.f32 %v2676, %v2831
      %v2982 = vadd.f32 %v2677, %v2836
      %v2983 = vadd.f32 %v2678, %v2841
      %v2984 = vadd.f32 %v2679, %v2846
      %v2985 = vadd.f32 %v2680, %v2851
      %v2986 = vadd.f32 %v2681, %v2856
      %v2987 = vadd.f32 %v2682, %v2861
      %v2988 = vadd.f32 %v2683, %v2866
      %v2989 = vadd.f32 %v2684, %v2871
      %v2990 = vadd.f32 %v2685, %v2876
      %v2991 = vadd.f32 %v2686, %v2881
      %v2992 = vadd.f32 %v2687, %v2886
      %v2993 = vadd.f32 %v2688, %v2891
      %v2994 = vadd.f32 %v2689, %v2896
      %v2995 = vadd.f32 %v2690, %v2901
      %v2996 = vadd.f32 %v2691, %v2906
      %v2997 = vadd.f32 %v2692, %v2911
      %v2998 = vadd.f32 %v2693, %v2916
      %v2999 = vadd.f32 %v2694, %v2921
      %v3000 = vadd.f32 %v2695, %v2926
      %v3001 = vadd.f32 %v2696, %v2931
      %v3002 = vadd.f32 %v2697, %v2936
      %v3003 = vadd.f32 %v2698, %v2941
      %v3004 = vadd.f32 %v2699, %v2946
      %v3005 = vadd.f32 %v2700, %v2951
      %v3006 = vadd.f32 %v2701, %v2956
      %v3007 = vadd.f32 %v2702, %v2961
      %v3008 = vadd.f32 %v2703, %v2966
      %v3009 = vadd.f32 %v2704, %v2971
      %v3010 = vadd.f32 %v2705, %v2976
      %s3011 = scalar_lea.vmem %s300, %s321
      %v3012 = vld [vmem:[%s3011] sm:$0xff]
      %v3013 = vld [vmem:[%s3011 + $0x8] sm:$0xff]
      %v3014 = vld [vmem:[%s3011 + $0x10] sm:$0xff]
      %v3015 = vld [vmem:[%s3011 + $0x18] sm:$0xff]
      %v3016 = vld [vmem:[%s3011 + $0x20] sm:$0xff]
      %v3017 = vld [vmem:[%s3011 + $0x28] sm:$0xff]
      %v3018 = vld [vmem:[%s3011 + $0x30] sm:$0xff]
      %v3019 = vld [vmem:[%s3011 + $0x38] sm:$0xff]
      %v3020 = vld [vmem:[%s3011 + $0x40] sm:$0xff]
      %v3021 = vld [vmem:[%s3011 + $0x48] sm:$0xff]
      %v3022 = vld [vmem:[%s3011 + $0x50] sm:$0xff]
      %v3023 = vld [vmem:[%s3011 + $0x58] sm:$0xff]
      %v3024 = vld [vmem:[%s3011 + $0x60] sm:$0xff]
      %v3025 = vld [vmem:[%s3011 + $0x68] sm:$0xff]
      %v3026 = vld [vmem:[%s3011 + $0x70] sm:$0xff]
      %v3027 = vld [vmem:[%s3011 + $0x78] sm:$0xff]
      %v3028 = vld [vmem:[%s3011 + $0x80] sm:$0xff]
      %v3029 = vld [vmem:[%s3011 + $0x88] sm:$0xff]
      %v3030 = vld [vmem:[%s3011 + $0x90] sm:$0xff]
      %v3031 = vld [vmem:[%s3011 + $0x98] sm:$0xff]
      %v3032 = vld [vmem:[%s3011 + $0xa0] sm:$0xff]
      %v3033 = vld [vmem:[%s3011 + $0xa8] sm:$0xff]
      %v3034 = vld [vmem:[%s3011 + $0xb0] sm:$0xff]
      %v3035 = vld [vmem:[%s3011 + $0xb8] sm:$0xff]
      %v3036 = vld [vmem:[%s3011 + $0xc0] sm:$0xff]
      %v3037 = vld [vmem:[%s3011 + $0xc8] sm:$0xff]
      %v3038 = vld [vmem:[%s3011 + $0xd0] sm:$0xff]
      %v3039 = vld [vmem:[%s3011 + $0xd8] sm:$0xff]
      %v3040 = vld [vmem:[%s3011 + $0xe0] sm:$0xff]
      %v3041 = vld [vmem:[%s3011 + $0xe8] sm:$0xff]
      %v3042 = vld [vmem:[%s3011 + $0xf0] sm:$0xff]
      %v3043 = vld [vmem:[%s3011 + $0xf8] sm:$0xff]
      %vm3044 = vcmask 31744
      %v3046 = vsel %vm3044, %v3012, 0
      %v3049 = vsel %vm3044, %v3013, 0
      %v3052 = vsel %vm3044, %v3014, 0
      %v3055 = vsel %vm3044, %v3015, 0
      %v3058 = vsel %vm3044, %v3016, 0
      %v3061 = vsel %vm3044, %v3017, 0
      %v3064 = vsel %vm3044, %v3018, 0
      %v3067 = vsel %vm3044, %v3019, 0
      %v3070 = vsel %vm3044, %v3020, 0
      %v3073 = vsel %vm3044, %v3021, 0
      %v3076 = vsel %vm3044, %v3022, 0
      %v3079 = vsel %vm3044, %v3023, 0
      %v3082 = vsel %vm3044, %v3024, 0
      %v3085 = vsel %vm3044, %v3025, 0
      %v3088 = vsel %vm3044, %v3026, 0
      %v3091 = vsel %vm3044, %v3027, 0
      %v3094 = vsel %vm3044, %v3028, 0
      %v3097 = vsel %vm3044, %v3029, 0
      %v3100 = vsel %vm3044, %v3030, 0
      %v3103 = vsel %vm3044, %v3031, 0
      %v3106 = vsel %vm3044, %v3032, 0
      %v3109 = vsel %vm3044, %v3033, 0
      %v3112 = vsel %vm3044, %v3034, 0
      %v3115 = vsel %vm3044, %v3035, 0
      %v3118 = vsel %vm3044, %v3036, 0
      %v3121 = vsel %vm3044, %v3037, 0
      %v3124 = vsel %vm3044, %v3038, 0
      %v3127 = vsel %vm3044, %v3039, 0
      %v3130 = vsel %vm3044, %v3040, 0
      %v3133 = vsel %vm3044, %v3041, 0
      %v3136 = vsel %vm3044, %v3042, 0
      %v3139 = vsel %vm3044, %v3043, 0
      %vm3141 = vcmask 1043456
      %v3143 = vsel %vm3141, %v320, 0
      %3145 = vmatprep.subr.mxu0 0.0
      %3146 = vmatpush1.msra.mxu0 %v3143
      %3147 = vmatprep.subr.mxu0 0.0
      %3148 = vmatpush1.msra.mxu0 0.0
      %3149 = vmatprep.subr.mxu0 0.0
      %3150 = vmatpush1.msra.mxu0 0.0
      %3151 = vmatprep.subr.mxu0 0.0
      %3152 = vmatpush1.msra.mxu0 0.0
      %3153 = vmatprep.subr.mxu0 0.0
      %3154 = vmatpush1.msra.mxu0 0.0
      %3155 = vmatprep.subr.mxu0 0.0
      %3156 = vmatpush1.msra.mxu0 0.0
      %3157 = vmatprep.subr.mxu0 0.0
      %3158 = vmatpush1.msra.mxu0 0.0
      %3159 = vmatprep.subr.mxu0 0.0
      %3160 = vmatpush1.msra.mxu0 0.0
      %3161 = vmatprep.subr.mxu0 0.0
      %3162 = vmatpush1.msra.mxu0 0.0
      %3163 = vmatprep.subr.mxu0 0.0
      %3164 = vmatpush1.msra.mxu0 0.0
      %3165 = vmatprep.subr.mxu0 0.0
      %3166 = vmatpush1.msra.mxu0 0.0
      %3167 = vmatprep.subr.mxu0 0.0
      %3168 = vmatpush1.msra.mxu0 0.0
      %3169 = vmatprep.subr.mxu0 0.0
      %3170 = vmatpush1.msra.mxu0 0.0
      %3171 = vmatprep.subr.mxu0 0.0
      %3172 = vmatpush1.msra.mxu0 0.0
      %3173 = vmatprep.subr.mxu0 0.0
      %3174 = vmatpush1.msra.mxu0 0.0
      %3175 = vmatprep.subr.mxu0 0.0
      %3176 = vmatpush1.msra.mxu0 0.0
      %3177 = vmatprep.subr.mxu0 0.0
      %3178 = vmatpush1.msra.mxu0 0.0
      %3179 = vmatprep.subr.mxu0 0.0
      %3180 = vmatpush1.msra.mxu0 0.0
      %3181 = vmatprep.subr.mxu0 0.0
      %3182 = vmatpush1.msra.mxu0 0.0
      %3183 = vmatprep.subr.mxu0 0.0
      %3184 = vmatpush1.msra.mxu0 0.0
      %3185 = vmatprep.subr.mxu0 0.0
      %3186 = vmatpush1.msra.mxu0 0.0
      %3187 = vmatprep.subr.mxu0 0.0
      %3188 = vmatpush1.msra.mxu0 0.0
      %3189 = vmatprep.subr.mxu0 0.0
      %3190 = vmatpush1.msra.mxu0 0.0
      %3191 = vmatprep.subr.mxu0 0.0
      %3192 = vmatpush1.msra.mxu0 0.0
      %3193 = vmatprep.subr.mxu0 0.0
      %3194 = vmatpush1.msra.mxu0 0.0
      %3195 = vmatprep.subr.mxu0 0.0
      %3196 = vmatpush1.msra.mxu0 0.0
      %3197 = vmatprep.subr.mxu0 0.0
      %3198 = vmatpush1.msra.mxu0 0.0
      %3199 = vmatprep.subr.mxu0 0.0
      %3200 = vmatpush1.msra.mxu0 0.0
      %3201 = vmatprep.subr.mxu0 0.0
      %3202 = vmatpush1.msra.mxu0 0.0
      %3203 = vmatprep.subr.mxu0 0.0
      %3204 = vmatpush1.msra.mxu0 0.0
      %3205 = vmatprep.subr.mxu0 0.0
      %3206 = vmatpush1.msra.mxu0 0.0
      %3207 = vmatprep.subr.mxu0 0.0
      %3208 = vmatpush1.msra.mxu0 0.0
      %3209 = vmatprep.mubr.f32.mxu0 0.0
      %3210 = vmatmul.mubr.f32.gmra.mrb[0].mxu0 %v3046
      %v3211 = vpop.f32.mrb[0].mxu0
      %v3212 = vadd.f32 0.0, %v3211
      %v3213 = vpop.f32.mrb[0].mxu0
      %3214 = vmatprep.mubr.f32.mxu0 0.0
      %3215 = vmatmul.mubr.f32.gmra.mrb[0].mxu0 %v3049
      %v3216 = vpop.f32.mrb[0].mxu0
      %v3217 = vadd.f32 0.0, %v3216
      %v3218 = vpop.f32.mrb[0].mxu0
      %3219 = vmatprep.mubr.f32.mxu0 0.0
      %3220 = vmatmul.mubr.f32.gmra.mrb[0].mxu0 %v3052
      %v3221 = vpop.f32.mrb[0].mxu0
      %v3222 = vadd.f32 0.0, %v3221
      %v3223 = vpop.f32.mrb[0].mxu0
      %3224 = vmatprep.mubr.f32.mxu0 0.0
      %3225 = vmatmul.mubr.f32.gmra.mrb[0].mxu0 %v3055
      %v3226 = vpop.f32.mrb[0].mxu0
      %v3227 = vadd.f32 0.0, %v3226
      %v3228 = vpop.f32.mrb[0].mxu0
      %3229 = vmatprep.mubr.f32.mxu0 0.0
      %3230 = vmatmul.mubr.f32.gmra.mrb[0].mxu0 %v3058
      %v3231 = vpop.f32.mrb[0].mxu0
      %v3232 = vadd.f32 0.0, %v3231
      %v3233 = vpop.f32.mrb[0].mxu0
      %3234 = vmatprep.mubr.f32.mxu0 0.0
      %3235 = vmatmul.mubr.f32.gmra.mrb[0].mxu0 %v3061
      %v3236 = vpop.f32.mrb[0].mxu0
      %v3237 = vadd.f32 0.0, %v3236
      %v3238 = vpop.f32.mrb[0].mxu0
      %3239 = vmatprep.mubr.f32.mxu0 0.0
      %3240 = vmatmul.mubr.f32.gmra.mrb[0].mxu0 %v3064
      %v3241 = vpop.f32.mrb[0].mxu0
      %v3242 = vadd.f32 0.0, %v3241
      %v3243 = vpop.f32.mrb[0].mxu0
      %3244 = vmatprep.mubr.f32.mxu0 0.0
      %3245 = vmatmul.mubr.f32.gmra.mrb[0].mxu0 %v3067
      %v3246 = vpop.f32.mrb[0].mxu0
      %v3247 = vadd.f32 0.0, %v3246
      %v3248 = vpop.f32.mrb[0].mxu0
      %3249 = vmatprep.mubr.f32.mxu0 0.0
      %3250 = vmatmul.mubr.f32.gmra.mrb[0].mxu0 %v3070
      %v3251 = vpop.f32.mrb[0].mxu0
      %v3252 = vadd.f32 0.0, %v3251
      %v3253 = vpop.f32.mrb[0].mxu0
      %3254 = vmatprep.mubr.f32.mxu0 0.0
      %3255 = vmatmul.mubr.f32.gmra.mrb[0].mxu0 %v3073
      %v3256 = vpop.f32.mrb[0].mxu0
      %v3257 = vadd.f32 0.0, %v3256
      %v3258 = vpop.f32.mrb[0].mxu0
      %3259 = vmatprep.mubr.f32.mxu0 0.0
      %3260 = vmatmul.mubr.f32.gmra.mrb[0].mxu0 %v3076
      %v3261 = vpop.f32.mrb[0].mxu0
      %v3262 = vadd.f32 0.0, %v3261
      %v3263 = vpop.f32.mrb[0].mxu0
      %3264 = vmatprep.mubr.f32.mxu0 0.0
      %3265 = vmatmul.mubr.f32.gmra.mrb[0].mxu0 %v3079
      %v3266 = vpop.f32.mrb[0].mxu0
      %v3267 = vadd.f32 0.0, %v3266
      %v3268 = vpop.f32.mrb[0].mxu0
      %3269 = vmatprep.mubr.f32.mxu0 0.0
      %3270 = vmatmul.mubr.f32.gmra.mrb[0].mxu0 %v3082
      %v3271 = vpop.f32.mrb[0].mxu0
      %v3272 = vadd.f32 0.0, %v3271
      %v3273 = vpop.f32.mrb[0].mxu0
      %3274 = vmatprep.mubr.f32.mxu0 0.0
      %3275 = vmatmul.mubr.f32.gmra.mrb[0].mxu0 %v3085
      %v3276 = vpop.f32.mrb[0].mxu0
      %v3277 = vadd.f32 0.0, %v3276
      %v3278 = vpop.f32.mrb[0].mxu0
      %3279 = vmatprep.mubr.f32.mxu0 0.0
      %3280 = vmatmul.mubr.f32.gmra.mrb[0].mxu0 %v3088
      %v3281 = vpop.f32.mrb[0].mxu0
      %v3282 = vadd.f32 0.0, %v3281
      %v3283 = vpop.f32.mrb[0].mxu0
      %3284 = vmatprep.mubr.f32.mxu0 0.0
      %3285 = vmatmul.mubr.f32.gmra.mrb[0].mxu0 %v3091
      %v3286 = vpop.f32.mrb[0].mxu0
      %v3287 = vadd.f32 0.0, %v3286
      %v3288 = vpop.f32.mrb[0].mxu0
      %3289 = vmatprep.mubr.f32.mxu0 0.0
      %3290 = vmatmul.mubr.f32.gmra.mrb[0].mxu0 %v3094
      %v3291 = vpop.f32.mrb[0].mxu0
      %v3292 = vadd.f32 0.0, %v3291
      %v3293 = vpop.f32.mrb[0].mxu0
      %3294 = vmatprep.mubr.f32.mxu0 0.0
      %3295 = vmatmul.mubr.f32.gmra.mrb[0].mxu0 %v3097
      %v3296 = vpop.f32.mrb[0].mxu0
      %v3297 = vadd.f32 0.0, %v3296
      %v3298 = vpop.f32.mrb[0].mxu0
      %3299 = vmatprep.mubr.f32.mxu0 0.0
      %3300 = vmatmul.mubr.f32.gmra.mrb[0].mxu0 %v3100
      %v3301 = vpop.f32.mrb[0].mxu0
      %v3302 = vadd.f32 0.0, %v3301
      %v3303 = vpop.f32.mrb[0].mxu0
      %3304 = vmatprep.mubr.f32.mxu0 0.0
      %3305 = vmatmul.mubr.f32.gmra.mrb[0].mxu0 %v3103
      %v3306 = vpop.f32.mrb[0].mxu0
      %v3307 = vadd.f32 0.0, %v3306
      %v3308 = vpop.f32.mrb[0].mxu0
      %3309 = vmatprep.mubr.f32.mxu0 0.0
      %3310 = vmatmul.mubr.f32.gmra.mrb[0].mxu0 %v3106
      %v3311 = vpop.f32.mrb[0].mxu0
      %v3312 = vadd.f32 0.0, %v3311
      %v3313 = vpop.f32.mrb[0].mxu0
      %3314 = vmatprep.mubr.f32.mxu0 0.0
      %3315 = vmatmul.mubr.f32.gmra.mrb[0].mxu0 %v3109
      %v3316 = vpop.f32.mrb[0].mxu0
      %v3317 = vadd.f32 0.0, %v3316
      %v3318 = vpop.f32.mrb[0].mxu0
      %3319 = vmatprep.mubr.f32.mxu0 0.0
      %3320 = vmatmul.mubr.f32.gmra.mrb[0].mxu0 %v3112
      %v3321 = vpop.f32.mrb[0].mxu0
      %v3322 = vadd.f32 0.0, %v3321
      %v3323 = vpop.f32.mrb[0].mxu0
      %3324 = vmatprep.mubr.f32.mxu0 0.0
      %3325 = vmatmul.mubr.f32.gmra.mrb[0].mxu0 %v3115
      %v3326 = vpop.f32.mrb[0].mxu0
      %v3327 = vadd.f32 0.0, %v3326
      %v3328 = vpop.f32.mrb[0].mxu0
      %3329 = vmatprep.mubr.f32.mxu0 0.0
      %3330 = vmatmul.mubr.f32.gmra.mrb[0].mxu0 %v3118
      %v3331 = vpop.f32.mrb[0].mxu0
      %v3332 = vadd.f32 0.0, %v3331
      %v3333 = vpop.f32.mrb[0].mxu0
      %3334 = vmatprep.mubr.f32.mxu0 0.0
      %3335 = vmatmul.mubr.f32.gmra.mrb[0].mxu0 %v3121
      %v3336 = vpop.f32.mrb[0].mxu0
      %v3337 = vadd.f32 0.0, %v3336
      %v3338 = vpop.f32.mrb[0].mxu0
      %3339 = vmatprep.mubr.f32.mxu0 0.0
      %3340 = vmatmul.mubr.f32.gmra.mrb[0].mxu0 %v3124
      %v3341 = vpop.f32.mrb[0].mxu0
      %v3342 = vadd.f32 0.0, %v3341
      %v3343 = vpop.f32.mrb[0].mxu0
      %3344 = vmatprep.mubr.f32.mxu0 0.0
      %3345 = vmatmul.mubr.f32.gmra.mrb[0].mxu0 %v3127
      %v3346 = vpop.f32.mrb[0].mxu0
      %v3347 = vadd.f32 0.0, %v3346
      %v3348 = vpop.f32.mrb[0].mxu0
      %3349 = vmatprep.mubr.f32.mxu0 0.0
      %3350 = vmatmul.mubr.f32.gmra.mrb[0].mxu0 %v3130
      %v3351 = vpop.f32.mrb[0].mxu0
      %v3352 = vadd.f32 0.0, %v3351
      %v3353 = vpop.f32.mrb[0].mxu0
      %3354 = vmatprep.mubr.f32.mxu0 0.0
      %3355 = vmatmul.mubr.f32.gmra.mrb[0].mxu0 %v3133
      %v3356 = vpop.f32.mrb[0].mxu0
      %v3357 = vadd.f32 0.0, %v3356
      %v3358 = vpop.f32.mrb[0].mxu0
      %3359 = vmatprep.mubr.f32.mxu0 0.0
      %3360 = vmatmul.mubr.f32.gmra.mrb[0].mxu0 %v3136
      %v3361 = vpop.f32.mrb[0].mxu0
      %v3362 = vadd.f32 0.0, %v3361
      %v3363 = vpop.f32.mrb[0].mxu0
      %3364 = vmatprep.mubr.f32.mxu0 0.0
      %3365 = vmatmul.mubr.f32.gmra.mrb[0].mxu0 %v3139
      %v3366 = vpop.f32.mrb[0].mxu0
      %v3367 = vadd.f32 0.0, %v3366
      %v3368 = vpop.f32.mrb[0].mxu0
      %3369 = vdwg.mxu0
      %v3370 = vadd.f32 %v2979, %v3212
      %v3371 = vadd.f32 %v2980, %v3217
      %v3372 = vadd.f32 %v2981, %v3222
      %v3373 = vadd.f32 %v2982, %v3227
      %v3374 = vadd.f32 %v2983, %v3232
      %v3375 = vadd.f32 %v2984, %v3237
      %v3376 = vadd.f32 %v2985, %v3242
      %v3377 = vadd.f32 %v2986, %v3247
      %v3378 = vadd.f32 %v2987, %v3252
      %v3379 = vadd.f32 %v2988, %v3257
      %v3380 = vadd.f32 %v2989, %v3262
      %v3381 = vadd.f32 %v2990, %v3267
      %v3382 = vadd.f32 %v2991, %v3272
      %v3383 = vadd.f32 %v2992, %v3277
      %v3384 = vadd.f32 %v2993, %v3282
      %v3385 = vadd.f32 %v2994, %v3287
      %v3386 = vadd.f32 %v2995, %v3292
      %v3387 = vadd.f32 %v2996, %v3297
      %v3388 = vadd.f32 %v2997, %v3302
      %v3389 = vadd.f32 %v2998, %v3307
      %v3390 = vadd.f32 %v2999, %v3312
      %v3391 = vadd.f32 %v3000, %v3317
      %v3392 = vadd.f32 %v3001, %v3322
      %v3393 = vadd.f32 %v3002, %v3327
      %v3394 = vadd.f32 %v3003, %v3332
      %v3395 = vadd.f32 %v3004, %v3337
      %v3396 = vadd.f32 %v3005, %v3342
      %v3397 = vadd.f32 %v3006, %v3347
      %v3398 = vadd.f32 %v3007, %v3352
      %v3399 = vadd.f32 %v3008, %v3357
      %v3400 = vadd.f32 %v3009, %v3362
      %v3401 = vadd.f32 %v3010, %v3367
      %v3402 = vadd.f32 %v3370, %v318
      %v3403 = vadd.f32 %v3371, %v318
      %v3404 = vadd.f32 %v3372, %v318
      %v3405 = vadd.f32 %v3373, %v318
      %v3406 = vadd.f32 %v3374, %v318
      %v3407 = vadd.f32 %v3375, %v318
      %v3408 = vadd.f32 %v3376, %v318
      %v3409 = vadd.f32 %v3377, %v318
      %v3410 = vadd.f32 %v3378, %v318
      %v3411 = vadd.f32 %v3379, %v318
      %v3412 = vadd.f32 %v3380, %v318
      %v3413 = vadd.f32 %v3381, %v318
      %v3414 = vadd.f32 %v3382, %v318
      %v3415 = vadd.f32 %v3383, %v318
      %v3416 = vadd.f32 %v3384, %v318
      %v3417 = vadd.f32 %v3385, %v318
      %v3418 = vadd.f32 %v3386, %v318
      %v3419 = vadd.f32 %v3387, %v318
      %v3420 = vadd.f32 %v3388, %v318
      %v3421 = vadd.f32 %v3389, %v318
      %v3422 = vadd.f32 %v3390, %v318
      %v3423 = vadd.f32 %v3391, %v318
      %v3424 = vadd.f32 %v3392, %v318
      %v3425 = vadd.f32 %v3393, %v318
      %v3426 = vadd.f32 %v3394, %v318
      %v3427 = vadd.f32 %v3395, %v318
      %v3428 = vadd.f32 %v3396, %v318
      %v3429 = vadd.f32 %v3397, %v318
      %v3430 = vadd.f32 %v3398, %v318
      %v3431 = vadd.f32 %v3399, %v318
      %v3432 = vadd.f32 %v3400, %v318
      %v3433 = vadd.f32 %v3401, %v318
      %v3434 = vmax.f32 %v3402, 0.0
      %v3435 = vmax.f32 %v3403, 0.0
      %v3436 = vmax.f32 %v3404, 0.0
      %v3437 = vmax.f32 %v3405, 0.0
      %v3438 = vmax.f32 %v3406, 0.0
      %v3439 = vmax.f32 %v3407, 0.0
      %v3440 = vmax.f32 %v3408, 0.0
      %v3441 = vmax.f32 %v3409, 0.0
      %v3442 = vmax.f32 %v3410, 0.0
      %v3443 = vmax.f32 %v3411, 0.0
      %v3444 = vmax.f32 %v3412, 0.0
      %v3445 = vmax.f32 %v3413, 0.0
      %v3446 = vmax.f32 %v3414, 0.0
      %v3447 = vmax.f32 %v3415, 0.0
      %v3448 = vmax.f32 %v3416, 0.0
      %v3449 = vmax.f32 %v3417, 0.0
      %v3450 = vmax.f32 %v3418, 0.0
      %v3451 = vmax.f32 %v3419, 0.0
      %v3452 = vmax.f32 %v3420, 0.0
      %v3453 = vmax.f32 %v3421, 0.0
      %v3454 = vmax.f32 %v3422, 0.0
      %v3455 = vmax.f32 %v3423, 0.0
      %v3456 = vmax.f32 %v3424, 0.0
      %v3457 = vmax.f32 %v3425, 0.0
      %v3458 = vmax.f32 %v3426, 0.0
      %v3459 = vmax.f32 %v3427, 0.0
      %v3460 = vmax.f32 %v3428, 0.0
      %v3461 = vmax.f32 %v3429, 0.0
      %v3462 = vmax.f32 %v3430, 0.0
      %v3463 = vmax.f32 %v3431, 0.0
      %v3464 = vmax.f32 %v3432, 0.0
      %v3465 = vmax.f32 %v3433, 0.0
      %s3466 = scalar_lea.vmem %s312, %s321
      %3467 = vst [vmem:[%s3466] sm:$0xff] %v3434
      %3468 = vst [vmem:[%s3466 + $0x8] sm:$0xff] %v3435
      %3469 = vst [vmem:[%s3466 + $0x10] sm:$0xff] %v3436
      %3470 = vst [vmem:[%s3466 + $0x18] sm:$0xff] %v3437
      %3471 = vst [vmem:[%s3466 + $0x20] sm:$0xff] %v3438
      %3472 = vst [vmem:[%s3466 + $0x28] sm:$0xff] %v3439
      %3473 = vst [vmem:[%s3466 + $0x30] sm:$0xff] %v3440
      %3474 = vst [vmem:[%s3466 + $0x38] sm:$0xff] %v3441
      %3475 = vst [vmem:[%s3466 + $0x40] sm:$0xff] %v3442
      %3476 = vst [vmem:[%s3466 + $0x48] sm:$0xff] %v3443
      %3477 = vst [vmem:[%s3466 + $0x50] sm:$0xff] %v3444
      %3478 = vst [vmem:[%s3466 + $0x58] sm:$0xff] %v3445
      %3479 = vst [vmem:[%s3466 + $0x60] sm:$0xff] %v3446
      %3480 = vst [vmem:[%s3466 + $0x68] sm:$0xff] %v3447
      %3481 = vst [vmem:[%s3466 + $0x70] sm:$0xff] %v3448
      %3482 = vst [vmem:[%s3466 + $0x78] sm:$0xff] %v3449
      %3483 = vst [vmem:[%s3466 + $0x80] sm:$0xff] %v3450
      %3484 = vst [vmem:[%s3466 + $0x88] sm:$0xff] %v3451
      %3485 = vst [vmem:[%s3466 + $0x90] sm:$0xff] %v3452
      %3486 = vst [vmem:[%s3466 + $0x98] sm:$0xff] %v3453
      %3487 = vst [vmem:[%s3466 + $0xa0] sm:$0xff] %v3454
      %3488 = vst [vmem:[%s3466 + $0xa8] sm:$0xff] %v3455
      %3489 = vst [vmem:[%s3466 + $0xb0] sm:$0xff] %v3456
      %3490 = vst [vmem:[%s3466 + $0xb8] sm:$0xff] %v3457
      %3491 = vst [vmem:[%s3466 + $0xc0] sm:$0xff] %v3458
      %3492 = vst [vmem:[%s3466 + $0xc8] sm:$0xff] %v3459
      %3493 = vst [vmem:[%s3466 + $0xd0] sm:$0xff] %v3460
      %3494 = vst [vmem:[%s3466 + $0xd8] sm:$0xff] %v3461
      %3495 = vst [vmem:[%s3466 + $0xe0] sm:$0xff] %v3462
      %3496 = vst [vmem:[%s3466 + $0xe8] sm:$0xff] %v3463
      %3497 = vst [vmem:[%s3466 + $0xf0] sm:$0xff] %v3464
      %3498 = vst [vmem:[%s3466 + $0xf8] sm:$0xff] %v3465
      %p3499 = scmp.lt.s32.totalorder %s21, 1
      %s3500 = scalar_select %p3499, %s21, 1
      %p3501 = scmp.lt.s32.totalorder %s20, 0
      %s3502 = scalar_select %p3501, %s20, 0
      %s3503 = smul.addr %s3500, 32
      %s3504 = sadd.s32 %s3502, %s3503
      %s3505 = smul.addr %s3504, 8
      %s3506 = scalar_lea.vmem %s5, %s3505
      // Predicated region
      $region41: #{resblock_forward.3} parent=39 // pred_check
        %p3507 = pneg %p178
      $region42: #{resblock_forward.3} parent=39 // pred_check_branch
        %3509 = sbr.rel (%p3507) target = $region44
      $region43: #{resblock_forward.3} parent=39 // pred_region
        _
      $region44: #{resblock_forward.3} parent=39 // pred_fallthru
        _
    $region40: #{resblock_forward.3} parent=5 // pred_fallthru
      _
    %p3510 = scmp.le.s32.totalorder 2, %s11
    // Predicated region
    $region45: #{resblock_forward.3} parent=5 // pred_check
      %p3511 = pneg %p3510
    $region46: #{resblock_forward.3} parent=5 // pred_check_branch
      %3513 = sbr.rel (%p3511) target = $region48
    $region47: #{resblock_forward.3} parent=5 // pred_region
      %s3514 = ssub.s32 %s11, 2
      // Predicated region
      $region49: #{resblock_forward.3} parent=47 // pred_check
        %p3515 = pneg %p184
      $region50: #{resblock_forward.3} parent=47 // pred_check_branch
        %3517 = sbr.rel (%p3515) target = $region52
      $region51: #{resblock_forward.3} parent=47 // pred_region
        %p3518 = scmp.lt.s32.totalorder %s23, 1
        %s3519 = scalar_select %p3518, %s23, 1
        %p3520 = scmp.lt.s32.totalorder %s22, 0
        %s3521 = scalar_select %p3520, %s22, 0
        %s3522 = smul.addr %s3519, 32
        %s3523 = sadd.s32 %s3521, %s3522
        %s3524 = smul.addr %s3523, 8
        %s3525 = scalar_lea.vmem %s5, %s3524
      $region52: #{resblock_forward.3} parent=47 // pred_fallthru
        _
    $region48: #{resblock_forward.3} parent=5 // pred_fallthru
      _
  $region6: #{resblock_forward.3} parent=0 // loop_footer
    %s15 = sadd.s32 1, %s11
  $region7: #{resblock_forward.3} parent=0 // loop_footer_branch
    %10 = sbr.rel target = $region3
  $region8: #{resblock_forward.3} parent=0 // loop_exit
    _

</llo_original>
